<compile_context>
chip_gen: v6e
topology: v6e:2x2x1
jax: 0.10.0
libtpu: 0.0.40
codegen_flags: <defaults>
</compile_context>

<pallas_src>
import functools
import math

import jax
import jax.numpy as jnp
from jax.experimental import pallas as pl
from jax.experimental.pallas import tpu as pltpu

EPS = 1e-5          # torch.nn.LayerNorm default eps
LANE = 128          # TPU lane width
SUB = 8             # TPU sublane width
NEG_INF = -1e30


def _round_up(x, m):
    return ((x + m - 1) // m) * m


def _pad_to(x, shape):
    return jnp.pad(x, [(0, t - s) for s, t in zip(x.shape, shape)])


# ----------------------------------------------------------------------------
# fused kernel: all layers + final head for one batch tile
# ----------------------------------------------------------------------------
def class_attention_kernel(
    d_real,             # static python int: real (unpadded) model dim
    # --- batch-tiled activations -------------------------------------------
    seq_ref,            # (Bt, Sp, Dp) f32  zero-padded in feats / seq / batch
    bias_ref,           # (Bt, Sp)     f32  additive mask bias (0 valid / -1e30)
    # --- resident weights (constant index_map -> DMA'd once) -----------------
    cls_tok_ref,        # (1, Dp)      f32
    ln_w_ref, ln_b_ref, # (L, 4, Dp)   f32  rows: [norm0, norm1, norm2, mha_ln]
    wq_ref, bq_ref,     # (L, Dp, Dp)  bf16, (L, 1, Dp)  f32
    wkv_ref, bkv_ref,   # (L, Dp, 2Dp) bf16, (L, 1, 2Dp) f32  fused K|V, split @ Dp
    wo_ref, bo_ref,     # (L, Dp, Dp)  bf16, (L, 1, Dp)  f32
    wd1_ref, bd1_ref,   # (L, Dp, Hp)  bf16, (L, 1, Hp)  f32
    wd2_ref, bd2_ref,   # (L, Hp, Dp)  bf16, (L, 1, Dp)  f32
    fn_w_ref, fn_b_ref, # (1, Dp)      f32
    wout_ref, bout_ref, # (Dp, Np)     bf16, (1, Np)     f32
    out_ref,            # (Bt, Np)     f32
):
    Bt, Sp, Dp = seq_ref.shape
    L = ln_w_ref.shape[0]
    scale = 1.0 / math.sqrt(d_real)      # head_dim == model_dim (num_heads = 1)
    inv_d = 1.0 / d_real
    bf16, f32 = jnp.bfloat16, jnp.float32

    # Feature-validity mask over the lane-padded model dim.  LN statistics are
    # taken over the REAL d features only; because all LN / projection weights
    # are zero-padded, padded features then stay exactly zero in every layer.
    fmask = (jax.lax.broadcasted_iota(jnp.int32, (1, Dp), 1) < d_real
             ).astype(f32)

    def layernorm(x, w, b, m):
        # x is exactly zero in padded features -> plain sum / d_real is the mean
        mu = jnp.sum(x, axis=-1, keepdims=True) * inv_d
        xc = (x - mu) * m
        var = jnp.sum(xc * xc, axis=-1, keepdims=True) * inv_d
        return xc * jax.lax.rsqrt(var + EPS) * w + b      # w, b zero-padded

    seq = seq_ref[...]                                    # (Bt, Sp, Dp)
    bias = bias_ref[...]                                  # (Bt, Sp)
    cls = jnp.broadcast_to(cls_tok_ref[...], (Bt, Dp))    # lives across layers

    # Static unroll: L is small (2) and all layer weights are VMEM-resident.
    # TODO(synk): for large L / large D, move the layer loop onto a grid axis
    #             (weight index_map -> layer id, cls in a VMEM scratch with
    #             pl.when init/flush) so only ~2 layers of weights are resident
    #             at a time (v7x 64 MiB VMEM budget), and chunk the kv
    #             projection over S with an online softmax for long sequences.
    for layer in range(L):
        lw = ln_w_ref[layer]                              # (4, Dp)
        lb = ln_b_ref[layer]

        # ---- cross-attention sub-layer -----------------------------------
        q_in = layernorm(cls, lw[1:2], lb[1:2], fmask)            # norm1(cls)
        kv_in = layernorm(seq, lw[0:1], lb[0:1], fmask)           # norm0(seq)

        # bf16 MXU matmuls with f32 accumulation
        q = jnp.dot(q_in.astype(bf16), wq_ref[layer],
                    preferred_element_type=f32) + bq_ref[layer]   # (Bt, Dp)

        kv = jnp.dot(kv_in.reshape(Bt * Sp, Dp).astype(bf16), wkv_ref[layer],
                     preferred_element_type=f32) + bkv_ref[layer][0]
        kv = kv.reshape(Bt, Sp, 2 * Dp)
        k = kv[:, :, :Dp]                                 # lane-tile aligned
        v = kv[:, :, Dp:]

        # Single-query attention (q length 1): VPU multiply + XLU reduce,
        # keeping the M=1 work off the MXU while the projections use it.
        scores = jnp.sum(q[:, None, :] * k, axis=-1) * scale + bias   # (Bt,Sp)
        scores = scores - jnp.max(scores, axis=-1, keepdims=True)
        p = jnp.exp(scores)                               # f32 softmax
        p = p * pl.reciprocal(jnp.sum(p, axis=-1, keepdims=True), approx=True)
        attn = jnp.sum(p[:, :, None] * v, axis=1)         # (Bt, Dp)

        attn = layernorm(attn, lw[3:4], lb[3:4], fmask)   # MHA-internal LN
        attn = jnp.dot(attn.astype(bf16), wo_ref[layer],
                       preferred_element_type=f32) + bo_ref[layer]
        cls = cls + attn                                  # residual (f32)

        # ---- feed-forward sub-layer --------------------------------------
        h = layernorm(cls, lw[2:3], lb[2:3], fmask)       # norm2
        h = jnp.dot(h.astype(bf16), wd1_ref[layer],
                    preferred_element_type=f32) + bd1_ref[layer]
        h = jnp.where(h > 0, h, 0.1 * h)                  # LeakyReLU(0.1)
        h = jnp.dot(h.astype(bf16), wd2_ref[layer],
                    preferred_element_type=f32) + bd2_ref[layer]
        cls = cls + h                                     # residual (f32)

    # ---- final_norm + output head ----------------------------------------
    cls = layernorm(cls, fn_w_ref[...], fn_b_ref[...], fmask)
    out_ref[...] = jnp.dot(cls.astype(bf16), wout_ref[...],
                           preferred_element_type=f32) + bout_ref[...]


# ----------------------------------------------------------------------------
# wrapper: padding, packing, BlockSpecs, grid
# ----------------------------------------------------------------------------
def class_attention_forward(seq, mask, params, *, b_tile=None):
    B, S, D = seq.shape
    L = params["ln_w"].shape[0]
    H = params["wd1"].shape[-1]
    n_out = params["wout"].shape[-1]
    f32, bf16 = jnp.float32, jnp.bfloat16

    # ---- alignment / tiling -------------------------------------------------
    Dp = _round_up(D, LANE)          # lane-align model dim
    Hp = _round_up(H, LANE)          # lane-align FFN hidden dim
    Sp = _round_up(S, SUB)           # sublane-align kv sequence
    Np = _round_up(n_out, LANE)      # lane-dense output

    if b_tile is None:
        # MXU-sized batch tile when the batch is large; tiny batches collapse
        # to one 8-row tile (v5e needs less; 256 is sized for v6e/v7x MXU).
        b_tile = min(256, _round_up(B, SUB))
    b_tile = _round_up(b_tile, SUB)
    Bp = _round_up(B, b_tile)
    grid = (Bp // b_tile,)

    # ---- pad / pack parameters (zero padding keeps padded features inert) ---
    seq_p = _pad_to(seq.astype(f32), (Bp, Sp, Dp))
    mask_p = _pad_to(mask, (Bp, Sp))                       # pads with False
    bias = jnp.where(mask_p, 0.0, NEG_INF).astype(f32)     # additive attn bias

    cls_tok = _pad_to(params["class_token"].reshape(1, D).astype(f32), (1, Dp))
    ln_w = _pad_to(params["ln_w"].astype(f32), (L, 4, Dp))
    ln_b = _pad_to(params["ln_b"].astype(f32), (L, 4, Dp))

    def padw(w, shape):                                    # weights -> bf16
        return _pad_to(w, shape).astype(bf16)

    def padb(b, shape):                                    # biases stay f32
        return _pad_to(b, shape).astype(f32)

    wq = padw(params["wq"], (L, Dp, Dp));   bq = padb(params["bq"], (L, 1, Dp))
    # fused K|V projection; each half padded separately so the split stays @ Dp
    wkv = jnp.concatenate([padw(params["wk"], (L, Dp, Dp)),
                           padw(params["wv"], (L, Dp, Dp))], axis=-1)
    bkv = jnp.concatenate([padb(params["bk"], (L, 1, Dp)),
                           padb(params["bv"], (L, 1, Dp))], axis=-1)
    wo = padw(params["wo"], (L, Dp, Dp));   bo = padb(params["bo"], (L, 1, Dp))
    wd1 = padw(params["wd1"], (L, Dp, Hp)); bd1 = padb(params["bd1"], (L, 1, Hp))
    wd2 = padw(params["wd2"], (L, Hp, Dp)); bd2 = padb(params["bd2"], (L, 1, Dp))
    fn_w = padb(params["fn_w"], (1, Dp));   fn_b = padb(params["fn_b"], (1, Dp))
    wout = padw(params["wout"], (Dp, Np));  bout = padb(params["bout"], (1, Np))

    args = (seq_p, bias, cls_tok, ln_w, ln_b, wq, bq, wkv, bkv, wo, bo,
            wd1, bd1, wd2, bd2, fn_w, fn_b, wout, bout)

    # ---- BlockSpecs: batch-tiled activations, resident weights --------------
    def c2(b):
        return (0, 0)

    def c3(b):
        return (0, 0, 0)

    in_specs = [
        pl.BlockSpec((b_tile, Sp, Dp), lambda b: (b, 0, 0)),   # seq
        pl.BlockSpec((b_tile, Sp), lambda b: (b, 0)),          # mask bias
        pl.BlockSpec((1, Dp), c2),                             # class token
        pl.BlockSpec((L, 4, Dp), c3), pl.BlockSpec((L, 4, Dp), c3),
        pl.BlockSpec((L, Dp, Dp), c3), pl.BlockSpec((L, 1, Dp), c3),
        pl.BlockSpec((L, Dp, 2 * Dp), c3), pl.BlockSpec((L, 1, 2 * Dp), c3),
        pl.BlockSpec((L, Dp, Dp), c3), pl.BlockSpec((L, 1, Dp), c3),
        pl.BlockSpec((L, Dp, Hp), c3), pl.BlockSpec((L, 1, Hp), c3),
        pl.BlockSpec((L, Hp, Dp), c3), pl.BlockSpec((L, 1, Dp), c3),
        pl.BlockSpec((1, Dp), c2), pl.BlockSpec((1, Dp), c2),
        pl.BlockSpec((Dp, Np), c2), pl.BlockSpec((1, Np), c2),
    ]
    out_specs = pl.BlockSpec((b_tile, Np), lambda b: (b, 0))

    # ---- advisory cost estimate ---------------------------------------------
    flops = L * (2 * Bp * Sp * Dp * 2 * Dp          # fused kv projection
                 + 2 * 2 * Bp * Dp * Dp             # q / out projections
                 + 2 * 2 * Bp * Dp * Hp             # dense network
                 + 4 * Bp * Sp * Dp)                # attention mat-vecs
    flops += 2 * Bp * Dp * Np
    transcendentals = L * Bp * (Sp + 8) + 2 * Bp
    bytes_accessed = sum(math.prod(a.shape) * a.dtype.itemsize for a in args)
    bytes_accessed += Bp * Np * 4

    out = pl.pallas_call(
        functools.partial(class_attention_kernel, D),
        out_shape=jax.ShapeDtypeStruct((Bp, Np), f32),
        grid_spec=pltpu.PrefetchScalarGridSpec(
            num_scalar_prefetch=0,
            grid=grid,
            in_specs=in_specs,
            out_specs=out_specs,
        ),
        compiler_params=pltpu.CompilerParams(
            dimension_semantics=("parallel",),        # megacore split on v7x
            vmem_limit_bytes=48 * 1024 * 1024,        # > v5e 16 MiB default,
        ),                                            # < v7x 64 MiB physical
        cost_estimate=pl.CostEstimate(
            flops=int(flops),
            transcendentals=int(transcendentals),
            bytes_accessed=int(bytes_accessed),
        ),
    )(*args)

    return out[:B, :n_out]


# ----------------------------------------------------------------------------
# pure-JAX reference (module semantics, f32, unpadded)
# ----------------------------------------------------------------------------
def _ln_ref(x, w, b):
    mu = x.mean(-1, keepdims=True)
    var = ((x - mu) ** 2).mean(-1, keepdims=True)
    return (x - mu) / jnp.sqrt(var + EPS) * w + b


def reference_forward(seq, mask, params):
    B, S, D = seq.shape
    L = params["ln_w"].shape[0]
    cls = jnp.broadcast_to(params["class_token"], (B, 1, D)).astype(jnp.float32)
    for l in range(L):
        lw, lb = params["ln_w"][l], params["ln_b"][l]
        q_in = _ln_ref(cls, lw[1], lb[1])
        kv_in = _ln_ref(seq, lw[0], lb[0])
        q = q_in @ params["wq"][l] + params["bq"][l]
        k = kv_in @ params["wk"][l] + params["bk"][l]
        v = kv_in @ params["wv"][l] + params["bv"][l]
        scores = jnp.einsum("bqd,bkd->bqk", q, k) / math.sqrt(D)
        scores = jnp.where(mask[:, None, :], scores, NEG_INF)
        p = jax.nn.softmax(scores, axis=-1)
        attn = jnp.einsum("bqk,bkd->bqd", p, v)
        attn = _ln_ref(attn, lw[3], lb[3]) @ params["wo"][l] + params["bo"][l]
        cls = cls + attn
        h = _ln_ref(cls, lw[2], lb[2]) @ params["wd1"][l] + params["bd1"][l]
        h = jnp.where(h > 0, h, 0.1 * h)
        cls = cls + (h @ params["wd2"][l] + params["bd2"][l])
    cls = _ln_ref(cls, params["fn_w"], params["fn_b"])
    return (cls @ params["wout"] + params["bout"]).reshape(B, -1)


# ----------------------------------------------------------------------------
# deterministic parameter init (unpadded, f32; wrapper does padding / bf16)
# ----------------------------------------------------------------------------
def init_params(key, D, hidden, n_out, n_layers):
    def lin(k, din, dout, scale=0.05):
        kw, kb = jax.random.split(k)
        return (scale * jax.random.normal(kw, (din, dout), jnp.float32),
                scale * jax.random.normal(kb, (1, dout), jnp.float32))

    ks = iter(jax.random.split(key, 6 * n_layers + 4))

    names = ("wq", "bq", "wk", "bk", "wv", "bv", "wo", "bo",
             "wd1", "bd1", "wd2", "bd2")
    stacks = {n: [] for n in names}
    for _ in range(n_layers):
        for tag, (din, dout) in (("q", (D, D)), ("k", (D, D)),
                                 ("v", (D, D)), ("o", (D, D))):
            w, b = lin(next(ks), din, dout)
            stacks["w" + tag].append(w)
            stacks["b" + tag].append(b)
        w, b = lin(next(ks), D, hidden)
        stacks["wd1"].append(w); stacks["bd1"].append(b)
        w, b = lin(next(ks), hidden, D)
        stacks["wd2"].append(w); stacks["bd2"].append(b)

    # LayerNorm params packed: rows = [norm0, norm1, norm2, mha_layer_norm]
    ln_w = 1.0 + 0.1 * jax.random.normal(next(ks), (n_layers, 4, D), jnp.float32)
    ln_b = 0.1 * jax.random.normal(next(ks), (n_layers, 4, D), jnp.float32)
    wout, bout = lin(next(ks), D, n_out)
    cls_tok = jax.random.normal(next(ks), (1, 1, D), jnp.float32)

    params = {n: jnp.stack(v) for n, v in stacks.items()}
    params.update(
        class_token=cls_tok, ln_w=ln_w, ln_b=ln_b,
        fn_w=jnp.ones((1, D), jnp.float32),
        fn_b=jnp.zeros((1, D), jnp.float32),
        wout=wout, bout=bout,
    )
    return params


# ----------------------------------------------------------------------------
if __name__ == "__main__":
    B, S, D = 2, 8, 32
    hidden, n_out, n_layers = 32, 1, 2

    key = jax.random.PRNGKey(0)
    k_seq, k_par = jax.random.split(key)
    seq = jax.random.normal(k_seq, (B, S, D), jnp.float32)
    # kv padding mask: first element fully valid, second has 5 valid nodes
    mask = jnp.array([[True] * S, [True] * 5 + [False] * (S - 5)],
                     dtype=jnp.bool_)
    params = init_params(k_par, D, hidden, n_out, n_layers)

    out = jax.jit(class_attention_forward)(seq, mask, params)
    out = jax.block_until_ready(out)

    ref = reference_forward(seq, mask, params)
    assert out.shape == (B, n_out), out.shape
    # tolerance covers bf16 weights / bf16 matmul inputs + approx softmax recip
    assert jnp.allclose(out, ref, rtol=2e-2, atol=2e-2), (out, ref)

    print("KERNEL_OK")
</pallas_src>

<mosaic_0001>
module attributes {stable_mosaic.version = 11 : i64} {
  func.func @class_attention_kernel(%arg0: i32, %arg1: memref<8x8x128xf32, #tpu.memory_space<vmem>>, %arg2: memref<8x8xf32, #tpu.memory_space<vmem>>, %arg3: memref<1x128xf32, #tpu.memory_space<vmem>>, %arg4: memref<2x4x128xf32, #tpu.memory_space<vmem>>, %arg5: memref<2x4x128xf32, #tpu.memory_space<vmem>>, %arg6: memref<2x128x128xbf16, #tpu.memory_space<vmem>>, %arg7: memref<2x1x128xf32, #tpu.memory_space<vmem>>, %arg8: memref<2x128x256xbf16, #tpu.memory_space<vmem>>, %arg9: memref<2x1x256xf32, #tpu.memory_space<vmem>>, %arg10: memref<2x128x128xbf16, #tpu.memory_space<vmem>>, %arg11: memref<2x1x128xf32, #tpu.memory_space<vmem>>, %arg12: memref<2x128x128xbf16, #tpu.memory_space<vmem>>, %arg13: memref<2x1x128xf32, #tpu.memory_space<vmem>>, %arg14: memref<2x128x128xbf16, #tpu.memory_space<vmem>>, %arg15: memref<2x1x128xf32, #tpu.memory_space<vmem>>, %arg16: memref<1x128xf32, #tpu.memory_space<vmem>>, %arg17: memref<1x128xf32, #tpu.memory_space<vmem>>, %arg18: memref<128x128xbf16, #tpu.memory_space<vmem>>, %arg19: memref<1x128xf32, #tpu.memory_space<vmem>>, %arg20: memref<8x128xf32, #tpu.memory_space<vmem>>) attributes {dimension_semantics = [#tpu.dimension_semantics<parallel>], iteration_bounds = array<i64: 1>, scalar_prefetch = 0 : i64, scratch_operands = 0 : i64, tpu.core_type = #tpu.core_type<tc>, window_params = [{transform_indices = @transform_0, window_bounds = array<i64: 8, 8, 128>}, {transform_indices = @transform_1, window_bounds = array<i64: 8, 8>}, {pipeline_mode = #tpu.pipeline_mode<synchronous>, transform_indices = @transform_2, window_bounds = array<i64: 1, 128>}, {pipeline_mode = #tpu.pipeline_mode<synchronous>, transform_indices = @transform_3, window_bounds = array<i64: 2, 4, 128>}, {pipeline_mode = #tpu.pipeline_mode<synchronous>, transform_indices = @transform_4, window_bounds = array<i64: 2, 4, 128>}, {pipeline_mode = #tpu.pipeline_mode<synchronous>, transform_indices = @transform_5, window_bounds = array<i64: 2, 128, 128>}, {pipeline_mode = #tpu.pipeline_mode<synchronous>, transform_indices = @transform_6, window_bounds = array<i64: 2, 1, 128>}, {pipeline_mode = #tpu.pipeline_mode<synchronous>, transform_indices = @transform_7, window_bounds = array<i64: 2, 128, 256>}, {pipeline_mode = #tpu.pipeline_mode<synchronous>, transform_indices = @transform_8, window_bounds = array<i64: 2, 1, 256>}, {pipeline_mode = #tpu.pipeline_mode<synchronous>, transform_indices = @transform_9, window_bounds = array<i64: 2, 128, 128>}, {pipeline_mode = #tpu.pipeline_mode<synchronous>, transform_indices = @transform_10, window_bounds = array<i64: 2, 1, 128>}, {pipeline_mode = #tpu.pipeline_mode<synchronous>, transform_indices = @transform_11, window_bounds = array<i64: 2, 128, 128>}, {pipeline_mode = #tpu.pipeline_mode<synchronous>, transform_indices = @transform_12, window_bounds = array<i64: 2, 1, 128>}, {pipeline_mode = #tpu.pipeline_mode<synchronous>, transform_indices = @transform_13, window_bounds = array<i64: 2, 128, 128>}, {pipeline_mode = #tpu.pipeline_mode<synchronous>, transform_indices = @transform_14, window_bounds = array<i64: 2, 1, 128>}, {pipeline_mode = #tpu.pipeline_mode<synchronous>, transform_indices = @transform_15, window_bounds = array<i64: 1, 128>}, {pipeline_mode = #tpu.pipeline_mode<synchronous>, transform_indices = @transform_16, window_bounds = array<i64: 1, 128>}, {pipeline_mode = #tpu.pipeline_mode<synchronous>, transform_indices = @transform_17, window_bounds = array<i64: 128, 128>}, {pipeline_mode = #tpu.pipeline_mode<synchronous>, transform_indices = @transform_18, window_bounds = array<i64: 1, 128>}, {transform_indices = @transform_19, window_bounds = array<i64: 8, 128>}]} {
    %0 = tpu.iota {dimensions = array<i32: 1>} : vector<1x128xi32>
    %c32_i32 = arith.constant 32 : i32
    %1 = vector.broadcast %c32_i32 : i32 to vector<1x128xi32>
    %2 = arith.cmpi slt, %0, %1 : vector<1x128xi32>
    %3 = arith.extui %2 : vector<1x128xi1> to vector<1x128xi32>
    %4 = arith.sitofp %3 : vector<1x128xi32> to vector<1x128xf32>
    %c0 = arith.constant 0 : index
    %c0_0 = arith.constant 0 : index
    %c0_1 = arith.constant 0 : index
    %5 = vector.load %arg1[%c0, %c0_0, %c0_1] : memref<8x8x128xf32, #tpu.memory_space<vmem>>, vector<8x8x128xf32>
    %c0_2 = arith.constant 0 : index
    %c0_3 = arith.constant 0 : index
    %6 = vector.load %arg2[%c0_2, %c0_3] : memref<8x8xf32, #tpu.memory_space<vmem>>, vector<8x8xf32>
    %c0_4 = arith.constant 0 : index
    %c0_5 = arith.constant 0 : index
    %7 = vector.load %arg3[%c0_4, %c0_5] : memref<1x128xf32, #tpu.memory_space<vmem>>, vector<1x128xf32>
    %8 = vector.shape_cast %7 : vector<1x128xf32> to vector<1x128xf32>
    %9 = vector.broadcast %8 : vector<1x128xf32> to vector<8x128xf32>
    %c0_6 = arith.constant 0 : index
    %c0_7 = arith.constant 0 : index
    %c0_8 = arith.constant 0 : index
    %10 = vector.load %arg4[%c0_6, %c0_7, %c0_8] : memref<2x4x128xf32, #tpu.memory_space<vmem>>, vector<1x4x128xf32>
    %11 = vector.shape_cast %10 : vector<1x4x128xf32> to vector<4x128xf32>
    %c0_9 = arith.constant 0 : index
    %c0_10 = arith.constant 0 : index
    %c0_11 = arith.constant 0 : index
    %12 = vector.load %arg5[%c0_9, %c0_10, %c0_11] : memref<2x4x128xf32, #tpu.memory_space<vmem>>, vector<1x4x128xf32>
    %13 = vector.shape_cast %12 : vector<1x4x128xf32> to vector<4x128xf32>
    %14 = vector.extract_strided_slice %11 {offsets = [1, 0], sizes = [1, 128], strides = [1, 1]} : vector<4x128xf32> to vector<1x128xf32>
    %15 = vector.extract_strided_slice %13 {offsets = [1, 0], sizes = [1, 128], strides = [1, 1]} : vector<4x128xf32> to vector<1x128xf32>
    %cst = arith.constant dense<0.000000e+00> : vector<8xf32>
    %16 = vector.multi_reduction <add>, %9, %cst [1] : vector<8x128xf32> to vector<8xf32>
    %17 = vector.shape_cast %16 : vector<8xf32> to vector<8x1xf32>
    %cst_12 = arith.constant 3.125000e-02 : f32
    %18 = vector.broadcast %cst_12 : f32 to vector<8x1xf32>
    %19 = arith.mulf %17, %18 : vector<8x1xf32>
    %20 = vector.broadcast %19 : vector<8x1xf32> to vector<8x128xf32>
    %21 = arith.subf %9, %20 : vector<8x128xf32>
    %22 = vector.broadcast %4 : vector<1x128xf32> to vector<8x128xf32>
    %23 = arith.mulf %21, %22 : vector<8x128xf32>
    %24 = arith.mulf %23, %23 : vector<8x128xf32>
    %cst_13 = arith.constant dense<0.000000e+00> : vector<8xf32>
    %25 = vector.multi_reduction <add>, %24, %cst_13 [1] : vector<8x128xf32> to vector<8xf32>
    %26 = vector.shape_cast %25 : vector<8xf32> to vector<8x1xf32>
    %cst_14 = arith.constant 3.125000e-02 : f32
    %27 = vector.broadcast %cst_14 : f32 to vector<8x1xf32>
    %28 = arith.mulf %26, %27 : vector<8x1xf32>
    %cst_15 = arith.constant 9.99999974E-6 : f32
    %29 = vector.broadcast %cst_15 : f32 to vector<8x1xf32>
    %30 = arith.addf %28, %29 : vector<8x1xf32>
    %31 = math.rsqrt %30 : vector<8x1xf32>
    %32 = vector.broadcast %31 : vector<8x1xf32> to vector<8x128xf32>
    %33 = arith.mulf %23, %32 : vector<8x128xf32>
    %34 = vector.broadcast %14 : vector<1x128xf32> to vector<8x128xf32>
    %35 = arith.mulf %33, %34 : vector<8x128xf32>
    %36 = vector.broadcast %15 : vector<1x128xf32> to vector<8x128xf32>
    %37 = arith.addf %35, %36 : vector<8x128xf32>
    %38 = vector.extract_strided_slice %11 {offsets = [0, 0], sizes = [1, 128], strides = [1, 1]} : vector<4x128xf32> to vector<1x128xf32>
    %39 = vector.extract_strided_slice %13 {offsets = [0, 0], sizes = [1, 128], strides = [1, 1]} : vector<4x128xf32> to vector<1x128xf32>
    %cst_16 = arith.constant dense<0.000000e+00> : vector<8x8xf32>
    %40 = vector.multi_reduction <add>, %5, %cst_16 [2] : vector<8x8x128xf32> to vector<8x8xf32>
    %41 = vector.shape_cast %40 : vector<8x8xf32> to vector<8x8x1xf32>
    %cst_17 = arith.constant 3.125000e-02 : f32
    %42 = vector.broadcast %cst_17 : f32 to vector<8x8x1xf32>
    %43 = arith.mulf %41, %42 : vector<8x8x1xf32>
    %44 = vector.broadcast %43 : vector<8x8x1xf32> to vector<8x8x128xf32>
    %45 = arith.subf %5, %44 : vector<8x8x128xf32>
    %46 = vector.shape_cast %4 : vector<1x128xf32> to vector<1x1x128xf32>
    %47 = vector.broadcast %46 : vector<1x1x128xf32> to vector<8x8x128xf32>
    %48 = arith.mulf %45, %47 : vector<8x8x128xf32>
    %49 = arith.mulf %48, %48 : vector<8x8x128xf32>
    %cst_18 = arith.constant dense<0.000000e+00> : vector<8x8xf32>
    %50 = vector.multi_reduction <add>, %49, %cst_18 [2] : vector<8x8x128xf32> to vector<8x8xf32>
    %51 = vector.shape_cast %50 : vector<8x8xf32> to vector<8x8x1xf32>
    %cst_19 = arith.constant 3.125000e-02 : f32
    %52 = vector.broadcast %cst_19 : f32 to vector<8x8x1xf32>
    %53 = arith.mulf %51, %52 : vector<8x8x1xf32>
    %cst_20 = arith.constant 9.99999974E-6 : f32
    %54 = vector.broadcast %cst_20 : f32 to vector<8x8x1xf32>
    %55 = arith.addf %53, %54 : vector<8x8x1xf32>
    %56 = math.rsqrt %55 : vector<8x8x1xf32>
    %57 = vector.broadcast %56 : vector<8x8x1xf32> to vector<8x8x128xf32>
    %58 = arith.mulf %48, %57 : vector<8x8x128xf32>
    %59 = vector.shape_cast %38 : vector<1x128xf32> to vector<1x1x128xf32>
    %60 = vector.broadcast %59 : vector<1x1x128xf32> to vector<8x8x128xf32>
    %61 = arith.mulf %58, %60 : vector<8x8x128xf32>
    %62 = vector.shape_cast %39 : vector<1x128xf32> to vector<1x1x128xf32>
    %63 = vector.broadcast %62 : vector<1x1x128xf32> to vector<8x8x128xf32>
    %64 = arith.addf %61, %63 : vector<8x8x128xf32>
    %65 = arith.truncf %37 : vector<8x128xf32> to vector<8x128xbf16>
    %c0_21 = arith.constant 0 : index
    %c0_22 = arith.constant 0 : index
    %c0_23 = arith.constant 0 : index
    %66 = vector.load %arg6[%c0_21, %c0_22, %c0_23] : memref<2x128x128xbf16, #tpu.memory_space<vmem>>, vector<1x128x128xbf16>
    %67 = vector.shape_cast %66 : vector<1x128x128xbf16> to vector<128x128xbf16>
    %cst_24 = arith.constant dense<0.000000e+00> : vector<8x128xf32>
    %68 = tpu.matmul %65, %67, %cst_24 {dimension_numbers = #tpu.dot_dimension_numbers<[1], [0], [0], [1], [0, 0, 1, 1], [], []>} : vector<8x128xbf16>, vector<128x128xbf16>, vector<8x128xf32> -> vector<8x128xf32>
    %c0_25 = arith.constant 0 : index
    %c0_26 = arith.constant 0 : index
    %c0_27 = arith.constant 0 : index
    %69 = vector.load %arg7[%c0_25, %c0_26, %c0_27] : memref<2x1x128xf32, #tpu.memory_space<vmem>>, vector<1x1x128xf32>
    %70 = vector.shape_cast %69 : vector<1x1x128xf32> to vector<1x128xf32>
    %71 = vector.broadcast %70 : vector<1x128xf32> to vector<8x128xf32>
    %72 = arith.addf %68, %71 : vector<8x128xf32>
    %73 = vector.shape_cast %64 : vector<8x8x128xf32> to vector<64x128xf32>
    %74 = arith.truncf %73 : vector<64x128xf32> to vector<64x128xbf16>
    %c0_28 = arith.constant 0 : index
    %c0_29 = arith.constant 0 : index
    %c0_30 = arith.constant 0 : index
    %75 = vector.load %arg8[%c0_28, %c0_29, %c0_30] : memref<2x128x256xbf16, #tpu.memory_space<vmem>>, vector<1x128x256xbf16>
    %76 = vector.shape_cast %75 : vector<1x128x256xbf16> to vector<128x256xbf16>
    %cst_31 = arith.constant dense<0.000000e+00> : vector<64x256xf32>
    %77 = tpu.matmul %74, %76, %cst_31 {dimension_numbers = #tpu.dot_dimension_numbers<[1], [0], [0], [1], [0, 0, 1, 1], [], []>} : vector<64x128xbf16>, vector<128x256xbf16>, vector<64x256xf32> -> vector<64x256xf32>
    %c0_32 = arith.constant 0 : index
    %c0_33 = arith.constant 0 : index
    %c0_34 = arith.constant 0 : index
    %78 = vector.load %arg9[%c0_32, %c0_33, %c0_34] : memref<2x1x256xf32, #tpu.memory_space<vmem>>, vector<1x1x256xf32>
    %79 = vector.shape_cast %78 : vector<1x1x256xf32> to vector<1x256xf32>
    %80 = vector.shape_cast %79 : vector<1x256xf32> to vector<256xf32>
    %81 = vector.shape_cast %80 : vector<256xf32> to vector<1x256xf32>
    %82 = vector.broadcast %81 : vector<1x256xf32> to vector<64x256xf32>
    %83 = arith.addf %77, %82 : vector<64x256xf32>
    %84 = vector.shape_cast %83 : vector<64x256xf32> to vector<8x8x256xf32>
    %85 = vector.extract_strided_slice %84 {offsets = [0, 0, 0], sizes = [8, 8, 128], strides = [1, 1, 1]} : vector<8x8x256xf32> to vector<8x8x128xf32>
    %86 = vector.extract_strided_slice %84 {offsets = [0, 0, 128], sizes = [8, 8, 128], strides = [1, 1, 1]} : vector<8x8x256xf32> to vector<8x8x128xf32>
    %87 = vector.shape_cast %72 : vector<8x128xf32> to vector<8x1x128xf32>
    %88 = vector.broadcast %87 : vector<8x1x128xf32> to vector<8x8x128xf32>
    %89 = arith.mulf %88, %85 : vector<8x8x128xf32>
    %cst_35 = arith.constant dense<0.000000e+00> : vector<8x8xf32>
    %90 = vector.multi_reduction <add>, %89, %cst_35 [2] : vector<8x8x128xf32> to vector<8x8xf32>
    %cst_36 = arith.constant 0.176776692 : f32
    %91 = vector.broadcast %cst_36 : f32 to vector<8x8xf32>
    %92 = arith.mulf %90, %91 : vector<8x8xf32>
    %93 = arith.addf %92, %6 : vector<8x8xf32>
    %cst_37 = arith.constant dense<0xFF800000> : vector<8xf32>
    %94 = vector.multi_reduction <maximumf>, %93, %cst_37 [1] : vector<8x8xf32> to vector<8xf32>
    %95 = vector.shape_cast %94 : vector<8xf32> to vector<8x1xf32>
    %96 = vector.broadcast %95 : vector<8x1xf32> to vector<8x8xf32>
    %97 = arith.subf %93, %96 : vector<8x8xf32>
    %98 = math.exp %97 : vector<8x8xf32>
    %cst_38 = arith.constant dense<0.000000e+00> : vector<8xf32>
    %99 = vector.multi_reduction <add>, %98, %cst_38 [1] : vector<8x8xf32> to vector<8xf32>
    %100 = vector.shape_cast %99 : vector<8xf32> to vector<8x1xf32>
    %101 = tpu.reciprocal %100 {approx = true} : vector<8x1xf32> -> vector<8x1xf32>
    %102 = vector.broadcast %101 : vector<8x1xf32> to vector<8x8xf32>
    %103 = arith.mulf %98, %102 : vector<8x8xf32>
    %104 = vector.shape_cast %103 : vector<8x8xf32> to vector<8x8x1xf32>
    %105 = vector.broadcast %104 : vector<8x8x1xf32> to vector<8x8x128xf32>
    %106 = arith.mulf %105, %86 : vector<8x8x128xf32>
    %cst_39 = arith.constant dense<0.000000e+00> : vector<8x128xf32>
    %107 = vector.multi_reduction <add>, %106, %cst_39 [1] : vector<8x8x128xf32> to vector<8x128xf32>
    %108 = vector.extract_strided_slice %11 {offsets = [3, 0], sizes = [1, 128], strides = [1, 1]} : vector<4x128xf32> to vector<1x128xf32>
    %109 = vector.extract_strided_slice %13 {offsets = [3, 0], sizes = [1, 128], strides = [1, 1]} : vector<4x128xf32> to vector<1x128xf32>
    %cst_40 = arith.constant dense<0.000000e+00> : vector<8xf32>
    %110 = vector.multi_reduction <add>, %107, %cst_40 [1] : vector<8x128xf32> to vector<8xf32>
    %111 = vector.shape_cast %110 : vector<8xf32> to vector<8x1xf32>
    %cst_41 = arith.constant 3.125000e-02 : f32
    %112 = vector.broadcast %cst_41 : f32 to vector<8x1xf32>
    %113 = arith.mulf %111, %112 : vector<8x1xf32>
    %114 = vector.broadcast %113 : vector<8x1xf32> to vector<8x128xf32>
    %115 = arith.subf %107, %114 : vector<8x128xf32>
    %116 = vector.broadcast %4 : vector<1x128xf32> to vector<8x128xf32>
    %117 = arith.mulf %115, %116 : vector<8x128xf32>
    %118 = arith.mulf %117, %117 : vector<8x128xf32>
    %cst_42 = arith.constant dense<0.000000e+00> : vector<8xf32>
    %119 = vector.multi_reduction <add>, %118, %cst_42 [1] : vector<8x128xf32> to vector<8xf32>
    %120 = vector.shape_cast %119 : vector<8xf32> to vector<8x1xf32>
    %cst_43 = arith.constant 3.125000e-02 : f32
    %121 = vector.broadcast %cst_43 : f32 to vector<8x1xf32>
    %122 = arith.mulf %120, %121 : vector<8x1xf32>
    %cst_44 = arith.constant 9.99999974E-6 : f32
    %123 = vector.broadcast %cst_44 : f32 to vector<8x1xf32>
    %124 = arith.addf %122, %123 : vector<8x1xf32>
    %125 = math.rsqrt %124 : vector<8x1xf32>
    %126 = vector.broadcast %125 : vector<8x1xf32> to vector<8x128xf32>
    %127 = arith.mulf %117, %126 : vector<8x128xf32>
    %128 = vector.broadcast %108 : vector<1x128xf32> to vector<8x128xf32>
    %129 = arith.mulf %127, %128 : vector<8x128xf32>
    %130 = vector.broadcast %109 : vector<1x128xf32> to vector<8x128xf32>
    %131 = arith.addf %129, %130 : vector<8x128xf32>
    %132 = arith.truncf %131 : vector<8x128xf32> to vector<8x128xbf16>
    %c0_45 = arith.constant 0 : index
    %c0_46 = arith.constant 0 : index
    %c0_47 = arith.constant 0 : index
    %133 = vector.load %arg10[%c0_45, %c0_46, %c0_47] : memref<2x128x128xbf16, #tpu.memory_space<vmem>>, vector<1x128x128xbf16>
    %134 = vector.shape_cast %133 : vector<1x128x128xbf16> to vector<128x128xbf16>
    %cst_48 = arith.constant dense<0.000000e+00> : vector<8x128xf32>
    %135 = tpu.matmul %132, %134, %cst_48 {dimension_numbers = #tpu.dot_dimension_numbers<[1], [0], [0], [1], [0, 0, 1, 1], [], []>} : vector<8x128xbf16>, vector<128x128xbf16>, vector<8x128xf32> -> vector<8x128xf32>
    %c0_49 = arith.constant 0 : index
    %c0_50 = arith.constant 0 : index
    %c0_51 = arith.constant 0 : index
    %136 = vector.load %arg11[%c0_49, %c0_50, %c0_51] : memref<2x1x128xf32, #tpu.memory_space<vmem>>, vector<1x1x128xf32>
    %137 = vector.shape_cast %136 : vector<1x1x128xf32> to vector<1x128xf32>
    %138 = vector.broadcast %137 : vector<1x128xf32> to vector<8x128xf32>
    %139 = arith.addf %135, %138 : vector<8x128xf32>
    %140 = arith.addf %9, %139 : vector<8x128xf32>
    %141 = vector.extract_strided_slice %11 {offsets = [2, 0], sizes = [1, 128], strides = [1, 1]} : vector<4x128xf32> to vector<1x128xf32>
    %142 = vector.extract_strided_slice %13 {offsets = [2, 0], sizes = [1, 128], strides = [1, 1]} : vector<4x128xf32> to vector<1x128xf32>
    %cst_52 = arith.constant dense<0.000000e+00> : vector<8xf32>
    %143 = vector.multi_reduction <add>, %140, %cst_52 [1] : vector<8x128xf32> to vector<8xf32>
    %144 = vector.shape_cast %143 : vector<8xf32> to vector<8x1xf32>
    %cst_53 = arith.constant 3.125000e-02 : f32
    %145 = vector.broadcast %cst_53 : f32 to vector<8x1xf32>
    %146 = arith.mulf %144, %145 : vector<8x1xf32>
    %147 = vector.broadcast %146 : vector<8x1xf32> to vector<8x128xf32>
    %148 = arith.subf %140, %147 : vector<8x128xf32>
    %149 = vector.broadcast %4 : vector<1x128xf32> to vector<8x128xf32>
    %150 = arith.mulf %148, %149 : vector<8x128xf32>
    %151 = arith.mulf %150, %150 : vector<8x128xf32>
    %cst_54 = arith.constant dense<0.000000e+00> : vector<8xf32>
    %152 = vector.multi_reduction <add>, %151, %cst_54 [1] : vector<8x128xf32> to vector<8xf32>
    %153 = vector.shape_cast %152 : vector<8xf32> to vector<8x1xf32>
    %cst_55 = arith.constant 3.125000e-02 : f32
    %154 = vector.broadcast %cst_55 : f32 to vector<8x1xf32>
    %155 = arith.mulf %153, %154 : vector<8x1xf32>
    %cst_56 = arith.constant 9.99999974E-6 : f32
    %156 = vector.broadcast %cst_56 : f32 to vector<8x1xf32>
    %157 = arith.addf %155, %156 : vector<8x1xf32>
    %158 = math.rsqrt %157 : vector<8x1xf32>
    %159 = vector.broadcast %158 : vector<8x1xf32> to vector<8x128xf32>
    %160 = arith.mulf %150, %159 : vector<8x128xf32>
    %161 = vector.broadcast %141 : vector<1x128xf32> to vector<8x128xf32>
    %162 = arith.mulf %160, %161 : vector<8x128xf32>
    %163 = vector.broadcast %142 : vector<1x128xf32> to vector<8x128xf32>
    %164 = arith.addf %162, %163 : vector<8x128xf32>
    %165 = arith.truncf %164 : vector<8x128xf32> to vector<8x128xbf16>
    %c0_57 = arith.constant 0 : index
    %c0_58 = arith.constant 0 : index
    %c0_59 = arith.constant 0 : index
    %166 = vector.load %arg12[%c0_57, %c0_58, %c0_59] : memref<2x128x128xbf16, #tpu.memory_space<vmem>>, vector<1x128x128xbf16>
    %167 = vector.shape_cast %166 : vector<1x128x128xbf16> to vector<128x128xbf16>
    %cst_60 = arith.constant dense<0.000000e+00> : vector<8x128xf32>
    %168 = tpu.matmul %165, %167, %cst_60 {dimension_numbers = #tpu.dot_dimension_numbers<[1], [0], [0], [1], [0, 0, 1, 1], [], []>} : vector<8x128xbf16>, vector<128x128xbf16>, vector<8x128xf32> -> vector<8x128xf32>
    %c0_61 = arith.constant 0 : index
    %c0_62 = arith.constant 0 : index
    %c0_63 = arith.constant 0 : index
    %169 = vector.load %arg13[%c0_61, %c0_62, %c0_63] : memref<2x1x128xf32, #tpu.memory_space<vmem>>, vector<1x1x128xf32>
    %170 = vector.shape_cast %169 : vector<1x1x128xf32> to vector<1x128xf32>
    %171 = vector.broadcast %170 : vector<1x128xf32> to vector<8x128xf32>
    %172 = arith.addf %168, %171 : vector<8x128xf32>
    %cst_64 = arith.constant 0.000000e+00 : f32
    %173 = vector.broadcast %cst_64 : f32 to vector<8x128xf32>
    %174 = arith.cmpf ogt, %172, %173 : vector<8x128xf32>
    %cst_65 = arith.constant 1.000000e-01 : f32
    %175 = vector.broadcast %cst_65 : f32 to vector<8x128xf32>
    %176 = arith.mulf %175, %172 : vector<8x128xf32>
    %177 = arith.select %174, %172, %176 : vector<8x128xi1>, vector<8x128xf32>
    %178 = arith.truncf %177 : vector<8x128xf32> to vector<8x128xbf16>
    %c0_66 = arith.constant 0 : index
    %c0_67 = arith.constant 0 : index
    %c0_68 = arith.constant 0 : index
    %179 = vector.load %arg14[%c0_66, %c0_67, %c0_68] : memref<2x128x128xbf16, #tpu.memory_space<vmem>>, vector<1x128x128xbf16>
    %180 = vector.shape_cast %179 : vector<1x128x128xbf16> to vector<128x128xbf16>
    %cst_69 = arith.constant dense<0.000000e+00> : vector<8x128xf32>
    %181 = tpu.matmul %178, %180, %cst_69 {dimension_numbers = #tpu.dot_dimension_numbers<[1], [0], [0], [1], [0, 0, 1, 1], [], []>} : vector<8x128xbf16>, vector<128x128xbf16>, vector<8x128xf32> -> vector<8x128xf32>
    %c0_70 = arith.constant 0 : index
    %c0_71 = arith.constant 0 : index
    %c0_72 = arith.constant 0 : index
    %182 = vector.load %arg15[%c0_70, %c0_71, %c0_72] : memref<2x1x128xf32, #tpu.memory_space<vmem>>, vector<1x1x128xf32>
    %183 = vector.shape_cast %182 : vector<1x1x128xf32> to vector<1x128xf32>
    %184 = vector.broadcast %183 : vector<1x128xf32> to vector<8x128xf32>
    %185 = arith.addf %181, %184 : vector<8x128xf32>
    %186 = arith.addf %140, %185 : vector<8x128xf32>
    %c1 = arith.constant 1 : index
    %c0_73 = arith.constant 0 : index
    %c0_74 = arith.constant 0 : index
    %187 = vector.load %arg4[%c1, %c0_73, %c0_74] : memref<2x4x128xf32, #tpu.memory_space<vmem>>, vector<1x4x128xf32>
    %188 = vector.shape_cast %187 : vector<1x4x128xf32> to vector<4x128xf32>
    %c1_75 = arith.constant 1 : index
    %c0_76 = arith.constant 0 : index
    %c0_77 = arith.constant 0 : index
    %189 = vector.load %arg5[%c1_75, %c0_76, %c0_77] : memref<2x4x128xf32, #tpu.memory_space<vmem>>, vector<1x4x128xf32>
    %190 = vector.shape_cast %189 : vector<1x4x128xf32> to vector<4x128xf32>
    %191 = vector.extract_strided_slice %188 {offsets = [1, 0], sizes = [1, 128], strides = [1, 1]} : vector<4x128xf32> to vector<1x128xf32>
    %192 = vector.extract_strided_slice %190 {offsets = [1, 0], sizes = [1, 128], strides = [1, 1]} : vector<4x128xf32> to vector<1x128xf32>
    %cst_78 = arith.constant dense<0.000000e+00> : vector<8xf32>
    %193 = vector.multi_reduction <add>, %186, %cst_78 [1] : vector<8x128xf32> to vector<8xf32>
    %194 = vector.shape_cast %193 : vector<8xf32> to vector<8x1xf32>
    %cst_79 = arith.constant 3.125000e-02 : f32
    %195 = vector.broadcast %cst_79 : f32 to vector<8x1xf32>
    %196 = arith.mulf %194, %195 : vector<8x1xf32>
    %197 = vector.broadcast %196 : vector<8x1xf32> to vector<8x128xf32>
    %198 = arith.subf %186, %197 : vector<8x128xf32>
    %199 = vector.broadcast %4 : vector<1x128xf32> to vector<8x128xf32>
    %200 = arith.mulf %198, %199 : vector<8x128xf32>
    %201 = arith.mulf %200, %200 : vector<8x128xf32>
    %cst_80 = arith.constant dense<0.000000e+00> : vector<8xf32>
    %202 = vector.multi_reduction <add>, %201, %cst_80 [1] : vector<8x128xf32> to vector<8xf32>
    %203 = vector.shape_cast %202 : vector<8xf32> to vector<8x1xf32>
    %cst_81 = arith.constant 3.125000e-02 : f32
    %204 = vector.broadcast %cst_81 : f32 to vector<8x1xf32>
    %205 = arith.mulf %203, %204 : vector<8x1xf32>
    %cst_82 = arith.constant 9.99999974E-6 : f32
    %206 = vector.broadcast %cst_82 : f32 to vector<8x1xf32>
    %207 = arith.addf %205, %206 : vector<8x1xf32>
    %208 = math.rsqrt %207 : vector<8x1xf32>
    %209 = vector.broadcast %208 : vector<8x1xf32> to vector<8x128xf32>
    %210 = arith.mulf %200, %209 : vector<8x128xf32>
    %211 = vector.broadcast %191 : vector<1x128xf32> to vector<8x128xf32>
    %212 = arith.mulf %210, %211 : vector<8x128xf32>
    %213 = vector.broadcast %192 : vector<1x128xf32> to vector<8x128xf32>
    %214 = arith.addf %212, %213 : vector<8x128xf32>
    %215 = vector.extract_strided_slice %188 {offsets = [0, 0], sizes = [1, 128], strides = [1, 1]} : vector<4x128xf32> to vector<1x128xf32>
    %216 = vector.extract_strided_slice %190 {offsets = [0, 0], sizes = [1, 128], strides = [1, 1]} : vector<4x128xf32> to vector<1x128xf32>
    %cst_83 = arith.constant dense<0.000000e+00> : vector<8x8xf32>
    %217 = vector.multi_reduction <add>, %5, %cst_83 [2] : vector<8x8x128xf32> to vector<8x8xf32>
    %218 = vector.shape_cast %217 : vector<8x8xf32> to vector<8x8x1xf32>
    %cst_84 = arith.constant 3.125000e-02 : f32
    %219 = vector.broadcast %cst_84 : f32 to vector<8x8x1xf32>
    %220 = arith.mulf %218, %219 : vector<8x8x1xf32>
    %221 = vector.broadcast %220 : vector<8x8x1xf32> to vector<8x8x128xf32>
    %222 = arith.subf %5, %221 : vector<8x8x128xf32>
    %223 = vector.shape_cast %4 : vector<1x128xf32> to vector<1x1x128xf32>
    %224 = vector.broadcast %223 : vector<1x1x128xf32> to vector<8x8x128xf32>
    %225 = arith.mulf %222, %224 : vector<8x8x128xf32>
    %226 = arith.mulf %225, %225 : vector<8x8x128xf32>
    %cst_85 = arith.constant dense<0.000000e+00> : vector<8x8xf32>
    %227 = vector.multi_reduction <add>, %226, %cst_85 [2] : vector<8x8x128xf32> to vector<8x8xf32>
    %228 = vector.shape_cast %227 : vector<8x8xf32> to vector<8x8x1xf32>
    %cst_86 = arith.constant 3.125000e-02 : f32
    %229 = vector.broadcast %cst_86 : f32 to vector<8x8x1xf32>
    %230 = arith.mulf %228, %229 : vector<8x8x1xf32>
    %cst_87 = arith.constant 9.99999974E-6 : f32
    %231 = vector.broadcast %cst_87 : f32 to vector<8x8x1xf32>
    %232 = arith.addf %230, %231 : vector<8x8x1xf32>
    %233 = math.rsqrt %232 : vector<8x8x1xf32>
    %234 = vector.broadcast %233 : vector<8x8x1xf32> to vector<8x8x128xf32>
    %235 = arith.mulf %225, %234 : vector<8x8x128xf32>
    %236 = vector.shape_cast %215 : vector<1x128xf32> to vector<1x1x128xf32>
    %237 = vector.broadcast %236 : vector<1x1x128xf32> to vector<8x8x128xf32>
    %238 = arith.mulf %235, %237 : vector<8x8x128xf32>
    %239 = vector.shape_cast %216 : vector<1x128xf32> to vector<1x1x128xf32>
    %240 = vector.broadcast %239 : vector<1x1x128xf32> to vector<8x8x128xf32>
    %241 = arith.addf %238, %240 : vector<8x8x128xf32>
    %242 = arith.truncf %214 : vector<8x128xf32> to vector<8x128xbf16>
    %c1_88 = arith.constant 1 : index
    %c0_89 = arith.constant 0 : index
    %c0_90 = arith.constant 0 : index
    %243 = vector.load %arg6[%c1_88, %c0_89, %c0_90] : memref<2x128x128xbf16, #tpu.memory_space<vmem>>, vector<1x128x128xbf16>
    %244 = vector.shape_cast %243 : vector<1x128x128xbf16> to vector<128x128xbf16>
    %cst_91 = arith.constant dense<0.000000e+00> : vector<8x128xf32>
    %245 = tpu.matmul %242, %244, %cst_91 {dimension_numbers = #tpu.dot_dimension_numbers<[1], [0], [0], [1], [0, 0, 1, 1], [], []>} : vector<8x128xbf16>, vector<128x128xbf16>, vector<8x128xf32> -> vector<8x128xf32>
    %c1_92 = arith.constant 1 : index
    %c0_93 = arith.constant 0 : index
    %c0_94 = arith.constant 0 : index
    %246 = vector.load %arg7[%c1_92, %c0_93, %c0_94] : memref<2x1x128xf32, #tpu.memory_space<vmem>>, vector<1x1x128xf32>
    %247 = vector.shape_cast %246 : vector<1x1x128xf32> to vector<1x128xf32>
    %248 = vector.broadcast %247 : vector<1x128xf32> to vector<8x128xf32>
    %249 = arith.addf %245, %248 : vector<8x128xf32>
    %250 = vector.shape_cast %241 : vector<8x8x128xf32> to vector<64x128xf32>
    %251 = arith.truncf %250 : vector<64x128xf32> to vector<64x128xbf16>
    %c1_95 = arith.constant 1 : index
    %c0_96 = arith.constant 0 : index
    %c0_97 = arith.constant 0 : index
    %252 = vector.load %arg8[%c1_95, %c0_96, %c0_97] : memref<2x128x256xbf16, #tpu.memory_space<vmem>>, vector<1x128x256xbf16>
    %253 = vector.shape_cast %252 : vector<1x128x256xbf16> to vector<128x256xbf16>
    %cst_98 = arith.constant dense<0.000000e+00> : vector<64x256xf32>
    %254 = tpu.matmul %251, %253, %cst_98 {dimension_numbers = #tpu.dot_dimension_numbers<[1], [0], [0], [1], [0, 0, 1, 1], [], []>} : vector<64x128xbf16>, vector<128x256xbf16>, vector<64x256xf32> -> vector<64x256xf32>
    %c1_99 = arith.constant 1 : index
    %c0_100 = arith.constant 0 : index
    %c0_101 = arith.constant 0 : index
    %255 = vector.load %arg9[%c1_99, %c0_100, %c0_101] : memref<2x1x256xf32, #tpu.memory_space<vmem>>, vector<1x1x256xf32>
    %256 = vector.shape_cast %255 : vector<1x1x256xf32> to vector<1x256xf32>
    %257 = vector.shape_cast %256 : vector<1x256xf32> to vector<256xf32>
    %258 = vector.shape_cast %257 : vector<256xf32> to vector<1x256xf32>
    %259 = vector.broadcast %258 : vector<1x256xf32> to vector<64x256xf32>
    %260 = arith.addf %254, %259 : vector<64x256xf32>
    %261 = vector.shape_cast %260 : vector<64x256xf32> to vector<8x8x256xf32>
    %262 = vector.extract_strided_slice %261 {offsets = [0, 0, 0], sizes = [8, 8, 128], strides = [1, 1, 1]} : vector<8x8x256xf32> to vector<8x8x128xf32>
    %263 = vector.extract_strided_slice %261 {offsets = [0, 0, 128], sizes = [8, 8, 128], strides = [1, 1, 1]} : vector<8x8x256xf32> to vector<8x8x128xf32>
    %264 = vector.shape_cast %249 : vector<8x128xf32> to vector<8x1x128xf32>
    %265 = vector.broadcast %264 : vector<8x1x128xf32> to vector<8x8x128xf32>
    %266 = arith.mulf %265, %262 : vector<8x8x128xf32>
    %cst_102 = arith.constant dense<0.000000e+00> : vector<8x8xf32>
    %267 = vector.multi_reduction <add>, %266, %cst_102 [2] : vector<8x8x128xf32> to vector<8x8xf32>
    %cst_103 = arith.constant 0.176776692 : f32
    %268 = vector.broadcast %cst_103 : f32 to vector<8x8xf32>
    %269 = arith.mulf %267, %268 : vector<8x8xf32>
    %270 = arith.addf %269, %6 : vector<8x8xf32>
    %cst_104 = arith.constant dense<0xFF800000> : vector<8xf32>
    %271 = vector.multi_reduction <maximumf>, %270, %cst_104 [1] : vector<8x8xf32> to vector<8xf32>
    %272 = vector.shape_cast %271 : vector<8xf32> to vector<8x1xf32>
    %273 = vector.broadcast %272 : vector<8x1xf32> to vector<8x8xf32>
    %274 = arith.subf %270, %273 : vector<8x8xf32>
    %275 = math.exp %274 : vector<8x8xf32>
    %cst_105 = arith.constant dense<0.000000e+00> : vector<8xf32>
    %276 = vector.multi_reduction <add>, %275, %cst_105 [1] : vector<8x8xf32> to vector<8xf32>
    %277 = vector.shape_cast %276 : vector<8xf32> to vector<8x1xf32>
    %278 = tpu.reciprocal %277 {approx = true} : vector<8x1xf32> -> vector<8x1xf32>
    %279 = vector.broadcast %278 : vector<8x1xf32> to vector<8x8xf32>
    %280 = arith.mulf %275, %279 : vector<8x8xf32>
    %281 = vector.shape_cast %280 : vector<8x8xf32> to vector<8x8x1xf32>
    %282 = vector.broadcast %281 : vector<8x8x1xf32> to vector<8x8x128xf32>
    %283 = arith.mulf %282, %263 : vector<8x8x128xf32>
    %cst_106 = arith.constant dense<0.000000e+00> : vector<8x128xf32>
    %284 = vector.multi_reduction <add>, %283, %cst_106 [1] : vector<8x8x128xf32> to vector<8x128xf32>
    %285 = vector.extract_strided_slice %188 {offsets = [3, 0], sizes = [1, 128], strides = [1, 1]} : vector<4x128xf32> to vector<1x128xf32>
    %286 = vector.extract_strided_slice %190 {offsets = [3, 0], sizes = [1, 128], strides = [1, 1]} : vector<4x128xf32> to vector<1x128xf32>
    %cst_107 = arith.constant dense<0.000000e+00> : vector<8xf32>
    %287 = vector.multi_reduction <add>, %284, %cst_107 [1] : vector<8x128xf32> to vector<8xf32>
    %288 = vector.shape_cast %287 : vector<8xf32> to vector<8x1xf32>
    %cst_108 = arith.constant 3.125000e-02 : f32
    %289 = vector.broadcast %cst_108 : f32 to vector<8x1xf32>
    %290 = arith.mulf %288, %289 : vector<8x1xf32>
    %291 = vector.broadcast %290 : vector<8x1xf32> to vector<8x128xf32>
    %292 = arith.subf %284, %291 : vector<8x128xf32>
    %293 = vector.broadcast %4 : vector<1x128xf32> to vector<8x128xf32>
    %294 = arith.mulf %292, %293 : vector<8x128xf32>
    %295 = arith.mulf %294, %294 : vector<8x128xf32>
    %cst_109 = arith.constant dense<0.000000e+00> : vector<8xf32>
    %296 = vector.multi_reduction <add>, %295, %cst_109 [1] : vector<8x128xf32> to vector<8xf32>
    %297 = vector.shape_cast %296 : vector<8xf32> to vector<8x1xf32>
    %cst_110 = arith.constant 3.125000e-02 : f32
    %298 = vector.broadcast %cst_110 : f32 to vector<8x1xf32>
    %299 = arith.mulf %297, %298 : vector<8x1xf32>
    %cst_111 = arith.constant 9.99999974E-6 : f32
    %300 = vector.broadcast %cst_111 : f32 to vector<8x1xf32>
    %301 = arith.addf %299, %300 : vector<8x1xf32>
    %302 = math.rsqrt %301 : vector<8x1xf32>
    %303 = vector.broadcast %302 : vector<8x1xf32> to vector<8x128xf32>
    %304 = arith.mulf %294, %303 : vector<8x128xf32>
    %305 = vector.broadcast %285 : vector<1x128xf32> to vector<8x128xf32>
    %306 = arith.mulf %304, %305 : vector<8x128xf32>
    %307 = vector.broadcast %286 : vector<1x128xf32> to vector<8x128xf32>
    %308 = arith.addf %306, %307 : vector<8x128xf32>
    %309 = arith.truncf %308 : vector<8x128xf32> to vector<8x128xbf16>
    %c1_112 = arith.constant 1 : index
    %c0_113 = arith.constant 0 : index
    %c0_114 = arith.constant 0 : index
    %310 = vector.load %arg10[%c1_112, %c0_113, %c0_114] : memref<2x128x128xbf16, #tpu.memory_space<vmem>>, vector<1x128x128xbf16>
    %311 = vector.shape_cast %310 : vector<1x128x128xbf16> to vector<128x128xbf16>
    %cst_115 = arith.constant dense<0.000000e+00> : vector<8x128xf32>
    %312 = tpu.matmul %309, %311, %cst_115 {dimension_numbers = #tpu.dot_dimension_numbers<[1], [0], [0], [1], [0, 0, 1, 1], [], []>} : vector<8x128xbf16>, vector<128x128xbf16>, vector<8x128xf32> -> vector<8x128xf32>
    %c1_116 = arith.constant 1 : index
    %c0_117 = arith.constant 0 : index
    %c0_118 = arith.constant 0 : index
    %313 = vector.load %arg11[%c1_116, %c0_117, %c0_118] : memref<2x1x128xf32, #tpu.memory_space<vmem>>, vector<1x1x128xf32>
    %314 = vector.shape_cast %313 : vector<1x1x128xf32> to vector<1x128xf32>
    %315 = vector.broadcast %314 : vector<1x128xf32> to vector<8x128xf32>
    %316 = arith.addf %312, %315 : vector<8x128xf32>
    %317 = arith.addf %186, %316 : vector<8x128xf32>
    %318 = vector.extract_strided_slice %188 {offsets = [2, 0], sizes = [1, 128], strides = [1, 1]} : vector<4x128xf32> to vector<1x128xf32>
    %319 = vector.extract_strided_slice %190 {offsets = [2, 0], sizes = [1, 128], strides = [1, 1]} : vector<4x128xf32> to vector<1x128xf32>
    %cst_119 = arith.constant dense<0.000000e+00> : vector<8xf32>
    %320 = vector.multi_reduction <add>, %317, %cst_119 [1] : vector<8x128xf32> to vector<8xf32>
    %321 = vector.shape_cast %320 : vector<8xf32> to vector<8x1xf32>
    %cst_120 = arith.constant 3.125000e-02 : f32
    %322 = vector.broadcast %cst_120 : f32 to vector<8x1xf32>
    %323 = arith.mulf %321, %322 : vector<8x1xf32>
    %324 = vector.broadcast %323 : vector<8x1xf32> to vector<8x128xf32>
    %325 = arith.subf %317, %324 : vector<8x128xf32>
    %326 = vector.broadcast %4 : vector<1x128xf32> to vector<8x128xf32>
    %327 = arith.mulf %325, %326 : vector<8x128xf32>
    %328 = arith.mulf %327, %327 : vector<8x128xf32>
    %cst_121 = arith.constant dense<0.000000e+00> : vector<8xf32>
    %329 = vector.multi_reduction <add>, %328, %cst_121 [1] : vector<8x128xf32> to vector<8xf32>
    %330 = vector.shape_cast %329 : vector<8xf32> to vector<8x1xf32>
    %cst_122 = arith.constant 3.125000e-02 : f32
    %331 = vector.broadcast %cst_122 : f32 to vector<8x1xf32>
    %332 = arith.mulf %330, %331 : vector<8x1xf32>
    %cst_123 = arith.constant 9.99999974E-6 : f32
    %333 = vector.broadcast %cst_123 : f32 to vector<8x1xf32>
    %334 = arith.addf %332, %333 : vector<8x1xf32>
    %335 = math.rsqrt %334 : vector<8x1xf32>
    %336 = vector.broadcast %335 : vector<8x1xf32> to vector<8x128xf32>
    %337 = arith.mulf %327, %336 : vector<8x128xf32>
    %338 = vector.broadcast %318 : vector<1x128xf32> to vector<8x128xf32>
    %339 = arith.mulf %337, %338 : vector<8x128xf32>
    %340 = vector.broadcast %319 : vector<1x128xf32> to vector<8x128xf32>
    %341 = arith.addf %339, %340 : vector<8x128xf32>
    %342 = arith.truncf %341 : vector<8x128xf32> to vector<8x128xbf16>
    %c1_124 = arith.constant 1 : index
    %c0_125 = arith.constant 0 : index
    %c0_126 = arith.constant 0 : index
    %343 = vector.load %arg12[%c1_124, %c0_125, %c0_126] : memref<2x128x128xbf16, #tpu.memory_space<vmem>>, vector<1x128x128xbf16>
    %344 = vector.shape_cast %343 : vector<1x128x128xbf16> to vector<128x128xbf16>
    %cst_127 = arith.constant dense<0.000000e+00> : vector<8x128xf32>
    %345 = tpu.matmul %342, %344, %cst_127 {dimension_numbers = #tpu.dot_dimension_numbers<[1], [0], [0], [1], [0, 0, 1, 1], [], []>} : vector<8x128xbf16>, vector<128x128xbf16>, vector<8x128xf32> -> vector<8x128xf32>
    %c1_128 = arith.constant 1 : index
    %c0_129 = arith.constant 0 : index
    %c0_130 = arith.constant 0 : index
    %346 = vector.load %arg13[%c1_128, %c0_129, %c0_130] : memref<2x1x128xf32, #tpu.memory_space<vmem>>, vector<1x1x128xf32>
    %347 = vector.shape_cast %346 : vector<1x1x128xf32> to vector<1x128xf32>
    %348 = vector.broadcast %347 : vector<1x128xf32> to vector<8x128xf32>
    %349 = arith.addf %345, %348 : vector<8x128xf32>
    %cst_131 = arith.constant 0.000000e+00 : f32
    %350 = vector.broadcast %cst_131 : f32 to vector<8x128xf32>
    %351 = arith.cmpf ogt, %349, %350 : vector<8x128xf32>
    %cst_132 = arith.constant 1.000000e-01 : f32
    %352 = vector.broadcast %cst_132 : f32 to vector<8x128xf32>
    %353 = arith.mulf %352, %349 : vector<8x128xf32>
    %354 = arith.select %351, %349, %353 : vector<8x128xi1>, vector<8x128xf32>
    %355 = arith.truncf %354 : vector<8x128xf32> to vector<8x128xbf16>
    %c1_133 = arith.constant 1 : index
    %c0_134 = arith.constant 0 : index
    %c0_135 = arith.constant 0 : index
    %356 = vector.load %arg14[%c1_133, %c0_134, %c0_135] : memref<2x128x128xbf16, #tpu.memory_space<vmem>>, vector<1x128x128xbf16>
    %357 = vector.shape_cast %356 : vector<1x128x128xbf16> to vector<128x128xbf16>
    %cst_136 = arith.constant dense<0.000000e+00> : vector<8x128xf32>
    %358 = tpu.matmul %355, %357, %cst_136 {dimension_numbers = #tpu.dot_dimension_numbers<[1], [0], [0], [1], [0, 0, 1, 1], [], []>} : vector<8x128xbf16>, vector<128x128xbf16>, vector<8x128xf32> -> vector<8x128xf32>
    %c1_137 = arith.constant 1 : index
    %c0_138 = arith.constant 0 : index
    %c0_139 = arith.constant 0 : index
    %359 = vector.load %arg15[%c1_137, %c0_138, %c0_139] : memref<2x1x128xf32, #tpu.memory_space<vmem>>, vector<1x1x128xf32>
    %360 = vector.shape_cast %359 : vector<1x1x128xf32> to vector<1x128xf32>
    %361 = vector.broadcast %360 : vector<1x128xf32> to vector<8x128xf32>
    %362 = arith.addf %358, %361 : vector<8x128xf32>
    %363 = arith.addf %317, %362 : vector<8x128xf32>
    %c0_140 = arith.constant 0 : index
    %c0_141 = arith.constant 0 : index
    %364 = vector.load %arg16[%c0_140, %c0_141] : memref<1x128xf32, #tpu.memory_space<vmem>>, vector<1x128xf32>
    %c0_142 = arith.constant 0 : index
    %c0_143 = arith.constant 0 : index
    %365 = vector.load %arg17[%c0_142, %c0_143] : memref<1x128xf32, #tpu.memory_space<vmem>>, vector<1x128xf32>
    %cst_144 = arith.constant dense<0.000000e+00> : vector<8xf32>
    %366 = vector.multi_reduction <add>, %363, %cst_144 [1] : vector<8x128xf32> to vector<8xf32>
    %367 = vector.shape_cast %366 : vector<8xf32> to vector<8x1xf32>
    %cst_145 = arith.constant 3.125000e-02 : f32
    %368 = vector.broadcast %cst_145 : f32 to vector<8x1xf32>
    %369 = arith.mulf %367, %368 : vector<8x1xf32>
    %370 = vector.broadcast %369 : vector<8x1xf32> to vector<8x128xf32>
    %371 = arith.subf %363, %370 : vector<8x128xf32>
    %372 = vector.broadcast %4 : vector<1x128xf32> to vector<8x128xf32>
    %373 = arith.mulf %371, %372 : vector<8x128xf32>
    %374 = arith.mulf %373, %373 : vector<8x128xf32>
    %cst_146 = arith.constant dense<0.000000e+00> : vector<8xf32>
    %375 = vector.multi_reduction <add>, %374, %cst_146 [1] : vector<8x128xf32> to vector<8xf32>
    %376 = vector.shape_cast %375 : vector<8xf32> to vector<8x1xf32>
    %cst_147 = arith.constant 3.125000e-02 : f32
    %377 = vector.broadcast %cst_147 : f32 to vector<8x1xf32>
    %378 = arith.mulf %376, %377 : vector<8x1xf32>
    %cst_148 = arith.constant 9.99999974E-6 : f32
    %379 = vector.broadcast %cst_148 : f32 to vector<8x1xf32>
    %380 = arith.addf %378, %379 : vector<8x1xf32>
    %381 = math.rsqrt %380 : vector<8x1xf32>
    %382 = vector.broadcast %381 : vector<8x1xf32> to vector<8x128xf32>
    %383 = arith.mulf %373, %382 : vector<8x128xf32>
    %384 = vector.broadcast %364 : vector<1x128xf32> to vector<8x128xf32>
    %385 = arith.mulf %383, %384 : vector<8x128xf32>
    %386 = vector.broadcast %365 : vector<1x128xf32> to vector<8x128xf32>
    %387 = arith.addf %385, %386 : vector<8x128xf32>
    %388 = arith.truncf %387 : vector<8x128xf32> to vector<8x128xbf16>
    %c0_149 = arith.constant 0 : index
    %c0_150 = arith.constant 0 : index
    %389 = vector.load %arg18[%c0_149, %c0_150] : memref<128x128xbf16, #tpu.memory_space<vmem>>, vector<128x128xbf16>
    %cst_151 = arith.constant dense<0.000000e+00> : vector<8x128xf32>
    %390 = tpu.matmul %388, %389, %cst_151 {dimension_numbers = #tpu.dot_dimension_numbers<[1], [0], [0], [1], [0, 0, 1, 1], [], []>} : vector<8x128xbf16>, vector<128x128xbf16>, vector<8x128xf32> -> vector<8x128xf32>
    %c0_152 = arith.constant 0 : index
    %c0_153 = arith.constant 0 : index
    %391 = vector.load %arg19[%c0_152, %c0_153] : memref<1x128xf32, #tpu.memory_space<vmem>>, vector<1x128xf32>
    %392 = vector.broadcast %391 : vector<1x128xf32> to vector<8x128xf32>
    %393 = arith.addf %390, %392 : vector<8x128xf32>
    %c0_154 = arith.constant 0 : index
    %c0_155 = arith.constant 0 : index
    %394 = vector.load %arg20[%c0_154, %c0_155] : memref<8x128xf32, #tpu.memory_space<vmem>>, vector<8x128xf32>
    tpu.vector_store %arg20[%c0_154, %c0_155], %393 {strides = array<i32>} : memref<8x128xf32, #tpu.memory_space<vmem>>, vector<8x128xf32>,
    return
  }
  func.func @transform_0(%arg0: i32) -> (i32, i32, i32) {
    %c0_i32 = arith.constant 0 : i32
    %c0_i32_0 = arith.constant 0 : i32
    %c0_i32_1 = arith.constant 0 : i32
    return %arg0, %c0_i32, %c0_i32_0 : i32, i32, i32
  }
  func.func @transform_1(%arg0: i32) -> (i32, i32) {
    %c0_i32 = arith.constant 0 : i32
    %c0_i32_0 = arith.constant 0 : i32
    return %arg0, %c0_i32 : i32, i32
  }
  func.func @transform_2(%arg0: i32) -> (i32, i32) {
    %c0_i32 = arith.constant 0 : i32
    %c0_i32_0 = arith.constant 0 : i32
    %c0_i32_1 = arith.constant 0 : i32
    return %c0_i32, %c0_i32_0 : i32, i32
  }
  func.func @transform_3(%arg0: i32) -> (i32, i32, i32) {
    %c0_i32 = arith.constant 0 : i32
    %c0_i32_0 = arith.constant 0 : i32
    %c0_i32_1 = arith.constant 0 : i32
    %c0_i32_2 = arith.constant 0 : i32
    return %c0_i32, %c0_i32_0, %c0_i32_1 : i32, i32, i32
  }
  func.func @transform_4(%arg0: i32) -> (i32, i32, i32) {
    %c0_i32 = arith.constant 0 : i32
    %c0_i32_0 = arith.constant 0 : i32
    %c0_i32_1 = arith.constant 0 : i32
    %c0_i32_2 = arith.constant 0 : i32
    return %c0_i32, %c0_i32_0, %c0_i32_1 : i32, i32, i32
  }
  func.func @transform_5(%arg0: i32) -> (i32, i32, i32) {
    %c0_i32 = arith.constant 0 : i32
    %c0_i32_0 = arith.constant 0 : i32
    %c0_i32_1 = arith.constant 0 : i32
    %c0_i32_2 = arith.constant 0 : i32
    return %c0_i32, %c0_i32_0, %c0_i32_1 : i32, i32, i32
  }
  func.func @transform_6(%arg0: i32) -> (i32, i32, i32) {
    %c0_i32 = arith.constant 0 : i32
    %c0_i32_0 = arith.constant 0 : i32
    %c0_i32_1 = arith.constant 0 : i32
    %c0_i32_2 = arith.constant 0 : i32
    return %c0_i32, %c0_i32_0, %c0_i32_1 : i32, i32, i32
  }
  func.func @transform_7(%arg0: i32) -> (i32, i32, i32) {
    %c0_i32 = arith.constant 0 : i32
    %c0_i32_0 = arith.constant 0 : i32
    %c0_i32_1 = arith.constant 0 : i32
    %c0_i32_2 = arith.constant 0 : i32
    return %c0_i32, %c0_i32_0, %c0_i32_1 : i32, i32, i32
  }
  func.func @transform_8(%arg0: i32) -> (i32, i32, i32) {
    %c0_i32 = arith.constant 0 : i32
    %c0_i32_0 = arith.constant 0 : i32
    %c0_i32_1 = arith.constant 0 : i32
    %c0_i32_2 = arith.constant 0 : i32
    return %c0_i32, %c0_i32_0, %c0_i32_1 : i32, i32, i32
  }
  func.func @transform_9(%arg0: i32) -> (i32, i32, i32) {
    %c0_i32 = arith.constant 0 : i32
    %c0_i32_0 = arith.constant 0 : i32
    %c0_i32_1 = arith.constant 0 : i32
    %c0_i32_2 = arith.constant 0 : i32
    return %c0_i32, %c0_i32_0, %c0_i32_1 : i32, i32, i32
  }
  func.func @transform_10(%arg0: i32) -> (i32, i32, i32) {
    %c0_i32 = arith.constant 0 : i32
    %c0_i32_0 = arith.constant 0 : i32
    %c0_i32_1 = arith.constant 0 : i32
    %c0_i32_2 = arith.constant 0 : i32
    return %c0_i32, %c0_i32_0, %c0_i32_1 : i32, i32, i32
  }
  func.func @transform_11(%arg0: i32) -> (i32, i32, i32) {
    %c0_i32 = arith.constant 0 : i32
    %c0_i32_0 = arith.constant 0 : i32
    %c0_i32_1 = arith.constant 0 : i32
    %c0_i32_2 = arith.constant 0 : i32
    return %c0_i32, %c0_i32_0, %c0_i32_1 : i32, i32, i32
  }
  func.func @transform_12(%arg0: i32) -> (i32, i32, i32) {
    %c0_i32 = arith.constant 0 : i32
    %c0_i32_0 = arith.constant 0 : i32
    %c0_i32_1 = arith.constant 0 : i32
    %c0_i32_2 = arith.constant 0 : i32
    return %c0_i32, %c0_i32_0, %c0_i32_1 : i32, i32, i32
  }
  func.func @transform_13(%arg0: i32) -> (i32, i32, i32) {
    %c0_i32 = arith.constant 0 : i32
    %c0_i32_0 = arith.constant 0 : i32
    %c0_i32_1 = arith.constant 0 : i32
    %c0_i32_2 = arith.constant 0 : i32
    return %c0_i32, %c0_i32_0, %c0_i32_1 : i32, i32, i32
  }
  func.func @transform_14(%arg0: i32) -> (i32, i32, i32) {
    %c0_i32 = arith.constant 0 : i32
    %c0_i32_0 = arith.constant 0 : i32
    %c0_i32_1 = arith.constant 0 : i32
    %c0_i32_2 = arith.constant 0 : i32
    return %c0_i32, %c0_i32_0, %c0_i32_1 : i32, i32, i32
  }
  func.func @transform_15(%arg0: i32) -> (i32, i32) {
    %c0_i32 = arith.constant 0 : i32
    %c0_i32_0 = arith.constant 0 : i32
    %c0_i32_1 = arith.constant 0 : i32
    return %c0_i32, %c0_i32_0 : i32, i32
  }
  func.func @transform_16(%arg0: i32) -> (i32, i32) {
    %c0_i32 = arith.constant 0 : i32
    %c0_i32_0 = arith.constant 0 : i32
    %c0_i32_1 = arith.constant 0 : i32
    return %c0_i32, %c0_i32_0 : i32, i32
  }
  func.func @transform_17(%arg0: i32) -> (i32, i32) {
    %c0_i32 = arith.constant 0 : i32
    %c0_i32_0 = arith.constant 0 : i32
    %c0_i32_1 = arith.constant 0 : i32
    return %c0_i32, %c0_i32_0 : i32, i32
  }
  func.func @transform_18(%arg0: i32) -> (i32, i32) {
    %c0_i32 = arith.constant 0 : i32
    %c0_i32_0 = arith.constant 0 : i32
    %c0_i32_1 = arith.constant 0 : i32
    return %c0_i32, %c0_i32_0 : i32, i32
  }
  func.func @transform_19(%arg0: i32) -> (i32, i32) {
    %c0_i32 = arith.constant 0 : i32
    %c0_i32_0 = arith.constant 0 : i32
    return %arg0, %c0_i32 : i32, i32
  }
}

</mosaic_0001>

<llo_original>
// kernel: class_attention_forward.1
$region0: #{class_attention_forward.1}
  #allocation0 [shape = 'u32[]', space=smem, size = 0x4, offset = 0x4, fixed_abs, tag = 'smem constant byte address 0x4 - core index']
  #allocation1 [shape = 'u32[144,128]{1,0:T(1,128)}', space=vmem, size = 0x12000, scoped, tag = 'internal scratch']
  %s0 = inlined_call_operand.vmem [shape: f32[8,8,128], index: 0, kind: input, shape index: {}]
  %s1 = inlined_call_operand.vmem [shape: f32[8,8], index: 1, kind: input, shape index: {}]
  %s2 = inlined_call_operand.vmem [shape: f32[1,128], index: 2, kind: input, shape index: {}]
  %s3 = inlined_call_operand.vmem [shape: f32[2,4,128], index: 3, kind: input, shape index: {}]
  %s4 = inlined_call_operand.vmem [shape: f32[2,4,128], index: 4, kind: input, shape index: {}]
  %s5 = inlined_call_operand.vmem [shape: bf16[2,128,128], index: 5, kind: input, shape index: {}]
  %s6 = inlined_call_operand.vmem [shape: f32[2,1,128], index: 6, kind: input, shape index: {}]
  %s7 = inlined_call_operand.vmem [shape: bf16[2,128,256], index: 7, kind: input, shape index: {}]
  %s8 = inlined_call_operand.vmem [shape: f32[2,1,256], index: 8, kind: input, shape index: {}]
  %s9 = inlined_call_operand.vmem [shape: bf16[2,128,128], index: 9, kind: input, shape index: {}]
  %s10 = inlined_call_operand.vmem [shape: f32[2,1,128], index: 10, kind: input, shape index: {}]
  %s11 = inlined_call_operand.vmem [shape: bf16[2,128,128], index: 11, kind: input, shape index: {}]
  %s12 = inlined_call_operand.vmem [shape: f32[2,1,128], index: 12, kind: input, shape index: {}]
  %s13 = inlined_call_operand.vmem [shape: bf16[2,128,128], index: 13, kind: input, shape index: {}]
  %s14 = inlined_call_operand.vmem [shape: f32[2,1,128], index: 14, kind: input, shape index: {}]
  %s15 = inlined_call_operand.vmem [shape: f32[1,128], index: 15, kind: input, shape index: {}]
  %s16 = inlined_call_operand.vmem [shape: f32[1,128], index: 16, kind: input, shape index: {}]
  %s17 = inlined_call_operand.vmem [shape: bf16[128,128], index: 17, kind: input, shape index: {}]
  %s18 = inlined_call_operand.vmem [shape: f32[1,128], index: 18, kind: input, shape index: {}]
  %s19 = inlined_call_operand.vmem [shape: f32[8,128], index: 19, kind: output, shape index: {}]
  %s20 = sld [smem:[#allocation0]]
  $region86: #{class_attention_forward.1} parent=0
    _
  %s22 = ssub.s32 1, %s20
  %s23 = scalar_select 0, %s22, %s20
  // Predicated region
  $region2: #{class_attention_forward.1} parent=0 // pred_check
    _
  $region3: #{class_attention_forward.1} parent=0 // pred_check_branch
    %25 = sbr.rel (0) target = $region5
  $region4: #{class_attention_forward.1} parent=0 // pred_region
    _
  $region5: #{class_attention_forward.1} parent=0 // pred_fallthru
    _
  // Predicated region
  $region6: #{class_attention_forward.1} parent=0 // pred_check
    _
  $region7: #{class_attention_forward.1} parent=0 // pred_check_branch
    %27 = sbr.rel (0) target = $region9
  $region8: #{class_attention_forward.1} parent=0 // pred_region
    _
  $region9: #{class_attention_forward.1} parent=0 // pred_fallthru
    _
  // Predicated region
  $region10: #{class_attention_forward.1} parent=0 // pred_check
    _
  $region11: #{class_attention_forward.1} parent=0 // pred_check_branch
    %29 = sbr.rel (0) target = $region13
  $region12: #{class_attention_forward.1} parent=0 // pred_region
    _
  $region13: #{class_attention_forward.1} parent=0 // pred_fallthru
    _
  // Predicated region
  $region14: #{class_attention_forward.1} parent=0 // pred_check
    _
  $region15: #{class_attention_forward.1} parent=0 // pred_check_branch
    %31 = sbr.rel (0) target = $region17
  $region16: #{class_attention_forward.1} parent=0 // pred_region
    _
  $region17: #{class_attention_forward.1} parent=0 // pred_fallthru
    _
  // Predicated region
  $region18: #{class_attention_forward.1} parent=0 // pred_check
    _
  $region19: #{class_attention_forward.1} parent=0 // pred_check_branch
    %33 = sbr.rel (0) target = $region21
  $region20: #{class_attention_forward.1} parent=0 // pred_region
    _
  $region21: #{class_attention_forward.1} parent=0 // pred_fallthru
    _
  // Predicated region
  $region22: #{class_attention_forward.1} parent=0 // pred_check
    _
  $region23: #{class_attention_forward.1} parent=0 // pred_check_branch
    %35 = sbr.rel (0) target = $region25
  $region24: #{class_attention_forward.1} parent=0 // pred_region
    _
  $region25: #{class_attention_forward.1} parent=0 // pred_fallthru
    _
  // Predicated region
  $region26: #{class_attention_forward.1} parent=0 // pred_check
    _
  $region27: #{class_attention_forward.1} parent=0 // pred_check_branch
    %37 = sbr.rel (0) target = $region29
  $region28: #{class_attention_forward.1} parent=0 // pred_region
    _
  $region29: #{class_attention_forward.1} parent=0 // pred_fallthru
    _
  // Predicated region
  $region30: #{class_attention_forward.1} parent=0 // pred_check
    _
  $region31: #{class_attention_forward.1} parent=0 // pred_check_branch
    %39 = sbr.rel (0) target = $region33
  $region32: #{class_attention_forward.1} parent=0 // pred_region
    _
  $region33: #{class_attention_forward.1} parent=0 // pred_fallthru
    _
  // Predicated region
  $region34: #{class_attention_forward.1} parent=0 // pred_check
    _
  $region35: #{class_attention_forward.1} parent=0 // pred_check_branch
    %41 = sbr.rel (0) target = $region37
  $region36: #{class_attention_forward.1} parent=0 // pred_region
    _
  $region37: #{class_attention_forward.1} parent=0 // pred_fallthru
    _
  // Predicated region
  $region38: #{class_attention_forward.1} parent=0 // pred_check
    _
  $region39: #{class_attention_forward.1} parent=0 // pred_check_branch
    %43 = sbr.rel (0) target = $region41
  $region40: #{class_attention_forward.1} parent=0 // pred_region
    _
  $region41: #{class_attention_forward.1} parent=0 // pred_fallthru
    _
  // Predicated region
  $region42: #{class_attention_forward.1} parent=0 // pred_check
    _
  $region43: #{class_attention_forward.1} parent=0 // pred_check_branch
    %45 = sbr.rel (0) target = $region45
  $region44: #{class_attention_forward.1} parent=0 // pred_region
    _
  $region45: #{class_attention_forward.1} parent=0 // pred_fallthru
    _
  // Predicated region
  $region46: #{class_attention_forward.1} parent=0 // pred_check
    _
  $region47: #{class_attention_forward.1} parent=0 // pred_check_branch
    %47 = sbr.rel (0) target = $region49
  $region48: #{class_attention_forward.1} parent=0 // pred_region
    _
  $region49: #{class_attention_forward.1} parent=0 // pred_fallthru
    _
  // Predicated region
  $region50: #{class_attention_forward.1} parent=0 // pred_check
    _
  $region51: #{class_attention_forward.1} parent=0 // pred_check_branch
    %49 = sbr.rel (0) target = $region53
  $region52: #{class_attention_forward.1} parent=0 // pred_region
    _
  $region53: #{class_attention_forward.1} parent=0 // pred_fallthru
    _
  // Predicated region
  $region54: #{class_attention_forward.1} parent=0 // pred_check
    _
  $region55: #{class_attention_forward.1} parent=0 // pred_check_branch
    %51 = sbr.rel (0) target = $region57
  $region56: #{class_attention_forward.1} parent=0 // pred_region
    _
  $region57: #{class_attention_forward.1} parent=0 // pred_fallthru
    _
  // Predicated region
  $region58: #{class_attention_forward.1} parent=0 // pred_check
    _
  $region59: #{class_attention_forward.1} parent=0 // pred_check_branch
    %53 = sbr.rel (0) target = $region61
  $region60: #{class_attention_forward.1} parent=0 // pred_region
    _
  $region61: #{class_attention_forward.1} parent=0 // pred_fallthru
    _
  // Predicated region
  $region62: #{class_attention_forward.1} parent=0 // pred_check
    _
  $region63: #{class_attention_forward.1} parent=0 // pred_check_branch
    %55 = sbr.rel (0) target = $region65
  $region64: #{class_attention_forward.1} parent=0 // pred_region
    _
  $region65: #{class_attention_forward.1} parent=0 // pred_fallthru
    _
  // Predicated region
  $region66: #{class_attention_forward.1} parent=0 // pred_check
    _
  $region67: #{class_attention_forward.1} parent=0 // pred_check_branch
    %57 = sbr.rel (0) target = $region69
  $region68: #{class_attention_forward.1} parent=0 // pred_region
    _
  $region69: #{class_attention_forward.1} parent=0 // pred_fallthru
    _
  // Predicated region
  $region70: #{class_attention_forward.1} parent=0 // pred_check
    _
  $region71: #{class_attention_forward.1} parent=0 // pred_check_branch
    %59 = sbr.rel (0) target = $region73
  $region72: #{class_attention_forward.1} parent=0 // pred_region
    _
  $region73: #{class_attention_forward.1} parent=0 // pred_fallthru
    _
  // Predicated region
  $region74: #{class_attention_forward.1} parent=0 // pred_check
    _
  $region75: #{class_attention_forward.1} parent=0 // pred_check_branch
    %61 = sbr.rel (0) target = $region77
  $region76: #{class_attention_forward.1} parent=0 // pred_region
    _
  $region77: #{class_attention_forward.1} parent=0 // pred_fallthru
    _
  %v63 = vlaneseq
  %v64 = vand.u32 %v63, 127
  %vm65 = vcmp.lt.s32.totalorder %v64, 32
  %v66 = vsel %vm65, 1, 0
  %v67 = vcvt.s32.f32 %v66
  %v68 = vld [vmem:[%s0] sm:$0xff]
  %v69 = vld [vmem:[%s0 + $0x8] sm:$0xff]
  %v70 = vld [vmem:[%s0 + $0x10] sm:$0xff]
  %v71 = vld [vmem:[%s0 + $0x18] sm:$0xff]
  %v72 = vld [vmem:[%s0 + $0x20] sm:$0xff]
  %v73 = vld [vmem:[%s0 + $0x28] sm:$0xff]
  %v74 = vld [vmem:[%s0 + $0x30] sm:$0xff]
  %v75 = vld [vmem:[%s0 + $0x38] sm:$0xff]
  %v76 = vld [vmem:[%s1] sm:$0xff]
  %v77 = vld [vmem:[%s2] sm:$0x1]
  %v79 = vlaneseq
  %v80 = vshrl.u32 %v79, 7
  %v81 = vsub.s32 0, %v80
  %v82 = vrot.slane %v77, %v81
  %v84 = vld [vmem:[%s3] sm:$0xf]
  %v85 = vld [vmem:[%s4] sm:$0xf]
  %86 = vadd.xlane.f32.xlu0 %v82
  %v87 = vpop.xlane.xlu0 %86
  %v88 = vmul.f32 %v87, 0.03125
  %v89 = vsub.f32 %v82, %v88
  %v90 = vmul.f32 %v89, %v67
  %v91 = vmul.f32 %v90, %v90
  %92 = vadd.xlane.f32.xlu0 %v91
  %v93 = vpop.xlane.xlu0 %92
  %v94 = vmul.f32 %v93, 0.03125
  %v95 = vadd.f32 %v94, 1e-05
  %v96 = vrsqrt.pop %v95
  %v97 = vmul.f32 %v90, %v96
  %v98 = vlaneseq
  %v99 = vshrl.u32 %v98, 7
  %v100 = vsub.s32 1, %v99
  %v101 = vrot.slane %v84, %v100
  %v102 = vmul.f32 %v97, %v101
  %v103 = vlaneseq
  %v104 = vshrl.u32 %v103, 7
  %v105 = vsub.s32 1, %v104
  %v106 = vrot.slane %v85, %v105
  %v107 = vadd.f32 %v102, %v106
  %108 = vadd.xlane.f32.xlu0 %v68
  %v109 = vpop.xlane.xlu0 %108
  %110 = vadd.xlane.f32.xlu0 %v69
  %v111 = vpop.xlane.xlu0 %110
  %112 = vadd.xlane.f32.xlu0 %v70
  %v113 = vpop.xlane.xlu0 %112
  %114 = vadd.xlane.f32.xlu0 %v71
  %v115 = vpop.xlane.xlu0 %114
  %116 = vadd.xlane.f32.xlu0 %v72
  %v117 = vpop.xlane.xlu0 %116
  %118 = vadd.xlane.f32.xlu0 %v73
  %v119 = vpop.xlane.xlu0 %118
  %120 = vadd.xlane.f32.xlu0 %v74
  %v121 = vpop.xlane.xlu0 %120
  %122 = vadd.xlane.f32.xlu0 %v75
  %v123 = vpop.xlane.xlu0 %122
  %v124 = vmul.f32 %v109, 0.03125
  %v125 = vmul.f32 %v111, 0.03125
  %v126 = vmul.f32 %v113, 0.03125
  %v127 = vmul.f32 %v115, 0.03125
  %v128 = vmul.f32 %v117, 0.03125
  %v129 = vmul.f32 %v119, 0.03125
  %v130 = vmul.f32 %v121, 0.03125
  %v131 = vmul.f32 %v123, 0.03125
  %v132 = vsub.f32 %v68, %v124
  %v133 = vsub.f32 %v69, %v125
  %v134 = vsub.f32 %v70, %v126
  %v135 = vsub.f32 %v71, %v127
  %v136 = vsub.f32 %v72, %v128
  %v137 = vsub.f32 %v73, %v129
  %v138 = vsub.f32 %v74, %v130
  %v139 = vsub.f32 %v75, %v131
  %v140 = vmul.f32 %v132, %v67
  %v141 = vmul.f32 %v133, %v67
  %v142 = vmul.f32 %v134, %v67
  %v143 = vmul.f32 %v135, %v67
  %v144 = vmul.f32 %v136, %v67
  %v145 = vmul.f32 %v137, %v67
  %v146 = vmul.f32 %v138, %v67
  %v147 = vmul.f32 %v139, %v67
  %v148 = vmul.f32 %v140, %v140
  %v149 = vmul.f32 %v141, %v141
  %v150 = vmul.f32 %v142, %v142
  %v151 = vmul.f32 %v143, %v143
  %v152 = vmul.f32 %v144, %v144
  %v153 = vmul.f32 %v145, %v145
  %v154 = vmul.f32 %v146, %v146
  %v155 = vmul.f32 %v147, %v147
  %156 = vadd.xlane.f32.xlu0 %v148
  %v157 = vpop.xlane.xlu0 %156
  %158 = vadd.xlane.f32.xlu0 %v149
  %v159 = vpop.xlane.xlu0 %158
  %160 = vadd.xlane.f32.xlu0 %v150
  %v161 = vpop.xlane.xlu0 %160
  %162 = vadd.xlane.f32.xlu0 %v151
  %v163 = vpop.xlane.xlu0 %162
  %164 = vadd.xlane.f32.xlu0 %v152
  %v165 = vpop.xlane.xlu0 %164
  %166 = vadd.xlane.f32.xlu0 %v153
  %v167 = vpop.xlane.xlu0 %166
  %168 = vadd.xlane.f32.xlu0 %v154
  %v169 = vpop.xlane.xlu0 %168
  %170 = vadd.xlane.f32.xlu0 %v155
  %v171 = vpop.xlane.xlu0 %170
  %v172 = vmul.f32 %v157, 0.03125
  %v173 = vmul.f32 %v159, 0.03125
  %v174 = vmul.f32 %v161, 0.03125
  %v175 = vmul.f32 %v163, 0.03125
  %v176 = vmul.f32 %v165, 0.03125
  %v177 = vmul.f32 %v167, 0.03125
  %v178 = vmul.f32 %v169, 0.03125
  %v179 = vmul.f32 %v171, 0.03125
  %v180 = vadd.f32 %v172, 1e-05
  %v181 = vadd.f32 %v173, 1e-05
  %v182 = vadd.f32 %v174, 1e-05
  %v183 = vadd.f32 %v175, 1e-05
  %v184 = vadd.f32 %v176, 1e-05
  %v185 = vadd.f32 %v177, 1e-05
  %v186 = vadd.f32 %v178, 1e-05
  %v187 = vadd.f32 %v179, 1e-05
  %v188 = vrsqrt.pop %v180
  %v189 = vrsqrt.pop %v181
  %v190 = vrsqrt.pop %v182
  %v191 = vrsqrt.pop %v183
  %v192 = vrsqrt.pop %v184
  %v193 = vrsqrt.pop %v185
  %v194 = vrsqrt.pop %v186
  %v195 = vrsqrt.pop %v187
  %v196 = vmul.f32 %v140, %v188
  %v197 = vmul.f32 %v141, %v189
  %v198 = vmul.f32 %v142, %v190
  %v199 = vmul.f32 %v143, %v191
  %v200 = vmul.f32 %v144, %v192
  %v201 = vmul.f32 %v145, %v193
  %v202 = vmul.f32 %v146, %v194
  %v203 = vmul.f32 %v147, %v195
  %v204 = vlaneseq
  %v205 = vshrl.u32 %v204, 7
  %v206 = vsub.s32 0, %v205
  %v207 = vrot.slane %v84, %v206
  %v208 = vmul.f32 %v196, %v207
  %v209 = vmul.f32 %v197, %v207
  %v210 = vmul.f32 %v198, %v207
  %v211 = vmul.f32 %v199, %v207
  %v212 = vmul.f32 %v200, %v207
  %v213 = vmul.f32 %v201, %v207
  %v214 = vmul.f32 %v202, %v207
  %v215 = vmul.f32 %v203, %v207
  %v216 = vlaneseq
  %v217 = vshrl.u32 %v216, 7
  %v218 = vsub.s32 0, %v217
  %v219 = vrot.slane %v85, %v218
  %v220 = vadd.f32 %v208, %v219
  %v221 = vadd.f32 %v209, %v219
  %v222 = vadd.f32 %v210, %v219
  %v223 = vadd.f32 %v211, %v219
  %v224 = vadd.f32 %v212, %v219
  %v225 = vadd.f32 %v213, %v219
  %v226 = vadd.f32 %v214, %v219
  %v227 = vadd.f32 %v215, %v219
  %v228 = vpack.c.bf16 %v107, %v107
  %v229 = vld [vmem:[%s5] sm:$0xf]
  %v230 = vld [vmem:[%s5 + $0x4] sm:$0xf]
  %v231 = vld [vmem:[%s5 + $0x8] sm:$0xf]
  %v232 = vld [vmem:[%s5 + $0xc] sm:$0xf]
  %v233 = vld [vmem:[%s5 + $0x10] sm:$0xf]
  %v234 = vld [vmem:[%s5 + $0x14] sm:$0xf]
  %v235 = vld [vmem:[%s5 + $0x18] sm:$0xf]
  %v236 = vld [vmem:[%s5 + $0x1c] sm:$0xf]
  %v237 = vld [vmem:[%s5 + $0x20] sm:$0xf]
  %v238 = vld [vmem:[%s5 + $0x24] sm:$0xf]
  %v239 = vld [vmem:[%s5 + $0x28] sm:$0xf]
  %v240 = vld [vmem:[%s5 + $0x2c] sm:$0xf]
  %v241 = vld [vmem:[%s5 + $0x30] sm:$0xf]
  %v242 = vld [vmem:[%s5 + $0x34] sm:$0xf]
  %v243 = vld [vmem:[%s5 + $0x38] sm:$0xf]
  %v244 = vld [vmem:[%s5 + $0x3c] sm:$0xf]
  %v245 = vld [vmem:[%s6] sm:$0x1]
  %v247 = vlaneseq
  %v248 = vshrl.u32 %v247, 7
  %v249 = vsub.s32 0, %v248
  %v250 = vrot.slane %v245, %v249
  %v268 = vunpack.c.l.b16 %v229
  %v269 = vunpack.c.l.b16 %v230
  %v270 = vunpack.c.l.b16 %v231
  %v271 = vunpack.c.l.b16 %v232
  %v272 = vunpack.c.l.b16 %v233
  %v273 = vunpack.c.l.b16 %v234
  %v274 = vunpack.c.l.b16 %v235
  %v275 = vunpack.c.l.b16 %v236
  %v276 = vunpack.c.l.b16 %v237
  %v277 = vunpack.c.l.b16 %v238
  %v278 = vunpack.c.l.b16 %v239
  %v279 = vunpack.c.l.b16 %v240
  %v280 = vunpack.c.l.b16 %v241
  %v281 = vunpack.c.l.b16 %v242
  %v282 = vunpack.c.l.b16 %v243
  %v283 = vunpack.c.l.b16 %v244
  %v284 = vpack.c.b16 %v269, %v268
  %v285 = vpack.c.b16 %v271, %v270
  %v286 = vpack.c.b16 %v273, %v272
  %v287 = vpack.c.b16 %v275, %v274
  %v288 = vpack.c.b16 %v277, %v276
  %v289 = vpack.c.b16 %v279, %v278
  %v290 = vpack.c.b16 %v281, %v280
  %v291 = vpack.c.b16 %v283, %v282
  %300 = vmatprep.subr.bf16.mxu0 0
  %301 = vmatpush1.bf16.msra.mxu0 %v291
  %302 = vmatprep.subr.bf16.mxu0 0
  %303 = vmatpush1.bf16.msra.mxu0 %v290
  %304 = vmatprep.subr.bf16.mxu0 0
  %305 = vmatpush1.bf16.msra.mxu0 %v289
  %306 = vmatprep.subr.bf16.mxu0 0
  %307 = vmatpush1.bf16.msra.mxu0 %v288
  %308 = vmatprep.subr.bf16.mxu0 0
  %309 = vmatpush1.bf16.msra.mxu0 %v287
  %310 = vmatprep.subr.bf16.mxu0 0
  %311 = vmatpush1.bf16.msra.mxu0 %v286
  %312 = vmatprep.subr.bf16.mxu0 0
  %313 = vmatpush1.bf16.msra.mxu0 %v285
  %314 = vmatprep.subr.bf16.mxu0 0
  %315 = vmatpush1.bf16.msra.mxu0 %v284
  %316 = vmatprep.subr.bf16.mxu0 0
  %317 = vmatpush2.bf16.msra.mxu0 0
  %318 = vmatprep.subr.bf16.mxu0 0
  %319 = vmatpush2.bf16.msra.mxu0 0
  %320 = vmatprep.subr.bf16.mxu0 0
  %321 = vmatpush2.bf16.msra.mxu0 0
  %322 = vmatprep.subr.bf16.mxu0 0
  %323 = vmatpush2.bf16.msra.mxu0 0
  %324 = vmatprep.subr.bf16.mxu0 0
  %325 = vmatpush2.bf16.msra.mxu0 0
  %326 = vmatprep.subr.bf16.mxu0 0
  %327 = vmatpush2.bf16.msra.mxu0 0
  %328 = vmatprep.subr.bf16.mxu0 0
  %329 = vmatpush2.bf16.msra.mxu0 0
  %330 = vmatprep.subr.bf16.mxu0 0
  %331 = vmatpush2.bf16.msra.mxu0 0
  %332 = vmatprep.mubr.bf16.mxu0 0
  %333 = vmatmul.mubr.bf16.gmra.mxu0 %v228
  %v334 = vpop.f32.mrf.mxu0
  %v335 = vadd.f32 %v250, %v334
  %v336 = vpop.f32.mrf.mxu0
  %v337 = vpop.f32.mrf.mxu0
  %v338 = vpop.f32.mrf.mxu0
  %339 = vdwg.mxu0
  %v340 = vpack.c.bf16 %v221, %v220
  %v341 = vpack.c.bf16 %v223, %v222
  %v342 = vpack.c.bf16 %v225, %v224
  %v343 = vpack.c.bf16 %v227, %v226
  %v344 = vld [vmem:[%s7] sm:$0xff]
  %v345 = vld [vmem:[%s7 + $0x8] sm:$0xff]
  %v346 = vld [vmem:[%s7 + $0x10] sm:$0xff]
  %v347 = vld [vmem:[%s7 + $0x18] sm:$0xff]
  %v348 = vld [vmem:[%s7 + $0x20] sm:$0xff]
  %v349 = vld [vmem:[%s7 + $0x28] sm:$0xff]
  %v350 = vld [vmem:[%s7 + $0x30] sm:$0xff]
  %v351 = vld [vmem:[%s7 + $0x38] sm:$0xff]
  %v352 = vld [vmem:[%s7 + $0x40] sm:$0xff]
  %v353 = vld [vmem:[%s7 + $0x48] sm:$0xff]
  %v354 = vld [vmem:[%s7 + $0x50] sm:$0xff]
  %v355 = vld [vmem:[%s7 + $0x58] sm:$0xff]
  %v356 = vld [vmem:[%s7 + $0x60] sm:$0xff]
  %v357 = vld [vmem:[%s7 + $0x68] sm:$0xff]
  %v358 = vld [vmem:[%s7 + $0x70] sm:$0xff]
  %v359 = vld [vmem:[%s7 + $0x78] sm:$0xff]
  %v360 = vld [vmem:[%s8] sm:$0x3]
  %v362 = vlaneseq
  %v363 = vshrl.u32 %v362, 7
  %v364 = vsub.s32 0, %v363
  %v365 = vrot.slane %v360, %v364
  %v366 = vlaneseq
  %v367 = vshrl.u32 %v366, 7
  %v368 = vsub.s32 1, %v367
  %v369 = vrot.slane %v360, %v368
  %v388 = vunpack.c.l.b16 %v344
  %v389 = vunpack.c.h.b16 %v344
  %v390 = vunpack.c.l.b16 %v345
  %v391 = vunpack.c.h.b16 %v345
  %v392 = vunpack.c.l.b16 %v346
  %v393 = vunpack.c.h.b16 %v346
  %v394 = vunpack.c.l.b16 %v347
  %v395 = vunpack.c.h.b16 %v347
  %v396 = vunpack.c.l.b16 %v348
  %v397 = vunpack.c.h.b16 %v348
  %v398 = vunpack.c.l.b16 %v349
  %v399 = vunpack.c.h.b16 %v349
  %v400 = vunpack.c.l.b16 %v350
  %v401 = vunpack.c.h.b16 %v350
  %v402 = vunpack.c.l.b16 %v351
  %v403 = vunpack.c.h.b16 %v351
  %v404 = vunpack.c.l.b16 %v352
  %v405 = vunpack.c.h.b16 %v352
  %v406 = vunpack.c.l.b16 %v353
  %v407 = vunpack.c.h.b16 %v353
  %v408 = vunpack.c.l.b16 %v354
  %v409 = vunpack.c.h.b16 %v354
  %v410 = vunpack.c.l.b16 %v355
  %v411 = vunpack.c.h.b16 %v355
  %v412 = vunpack.c.l.b16 %v356
  %v413 = vunpack.c.h.b16 %v356
  %v414 = vunpack.c.l.b16 %v357
  %v415 = vunpack.c.h.b16 %v357
  %v416 = vunpack.c.l.b16 %v358
  %v417 = vunpack.c.h.b16 %v358
  %v418 = vunpack.c.l.b16 %v359
  %v419 = vunpack.c.h.b16 %v359
  %v420 = vpack.c.b16 %v390, %v388
  %v421 = vpack.c.b16 %v391, %v389
  %v422 = vpack.c.b16 %v394, %v392
  %v423 = vpack.c.b16 %v395, %v393
  %v424 = vpack.c.b16 %v398, %v396
  %v425 = vpack.c.b16 %v399, %v397
  %v426 = vpack.c.b16 %v402, %v400
  %v427 = vpack.c.b16 %v403, %v401
  %v428 = vpack.c.b16 %v406, %v404
  %v429 = vpack.c.b16 %v407, %v405
  %v430 = vpack.c.b16 %v410, %v408
  %v431 = vpack.c.b16 %v411, %v409
  %v432 = vpack.c.b16 %v414, %v412
  %v433 = vpack.c.b16 %v415, %v413
  %v434 = vpack.c.b16 %v418, %v416
  %v435 = vpack.c.b16 %v419, %v417
  %452 = vmatprep.subr.bf16.mxu0 %v435
  %453 = vmatpush1.bf16.msra.mxu0 %v434
  %454 = vmatprep.subr.bf16.mxu0 %v433
  %455 = vmatpush1.bf16.msra.mxu0 %v432
  %456 = vmatprep.subr.bf16.mxu0 %v431
  %457 = vmatpush1.bf16.msra.mxu0 %v430
  %458 = vmatprep.subr.bf16.mxu0 %v429
  %459 = vmatpush1.bf16.msra.mxu0 %v428
  %460 = vmatprep.subr.bf16.mxu0 %v427
  %461 = vmatpush1.bf16.msra.mxu0 %v426
  %462 = vmatprep.subr.bf16.mxu0 %v425
  %463 = vmatpush1.bf16.msra.mxu0 %v424
  %464 = vmatprep.subr.bf16.mxu0 %v423
  %465 = vmatpush1.bf16.msra.mxu0 %v422
  %466 = vmatprep.subr.bf16.mxu0 %v421
  %467 = vmatpush1.bf16.msra.mxu0 %v420
  %468 = vmatprep.subr.bf16.mxu0 0
  %469 = vmatpush2.bf16.msra.mxu0 0
  %470 = vmatprep.subr.bf16.mxu0 0
  %471 = vmatpush2.bf16.msra.mxu0 0
  %472 = vmatprep.subr.bf16.mxu0 0
  %473 = vmatpush2.bf16.msra.mxu0 0
  %474 = vmatprep.subr.bf16.mxu0 0
  %475 = vmatpush2.bf16.msra.mxu0 0
  %476 = vmatprep.subr.bf16.mxu0 0
  %477 = vmatpush2.bf16.msra.mxu0 0
  %478 = vmatprep.subr.bf16.mxu0 0
  %479 = vmatpush2.bf16.msra.mxu0 0
  %480 = vmatprep.subr.bf16.mxu0 0
  %481 = vmatpush2.bf16.msra.mxu0 0
  %482 = vmatprep.subr.bf16.mxu0 0
  %483 = vmatpush2.bf16.msra.mxu0 0
  %484 = vmatprep.mubr.bf16.mxu0 0
  %485 = vmatmul.mubr.bf16.gmra.mxu0 %v340
  %v486 = vpop.f32.mrf.mxu0
  %v487 = vadd.f32 %v365, %v486
  %v488 = vpop.f32.mrf.mxu0
  %v489 = vadd.f32 %v369, %v488
  %v490 = vpop.f32.mrf.mxu0
  %v491 = vadd.f32 %v365, %v490
  %v492 = vpop.f32.mrf.mxu0
  %v493 = vadd.f32 %v369, %v492
  %494 = vmatprep.mubr.bf16.mxu0 0
  %495 = vmatmul.mubr.bf16.gmra.mxu0 %v341
  %v496 = vpop.f32.mrf.mxu0
  %v497 = vadd.f32 %v365, %v496
  %v498 = vpop.f32.mrf.mxu0
  %v499 = vadd.f32 %v369, %v498
  %v500 = vpop.f32.mrf.mxu0
  %v501 = vadd.f32 %v365, %v500
  %v502 = vpop.f32.mrf.mxu0
  %v503 = vadd.f32 %v369, %v502
  %504 = vmatprep.mubr.bf16.mxu0 0
  %505 = vmatmul.mubr.bf16.gmra.mxu0 %v342
  %v506 = vpop.f32.mrf.mxu0
  %v507 = vadd.f32 %v365, %v506
  %v508 = vpop.f32.mrf.mxu0
  %v509 = vadd.f32 %v369, %v508
  %v510 = vpop.f32.mrf.mxu0
  %v511 = vadd.f32 %v365, %v510
  %v512 = vpop.f32.mrf.mxu0
  %v513 = vadd.f32 %v369, %v512
  %514 = vmatprep.mubr.bf16.mxu0 0
  %515 = vmatmul.mubr.bf16.gmra.mxu0 %v343
  %v516 = vpop.f32.mrf.mxu0
  %v517 = vadd.f32 %v365, %v516
  %v518 = vpop.f32.mrf.mxu0
  %v519 = vadd.f32 %v369, %v518
  %v520 = vpop.f32.mrf.mxu0
  %v521 = vadd.f32 %v365, %v520
  %v522 = vpop.f32.mrf.mxu0
  %v523 = vadd.f32 %v369, %v522
  %524 = vdwg.mxu0
  %v526 = vcombine.high %v335, %v335
  %v528 = vunpack.c.l.s4 1966171168
  %v529 = vunpack.c.0.s8 %v528
  %v530 = vlaneseq
  %v531 = vshrl.u32 %v530, 7
  %v532 = vsub.s32 %v529, %v531
  %v533 = vrot.slane %v335, %v532
  %v535 = vunpack.c.l.s4 1966171168
  %v536 = vunpack.c.0.s8 %v535
  %v537 = vlaneseq
  %v538 = vshrl.u32 %v537, 7
  %v539 = vsub.s32 %v536, %v538
  %v540 = vrot.slane %v526, %v539
  %v541 = vcombine.high %v533, %v533
  %v542 = vcombine.high %v540, %v540
  %v544 = vunpack.c.l.s4 1966171168
  %v545 = vunpack.c.0.s8 %v544
  %v546 = vlaneseq
  %v547 = vshrl.u32 %v546, 7
  %v548 = vsub.s32 %v545, %v547
  %v549 = vrot.slane %v533, %v548
  %v551 = vunpack.c.l.s4 1966171168
  %v552 = vunpack.c.0.s8 %v551
  %v553 = vlaneseq
  %v554 = vshrl.u32 %v553, 7
  %v555 = vsub.s32 %v552, %v554
  %v556 = vrot.slane %v540, %v555
  %v558 = vunpack.c.l.s4 1966171168
  %v559 = vunpack.c.0.s8 %v558
  %v560 = vlaneseq
  %v561 = vshrl.u32 %v560, 7
  %v562 = vsub.s32 %v559, %v561
  %v563 = vrot.slane %v541, %v562
  %v565 = vunpack.c.l.s4 1966171168
  %v566 = vunpack.c.0.s8 %v565
  %v567 = vlaneseq
  %v568 = vshrl.u32 %v567, 7
  %v569 = vsub.s32 %v566, %v568
  %v570 = vrot.slane %v542, %v569
  %v571 = vcombine.high %v549, %v549
  %v572 = vcombine.high %v556, %v556
  %v573 = vcombine.high %v563, %v563
  %v574 = vcombine.high %v570, %v570
  %v575 = vlaneseq
  %v576 = vshrl.u32 %v575, 7
  %v577 = vsub.s32 0, %v576
  %v578 = vrot.slane %v549, %v577
  %v579 = vlaneseq
  %v580 = vshrl.u32 %v579, 7
  %v581 = vsub.s32 0, %v580
  %v582 = vrot.slane %v563, %v581
  %v583 = vlaneseq
  %v584 = vshrl.u32 %v583, 7
  %v585 = vsub.s32 0, %v584
  %v586 = vrot.slane %v571, %v585
  %v587 = vlaneseq
  %v588 = vshrl.u32 %v587, 7
  %v589 = vsub.s32 0, %v588
  %v590 = vrot.slane %v573, %v589
  %v591 = vlaneseq
  %v592 = vshrl.u32 %v591, 7
  %v593 = vsub.s32 0, %v592
  %v594 = vrot.slane %v556, %v593
  %v595 = vlaneseq
  %v596 = vshrl.u32 %v595, 7
  %v597 = vsub.s32 0, %v596
  %v598 = vrot.slane %v570, %v597
  %v599 = vlaneseq
  %v600 = vshrl.u32 %v599, 7
  %v601 = vsub.s32 0, %v600
  %v602 = vrot.slane %v572, %v601
  %v603 = vlaneseq
  %v604 = vshrl.u32 %v603, 7
  %v605 = vsub.s32 0, %v604
  %v606 = vrot.slane %v574, %v605
  %v615 = vmul.f32 %v578, %v487
  %v616 = vmul.f32 %v582, %v491
  %v617 = vmul.f32 %v586, %v497
  %v618 = vmul.f32 %v590, %v501
  %v619 = vmul.f32 %v594, %v507
  %v620 = vmul.f32 %v598, %v511
  %v621 = vmul.f32 %v602, %v517
  %v622 = vmul.f32 %v606, %v521
  %623 = vadd.xlane.f32.xlu0 %v615
  %v624 = vpop.xlane.xlu0 %623
  %625 = vadd.xlane.f32.xlu0 %v616
  %v626 = vpop.xlane.xlu0 %625
  %627 = vadd.xlane.f32.xlu0 %v617
  %v628 = vpop.xlane.xlu0 %627
  %629 = vadd.xlane.f32.xlu0 %v618
  %v630 = vpop.xlane.xlu0 %629
  %631 = vadd.xlane.f32.xlu0 %v619
  %v632 = vpop.xlane.xlu0 %631
  %633 = vadd.xlane.f32.xlu0 %v620
  %v634 = vpop.xlane.xlu0 %633
  %635 = vadd.xlane.f32.xlu0 %v621
  %v636 = vpop.xlane.xlu0 %635
  %637 = vadd.xlane.f32.xlu0 %v622
  %v638 = vpop.xlane.xlu0 %637
  %v639 = vmul.f32 %v624, 0.17677669
  %v640 = vmul.f32 %v626, 0.17677669
  %v641 = vmul.f32 %v628, 0.17677669
  %v642 = vmul.f32 %v630, 0.17677669
  %v643 = vmul.f32 %v632, 0.17677669
  %v644 = vmul.f32 %v634, 0.17677669
  %v645 = vmul.f32 %v636, 0.17677669
  %v646 = vmul.f32 %v638, 0.17677669
  %v648 = vlaneseq
  %v649 = vshrl.u32 %v648, 7
  %v650 = vsub.s32 0, %v649
  %v651 = vrot.slane %v76, %v650
  %653 = vbcast.lane.b32.xlu0 %v651, 256
  %v654 = vpop.permute.xlu0 %653
  %v655 = vlaneseq
  %v656 = vshrl.u32 %v655, 7
  %v657 = vsub.s32 1, %v656
  %v658 = vrot.slane %v76, %v657
  %660 = vbcast.lane.b32.xlu0 %v658, 256
  %v661 = vpop.permute.xlu0 %660
  %v662 = vlaneseq
  %v663 = vshrl.u32 %v662, 7
  %v664 = vsub.s32 2, %v663
  %v665 = vrot.slane %v76, %v664
  %667 = vbcast.lane.b32.xlu0 %v665, 256
  %v668 = vpop.permute.xlu0 %667
  %v669 = vlaneseq
  %v670 = vshrl.u32 %v669, 7
  %v671 = vsub.s32 3, %v670
  %v672 = vrot.slane %v76, %v671
  %674 = vbcast.lane.b32.xlu0 %v672, 256
  %v675 = vpop.permute.xlu0 %674
  %v676 = vlaneseq
  %v677 = vshrl.u32 %v676, 7
  %v678 = vsub.s32 4, %v677
  %v679 = vrot.slane %v76, %v678
  %681 = vbcast.lane.b32.xlu0 %v679, 256
  %v682 = vpop.permute.xlu0 %681
  %v683 = vlaneseq
  %v684 = vshrl.u32 %v683, 7
  %v685 = vsub.s32 5, %v684
  %v686 = vrot.slane %v76, %v685
  %688 = vbcast.lane.b32.xlu0 %v686, 256
  %v689 = vpop.permute.xlu0 %688
  %v690 = vlaneseq
  %v691 = vshrl.u32 %v690, 7
  %v692 = vsub.s32 6, %v691
  %v693 = vrot.slane %v76, %v692
  %695 = vbcast.lane.b32.xlu0 %v693, 256
  %v696 = vpop.permute.xlu0 %695
  %v697 = vlaneseq
  %v698 = vshrl.u32 %v697, 7
  %v699 = vsub.s32 7, %v698
  %v700 = vrot.slane %v76, %v699
  %702 = vbcast.lane.b32.xlu0 %v700, 256
  %v703 = vpop.permute.xlu0 %702
  %v712 = vadd.f32 %v639, %v654
  %v713 = vadd.f32 %v640, %v661
  %v714 = vadd.f32 %v641, %v668
  %v715 = vadd.f32 %v642, %v675
  %v716 = vadd.f32 %v643, %v682
  %v717 = vadd.f32 %v644, %v689
  %v718 = vadd.f32 %v645, %v696
  %v719 = vadd.f32 %v646, %v703
  %728 = vset.pattern.permute.xlu0 0
  %729 = vperm.xlu0 %728, %v712
  %v730 = vpop.permute.xlu0 %729
  %731 = vset.pattern.permute.xlu0 0
  %732 = vperm.xlu0 %731, %v713
  %v733 = vpop.permute.xlu0 %732
  %734 = vset.pattern.permute.xlu0 0
  %735 = vperm.xlu0 %734, %v714
  %v736 = vpop.permute.xlu0 %735
  %737 = vset.pattern.permute.xlu0 0
  %738 = vperm.xlu0 %737, %v715
  %v739 = vpop.permute.xlu0 %738
  %740 = vset.pattern.permute.xlu0 0
  %741 = vperm.xlu0 %740, %v716
  %v742 = vpop.permute.xlu0 %741
  %743 = vset.pattern.permute.xlu0 0
  %744 = vperm.xlu0 %743, %v717
  %v745 = vpop.permute.xlu0 %744
  %746 = vset.pattern.permute.xlu0 0
  %747 = vperm.xlu0 %746, %v718
  %v748 = vpop.permute.xlu0 %747
  %749 = vset.pattern.permute.xlu0 0
  %750 = vperm.xlu0 %749, %v719
  %v751 = vpop.permute.xlu0 %750
  %v752 = vlaneseq
  %v753 = vshrl.u32 %v752, 7
  %v754 = vsub.s32 %v64, %v753
  %v755 = vrot.slane %v730, %v754
  %v756 = vlaneseq
  %v757 = vshrl.u32 %v756, 7
  %v758 = vsub.s32 %v64, %v757
  %v759 = vrot.slane %v733, %v758
  %v760 = vlaneseq
  %v761 = vshrl.u32 %v760, 7
  %v762 = vsub.s32 %v64, %v761
  %v763 = vrot.slane %v736, %v762
  %v764 = vlaneseq
  %v765 = vshrl.u32 %v764, 7
  %v766 = vsub.s32 %v64, %v765
  %v767 = vrot.slane %v739, %v766
  %v768 = vlaneseq
  %v769 = vshrl.u32 %v768, 7
  %v770 = vsub.s32 %v64, %v769
  %v771 = vrot.slane %v742, %v770
  %v772 = vlaneseq
  %v773 = vshrl.u32 %v772, 7
  %v774 = vsub.s32 %v64, %v773
  %v775 = vrot.slane %v745, %v774
  %v776 = vlaneseq
  %v777 = vshrl.u32 %v776, 7
  %v778 = vsub.s32 %v64, %v777
  %v779 = vrot.slane %v748, %v778
  %v780 = vlaneseq
  %v781 = vshrl.u32 %v780, 7
  %v782 = vsub.s32 %v64, %v781
  %v783 = vrot.slane %v751, %v782
  %vm784 = vcmask 1041409
  %v785 = vsel %vm784, %v759, %v755
  %vm786 = vcmask 1042434
  %v787 = vsel %vm786, %v763, %v785
  %vm788 = vcmask 1043459
  %v789 = vsel %vm788, %v767, %v787
  %vm790 = vcmask 1044484
  %v791 = vsel %vm790, %v771, %v789
  %vm792 = vcmask 1045509
  %v793 = vsel %vm792, %v775, %v791
  %vm794 = vcmask 1046534
  %v795 = vsel %vm794, %v779, %v793
  %vm796 = vcmask 1047559
  %v797 = vsel %vm796, %v783, %v795
  %vm799 = vcmask 64512
  %v800 = vsel %vm799, %v797, -inf
  %801 = vmax.xlane.f32.xlu0 %v800
  %v802 = vpop.xlane.xlu0 %801
  %v804 = vlaneseq
  %v805 = vshrl.u32 %v804, 7
  %v806 = vsub.s32 0, %v805
  %v807 = vrot.slane %v802, %v806
  %v808 = vlaneseq
  %v809 = vshrl.u32 %v808, 7
  %v810 = vsub.s32 1, %v809
  %v811 = vrot.slane %v802, %v810
  %v812 = vlaneseq
  %v813 = vshrl.u32 %v812, 7
  %v814 = vsub.s32 2, %v813
  %v815 = vrot.slane %v802, %v814
  %v816 = vlaneseq
  %v817 = vshrl.u32 %v816, 7
  %v818 = vsub.s32 3, %v817
  %v819 = vrot.slane %v802, %v818
  %v820 = vlaneseq
  %v821 = vshrl.u32 %v820, 7
  %v822 = vsub.s32 4, %v821
  %v823 = vrot.slane %v802, %v822
  %v824 = vlaneseq
  %v825 = vshrl.u32 %v824, 7
  %v826 = vsub.s32 5, %v825
  %v827 = vrot.slane %v802, %v826
  %v828 = vlaneseq
  %v829 = vshrl.u32 %v828, 7
  %v830 = vsub.s32 6, %v829
  %v831 = vrot.slane %v802, %v830
  %v832 = vlaneseq
  %v833 = vshrl.u32 %v832, 7
  %v834 = vsub.s32 7, %v833
  %v835 = vrot.slane %v802, %v834
  %v844 = vsub.f32 %v712, %v807
  %v845 = vsub.f32 %v713, %v811
  %v846 = vsub.f32 %v714, %v815
  %v847 = vsub.f32 %v715, %v819
  %v848 = vsub.f32 %v716, %v823
  %v849 = vsub.f32 %v717, %v827
  %v850 = vsub.f32 %v718, %v831
  %v851 = vsub.f32 %v719, %v835
  %v852 = vmul.f32 %v844, 1.442695
  %v853 = vpow.pop %v852
  %v854 = vmul.f32 %v845, 1.442695
  %v855 = vpow.pop %v854
  %v856 = vmul.f32 %v846, 1.442695
  %v857 = vpow.pop %v856
  %v858 = vmul.f32 %v847, 1.442695
  %v859 = vpow.pop %v858
  %v860 = vmul.f32 %v848, 1.442695
  %v861 = vpow.pop %v860
  %v862 = vmul.f32 %v849, 1.442695
  %v863 = vpow.pop %v862
  %v864 = vmul.f32 %v850, 1.442695
  %v865 = vpow.pop %v864
  %v866 = vmul.f32 %v851, 1.442695
  %v867 = vpow.pop %v866
  %876 = vset.pattern.permute.xlu0 0
  %877 = vperm.xlu0 %876, %v853
  %v878 = vpop.permute.xlu0 %877
  %879 = vset.pattern.permute.xlu0 0
  %880 = vperm.xlu0 %879, %v855
  %v881 = vpop.permute.xlu0 %880
  %882 = vset.pattern.permute.xlu0 0
  %883 = vperm.xlu0 %882, %v857
  %v884 = vpop.permute.xlu0 %883
  %885 = vset.pattern.permute.xlu0 0
  %886 = vperm.xlu0 %885, %v859
  %v887 = vpop.permute.xlu0 %886
  %888 = vset.pattern.permute.xlu0 0
  %889 = vperm.xlu0 %888, %v861
  %v890 = vpop.permute.xlu0 %889
  %891 = vset.pattern.permute.xlu0 0
  %892 = vperm.xlu0 %891, %v863
  %v893 = vpop.permute.xlu0 %892
  %894 = vset.pattern.permute.xlu0 0
  %895 = vperm.xlu0 %894, %v865
  %v896 = vpop.permute.xlu0 %895
  %897 = vset.pattern.permute.xlu0 0
  %898 = vperm.xlu0 %897, %v867
  %v899 = vpop.permute.xlu0 %898
  %v900 = vlaneseq
  %v901 = vshrl.u32 %v900, 7
  %v902 = vsub.s32 %v64, %v901
  %v903 = vrot.slane %v878, %v902
  %v904 = vlaneseq
  %v905 = vshrl.u32 %v904, 7
  %v906 = vsub.s32 %v64, %v905
  %v907 = vrot.slane %v881, %v906
  %v908 = vlaneseq
  %v909 = vshrl.u32 %v908, 7
  %v910 = vsub.s32 %v64, %v909
  %v911 = vrot.slane %v884, %v910
  %v912 = vlaneseq
  %v913 = vshrl.u32 %v912, 7
  %v914 = vsub.s32 %v64, %v913
  %v915 = vrot.slane %v887, %v914
  %v916 = vlaneseq
  %v917 = vshrl.u32 %v916, 7
  %v918 = vsub.s32 %v64, %v917
  %v919 = vrot.slane %v890, %v918
  %v920 = vlaneseq
  %v921 = vshrl.u32 %v920, 7
  %v922 = vsub.s32 %v64, %v921
  %v923 = vrot.slane %v893, %v922
  %v924 = vlaneseq
  %v925 = vshrl.u32 %v924, 7
  %v926 = vsub.s32 %v64, %v925
  %v927 = vrot.slane %v896, %v926
  %v928 = vlaneseq
  %v929 = vshrl.u32 %v928, 7
  %v930 = vsub.s32 %v64, %v929
  %v931 = vrot.slane %v899, %v930
  %v932 = vsel %vm784, %v907, %v903
  %v933 = vsel %vm786, %v911, %v932
  %v934 = vsel %vm788, %v915, %v933
  %v935 = vsel %vm790, %v919, %v934
  %v936 = vsel %vm792, %v923, %v935
  %v937 = vsel %vm794, %v927, %v936
  %v938 = vsel %vm796, %v931, %v937
  %v940 = vsel %vm799, %v938, 0.0
  %941 = vadd.xlane.f32.xlu0 %v940
  %v942 = vpop.xlane.xlu0 %941
  %v943 = vrcp.pop %v942
  %v945 = vlaneseq
  %v946 = vshrl.u32 %v945, 7
  %v947 = vsub.s32 0, %v946
  %v948 = vrot.slane %v943, %v947
  %v949 = vlaneseq
  %v950 = vshrl.u32 %v949, 7
  %v951 = vsub.s32 1, %v950
  %v952 = vrot.slane %v943, %v951
  %v953 = vlaneseq
  %v954 = vshrl.u32 %v953, 7
  %v955 = vsub.s32 2, %v954
  %v956 = vrot.slane %v943, %v955
  %v957 = vlaneseq
  %v958 = vshrl.u32 %v957, 7
  %v959 = vsub.s32 3, %v958
  %v960 = vrot.slane %v943, %v959
  %v961 = vlaneseq
  %v962 = vshrl.u32 %v961, 7
  %v963 = vsub.s32 4, %v962
  %v964 = vrot.slane %v943, %v963
  %v965 = vlaneseq
  %v966 = vshrl.u32 %v965, 7
  %v967 = vsub.s32 5, %v966
  %v968 = vrot.slane %v943, %v967
  %v969 = vlaneseq
  %v970 = vshrl.u32 %v969, 7
  %v971 = vsub.s32 6, %v970
  %v972 = vrot.slane %v943, %v971
  %v973 = vlaneseq
  %v974 = vshrl.u32 %v973, 7
  %v975 = vsub.s32 7, %v974
  %v976 = vrot.slane %v943, %v975
  %v985 = vmul.f32 %v853, %v948
  %v986 = vmul.f32 %v855, %v952
  %v987 = vmul.f32 %v857, %v956
  %v988 = vmul.f32 %v859, %v960
  %v989 = vmul.f32 %v861, %v964
  %v990 = vmul.f32 %v863, %v968
  %v991 = vmul.f32 %v865, %v972
  %v992 = vmul.f32 %v867, %v976
  %994 = vset.pattern.permute.xlu0 0
  %995 = vperm.xlu0 %994, %v985
  %v996 = vpop.permute.xlu0 %995
  %999 = vset.pattern.permute.xlu0 0
  %1000 = vperm.xlu0 %999, %v986
  %v1001 = vpop.permute.xlu0 %1000
  %1004 = vset.pattern.permute.xlu0 0
  %1005 = vperm.xlu0 %1004, %v987
  %v1006 = vpop.permute.xlu0 %1005
  %1009 = vset.pattern.permute.xlu0 0
  %1010 = vperm.xlu0 %1009, %v988
  %v1011 = vpop.permute.xlu0 %1010
  %1014 = vset.pattern.permute.xlu0 0
  %1015 = vperm.xlu0 %1014, %v989
  %v1016 = vpop.permute.xlu0 %1015
  %1019 = vset.pattern.permute.xlu0 0
  %1020 = vperm.xlu0 %1019, %v990
  %v1021 = vpop.permute.xlu0 %1020
  %1024 = vset.pattern.permute.xlu0 0
  %1025 = vperm.xlu0 %1024, %v991
  %v1026 = vpop.permute.xlu0 %1025
  %1029 = vset.pattern.permute.xlu0 0
  %1030 = vperm.xlu0 %1029, %v992
  %v1031 = vpop.permute.xlu0 %1030
  %v1033 = vmul.f32 %v996, %v489
  %v1034 = vmul.f32 %v1001, %v493
  %v1035 = vmul.f32 %v1006, %v499
  %v1036 = vmul.f32 %v1011, %v503
  %v1037 = vmul.f32 %v1016, %v509
  %v1038 = vmul.f32 %v1021, %v513
  %v1039 = vmul.f32 %v1026, %v519
  %v1040 = vmul.f32 %v1031, %v523
  %v1041 = vrot.slane %v1033, 4
  %v1042 = vadd.f32 %v1033, %v1041
  %v1043 = vrot.slane %v1042, 2
  %v1044 = vadd.f32 %v1042, %v1043
  %v1045 = vrot.slane %v1044, 1
  %v1046 = vadd.f32 %v1044, %v1045
  %v1047 = vrot.slane %v1034, 4
  %v1048 = vadd.f32 %v1034, %v1047
  %v1049 = vrot.slane %v1048, 2
  %v1050 = vadd.f32 %v1048, %v1049
  %v1051 = vrot.slane %v1050, 1
  %v1052 = vadd.f32 %v1050, %v1051
  %v1053 = vrot.slane %v1035, 4
  %v1054 = vadd.f32 %v1035, %v1053
  %v1055 = vrot.slane %v1054, 2
  %v1056 = vadd.f32 %v1054, %v1055
  %v1057 = vrot.slane %v1056, 1
  %v1058 = vadd.f32 %v1056, %v1057
  %v1059 = vrot.slane %v1036, 4
  %v1060 = vadd.f32 %v1036, %v1059
  %v1061 = vrot.slane %v1060, 2
  %v1062 = vadd.f32 %v1060, %v1061
  %v1063 = vrot.slane %v1062, 1
  %v1064 = vadd.f32 %v1062, %v1063
  %v1065 = vrot.slane %v1037, 4
  %v1066 = vadd.f32 %v1037, %v1065
  %v1067 = vrot.slane %v1066, 2
  %v1068 = vadd.f32 %v1066, %v1067
  %v1069 = vrot.slane %v1068, 1
  %v1070 = vadd.f32 %v1068, %v1069
  %v1071 = vrot.slane %v1038, 4
  %v1072 = vadd.f32 %v1038, %v1071
  %v1073 = vrot.slane %v1072, 2
  %v1074 = vadd.f32 %v1072, %v1073
  %v1075 = vrot.slane %v1074, 1
  %v1076 = vadd.f32 %v1074, %v1075
  %v1077 = vrot.slane %v1039, 4
  %v1078 = vadd.f32 %v1039, %v1077
  %v1079 = vrot.slane %v1078, 2
  %v1080 = vadd.f32 %v1078, %v1079
  %v1081 = vrot.slane %v1080, 1
  %v1082 = vadd.f32 %v1080, %v1081
  %v1083 = vrot.slane %v1040, 4
  %v1084 = vadd.f32 %v1040, %v1083
  %v1085 = vrot.slane %v1084, 2
  %v1086 = vadd.f32 %v1084, %v1085
  %v1087 = vrot.slane %v1086, 1
  %v1088 = vadd.f32 %v1086, %v1087
  %v1097 = vsel %vm784, %v1052, %v1046
  %v1098 = vsel %vm786, %v1058, %v1097
  %v1099 = vsel %vm788, %v1064, %v1098
  %v1100 = vsel %vm790, %v1070, %v1099
  %v1101 = vsel %vm792, %v1076, %v1100
  %v1102 = vsel %vm794, %v1082, %v1101
  %v1103 = vsel %vm796, %v1088, %v1102
  %1105 = vadd.xlane.f32.xlu0 %v1103
  %v1106 = vpop.xlane.xlu0 %1105
  %v1107 = vmul.f32 %v1106, 0.03125
  %v1109 = vrot.slane %v1107, 1
  %v1110 = vrot.slane %v1107, 2
  %v1111 = vrot.slane %v1107, 3
  %v1112 = vrot.slane %v1107, 4
  %v1113 = vrot.slane %v1107, 5
  %v1114 = vrot.slane %v1107, 6
  %v1115 = vrot.slane %v1107, 7
  %v1124 = vsub.f32 %v1046, %v1107
  %v1125 = vsub.f32 %v1052, %v1109
  %v1126 = vsub.f32 %v1058, %v1110
  %v1127 = vsub.f32 %v1064, %v1111
  %v1128 = vsub.f32 %v1070, %v1112
  %v1129 = vsub.f32 %v1076, %v1113
  %v1130 = vsub.f32 %v1082, %v1114
  %v1131 = vsub.f32 %v1088, %v1115
  %v1132 = vmul.f32 %v1124, %v67
  %v1133 = vmul.f32 %v1125, %v67
  %v1134 = vmul.f32 %v1126, %v67
  %v1135 = vmul.f32 %v1127, %v67
  %v1136 = vmul.f32 %v1128, %v67
  %v1137 = vmul.f32 %v1129, %v67
  %v1138 = vmul.f32 %v1130, %v67
  %v1139 = vmul.f32 %v1131, %v67
  %v1140 = vmul.f32 %v1132, %v1132
  %v1141 = vmul.f32 %v1133, %v1133
  %v1142 = vmul.f32 %v1134, %v1134
  %v1143 = vmul.f32 %v1135, %v1135
  %v1144 = vmul.f32 %v1136, %v1136
  %v1145 = vmul.f32 %v1137, %v1137
  %v1146 = vmul.f32 %v1138, %v1138
  %v1147 = vmul.f32 %v1139, %v1139
  %v1156 = vrot.slane %v1141, 7
  %v1157 = vsel %vm784, %v1156, %v1140
  %v1158 = vrot.slane %v1142, 6
  %v1159 = vsel %vm786, %v1158, %v1157
  %v1160 = vrot.slane %v1143, 5
  %v1161 = vsel %vm788, %v1160, %v1159
  %v1162 = vrot.slane %v1144, 4
  %v1163 = vsel %vm790, %v1162, %v1161
  %v1164 = vrot.slane %v1145, 3
  %v1165 = vsel %vm792, %v1164, %v1163
  %v1166 = vrot.slane %v1146, 2
  %v1167 = vsel %vm794, %v1166, %v1165
  %v1168 = vrot.slane %v1147, 1
  %v1169 = vsel %vm796, %v1168, %v1167
  %1171 = vadd.xlane.f32.xlu0 %v1169
  %v1172 = vpop.xlane.xlu0 %1171
  %v1173 = vmul.f32 %v1172, 0.03125
  %v1174 = vadd.f32 %v1173, 1e-05
  %v1175 = vrsqrt.pop %v1174
  %v1177 = vrot.slane %v1175, 1
  %v1178 = vrot.slane %v1175, 2
  %v1179 = vrot.slane %v1175, 3
  %v1180 = vrot.slane %v1175, 4
  %v1181 = vrot.slane %v1175, 5
  %v1182 = vrot.slane %v1175, 6
  %v1183 = vrot.slane %v1175, 7
  %v1192 = vmul.f32 %v1132, %v1175
  %v1193 = vmul.f32 %v1133, %v1177
  %v1194 = vmul.f32 %v1134, %v1178
  %v1195 = vmul.f32 %v1135, %v1179
  %v1196 = vmul.f32 %v1136, %v1180
  %v1197 = vmul.f32 %v1137, %v1181
  %v1198 = vmul.f32 %v1138, %v1182
  %v1199 = vmul.f32 %v1139, %v1183
  %v1200 = vlaneseq
  %v1201 = vshrl.u32 %v1200, 7
  %v1202 = vsub.s32 3, %v1201
  %v1203 = vrot.slane %v84, %v1202
  %v1204 = vmul.f32 %v1192, %v1203
  %v1205 = vmul.f32 %v1193, %v1203
  %v1206 = vmul.f32 %v1194, %v1203
  %v1207 = vmul.f32 %v1195, %v1203
  %v1208 = vmul.f32 %v1196, %v1203
  %v1209 = vmul.f32 %v1197, %v1203
  %v1210 = vmul.f32 %v1198, %v1203
  %v1211 = vmul.f32 %v1199, %v1203
  %v1212 = vlaneseq
  %v1213 = vshrl.u32 %v1212, 7
  %v1214 = vsub.s32 3, %v1213
  %v1215 = vrot.slane %v85, %v1214
  %v1216 = vadd.f32 %v1204, %v1215
  %v1217 = vadd.f32 %v1205, %v1215
  %v1218 = vadd.f32 %v1206, %v1215
  %v1219 = vadd.f32 %v1207, %v1215
  %v1220 = vadd.f32 %v1208, %v1215
  %v1221 = vadd.f32 %v1209, %v1215
  %v1222 = vadd.f32 %v1210, %v1215
  %v1223 = vadd.f32 %v1211, %v1215
  %v1224 = vpack.c.bf16 %v1216, %v1216
  %v1225 = vpack.c.bf16 %v1217, %v1217
  %v1226 = vpack.c.bf16 %v1218, %v1218
  %v1227 = vpack.c.bf16 %v1219, %v1219
  %v1228 = vpack.c.bf16 %v1220, %v1220
  %v1229 = vpack.c.bf16 %v1221, %v1221
  %v1230 = vpack.c.bf16 %v1222, %v1222
  %v1231 = vpack.c.bf16 %v1223, %v1223
  %v1232 = vld [vmem:[%s9] sm:$0xf]
  %v1233 = vld [vmem:[%s9 + $0x4] sm:$0xf]
  %v1234 = vld [vmem:[%s9 + $0x8] sm:$0xf]
  %v1235 = vld [vmem:[%s9 + $0xc] sm:$0xf]
  %v1236 = vld [vmem:[%s9 + $0x10] sm:$0xf]
  %v1237 = vld [vmem:[%s9 + $0x14] sm:$0xf]
  %v1238 = vld [vmem:[%s9 + $0x18] sm:$0xf]
  %v1239 = vld [vmem:[%s9 + $0x1c] sm:$0xf]
  %v1240 = vld [vmem:[%s9 + $0x20] sm:$0xf]
  %v1241 = vld [vmem:[%s9 + $0x24] sm:$0xf]
  %v1242 = vld [vmem:[%s9 + $0x28] sm:$0xf]
  %v1243 = vld [vmem:[%s9 + $0x2c] sm:$0xf]
  %v1244 = vld [vmem:[%s9 + $0x30] sm:$0xf]
  %v1245 = vld [vmem:[%s9 + $0x34] sm:$0xf]
  %v1246 = vld [vmem:[%s9 + $0x38] sm:$0xf]
  %v1247 = vld [vmem:[%s9 + $0x3c] sm:$0xf]
  %v1248 = vld [vmem:[%s10] sm:$0x1]
  %v1250 = vlaneseq
  %v1251 = vshrl.u32 %v1250, 7
  %v1252 = vsub.s32 0, %v1251
  %v1253 = vrot.slane %v1248, %v1252
  %v1263 = vunpack.c.l.b16 %v1224
  %v1264 = vunpack.c.l.b16 %v1225
  %v1265 = vunpack.c.l.b16 %v1226
  %v1266 = vunpack.c.l.b16 %v1227
  %v1267 = vunpack.c.l.b16 %v1228
  %v1268 = vunpack.c.l.b16 %v1229
  %v1269 = vunpack.c.l.b16 %v1230
  %v1270 = vunpack.c.l.b16 %v1231
  %v1271 = vrot.slane %v1264, 7
  %v1272 = vsel %vm784, %v1271, %v1263
  %v1273 = vrot.slane %v1265, 6
  %v1274 = vsel %vm786, %v1273, %v1272
  %v1275 = vrot.slane %v1266, 5
  %v1276 = vsel %vm788, %v1275, %v1274
  %v1277 = vrot.slane %v1267, 4
  %v1278 = vsel %vm790, %v1277, %v1276
  %v1279 = vrot.slane %v1268, 3
  %v1280 = vsel %vm792, %v1279, %v1278
  %v1281 = vrot.slane %v1269, 2
  %v1282 = vsel %vm794, %v1281, %v1280
  %v1283 = vrot.slane %v1270, 1
  %v1284 = vsel %vm796, %v1283, %v1282
  %v1285 = vpack.c.b16 %v1284, %v1284
  %v1303 = vunpack.c.l.b16 %v1232
  %v1304 = vunpack.c.l.b16 %v1233
  %v1305 = vunpack.c.l.b16 %v1234
  %v1306 = vunpack.c.l.b16 %v1235
  %v1307 = vunpack.c.l.b16 %v1236
  %v1308 = vunpack.c.l.b16 %v1237
  %v1309 = vunpack.c.l.b16 %v1238
  %v1310 = vunpack.c.l.b16 %v1239
  %v1311 = vunpack.c.l.b16 %v1240
  %v1312 = vunpack.c.l.b16 %v1241
  %v1313 = vunpack.c.l.b16 %v1242
  %v1314 = vunpack.c.l.b16 %v1243
  %v1315 = vunpack.c.l.b16 %v1244
  %v1316 = vunpack.c.l.b16 %v1245
  %v1317 = vunpack.c.l.b16 %v1246
  %v1318 = vunpack.c.l.b16 %v1247
  %v1319 = vpack.c.b16 %v1304, %v1303
  %v1320 = vpack.c.b16 %v1306, %v1305
  %v1321 = vpack.c.b16 %v1308, %v1307
  %v1322 = vpack.c.b16 %v1310, %v1309
  %v1323 = vpack.c.b16 %v1312, %v1311
  %v1324 = vpack.c.b16 %v1314, %v1313
  %v1325 = vpack.c.b16 %v1316, %v1315
  %v1326 = vpack.c.b16 %v1318, %v1317
  %1335 = vmatprep.subr.bf16.mxu0 0
  %1336 = vmatpush1.bf16.msra.mxu0 %v1326
  %1337 = vmatprep.subr.bf16.mxu0 0
  %1338 = vmatpush1.bf16.msra.mxu0 %v1325
  %1339 = vmatprep.subr.bf16.mxu0 0
  %1340 = vmatpush1.bf16.msra.mxu0 %v1324
  %1341 = vmatprep.subr.bf16.mxu0 0
  %1342 = vmatpush1.bf16.msra.mxu0 %v1323
  %1343 = vmatprep.subr.bf16.mxu0 0
  %1344 = vmatpush1.bf16.msra.mxu0 %v1322
  %1345 = vmatprep.subr.bf16.mxu0 0
  %1346 = vmatpush1.bf16.msra.mxu0 %v1321
  %1347 = vmatprep.subr.bf16.mxu0 0
  %1348 = vmatpush1.bf16.msra.mxu0 %v1320
  %1349 = vmatprep.subr.bf16.mxu0 0
  %1350 = vmatpush1.bf16.msra.mxu0 %v1319
  %1351 = vmatprep.subr.bf16.mxu0 0
  %1352 = vmatpush2.bf16.msra.mxu0 0
  %1353 = vmatprep.subr.bf16.mxu0 0
  %1354 = vmatpush2.bf16.msra.mxu0 0
  %1355 = vmatprep.subr.bf16.mxu0 0
  %1356 = vmatpush2.bf16.msra.mxu0 0
  %1357 = vmatprep.subr.bf16.mxu0 0
  %1358 = vmatpush2.bf16.msra.mxu0 0
  %1359 = vmatprep.subr.bf16.mxu0 0
  %1360 = vmatpush2.bf16.msra.mxu0 0
  %1361 = vmatprep.subr.bf16.mxu0 0
  %1362 = vmatpush2.bf16.msra.mxu0 0
  %1363 = vmatprep.subr.bf16.mxu0 0
  %1364 = vmatpush2.bf16.msra.mxu0 0
  %1365 = vmatprep.subr.bf16.mxu0 0
  %1366 = vmatpush2.bf16.msra.mxu0 0
  %1367 = vmatprep.mubr.bf16.mxu0 0
  %1368 = vmatmul.mubr.bf16.gmra.mxu0 %v1285
  %v1369 = vpop.f32.mrf.mxu0
  %v1370 = vadd.f32 %v1253, %v1369
  %v1371 = vpop.f32.mrf.mxu0
  %v1372 = vpop.f32.mrf.mxu0
  %v1373 = vpop.f32.mrf.mxu0
  %1374 = vdwg.mxu0
  %v1375 = vadd.f32 %v82, %v1370
  %1376 = vadd.xlane.f32.xlu0 %v1375
  %v1377 = vpop.xlane.xlu0 %1376
  %v1378 = vmul.f32 %v1377, 0.03125
  %v1379 = vsub.f32 %v1375, %v1378
  %v1380 = vmul.f32 %v1379, %v67
  %v1381 = vmul.f32 %v1380, %v1380
  %1382 = vadd.xlane.f32.xlu0 %v1381
  %v1383 = vpop.xlane.xlu0 %1382
  %v1384 = vmul.f32 %v1383, 0.03125
  %v1385 = vadd.f32 %v1384, 1e-05
  %v1386 = vrsqrt.pop %v1385
  %v1387 = vmul.f32 %v1380, %v1386
  %v1388 = vlaneseq
  %v1389 = vshrl.u32 %v1388, 7
  %v1390 = vsub.s32 2, %v1389
  %v1391 = vrot.slane %v84, %v1390
  %v1392 = vmul.f32 %v1387, %v1391
  %v1393 = vlaneseq
  %v1394 = vshrl.u32 %v1393, 7
  %v1395 = vsub.s32 2, %v1394
  %v1396 = vrot.slane %v85, %v1395
  %v1397 = vadd.f32 %v1392, %v1396
  %v1398 = vpack.c.bf16 %v1397, %v1397
  %v1399 = vld [vmem:[%s11] sm:$0xf]
  %v1400 = vld [vmem:[%s11 + $0x4] sm:$0xf]
  %v1401 = vld [vmem:[%s11 + $0x8] sm:$0xf]
  %v1402 = vld [vmem:[%s11 + $0xc] sm:$0xf]
  %v1403 = vld [vmem:[%s11 + $0x10] sm:$0xf]
  %v1404 = vld [vmem:[%s11 + $0x14] sm:$0xf]
  %v1405 = vld [vmem:[%s11 + $0x18] sm:$0xf]
  %v1406 = vld [vmem:[%s11 + $0x1c] sm:$0xf]
  %v1407 = vld [vmem:[%s11 + $0x20] sm:$0xf]
  %v1408 = vld [vmem:[%s11 + $0x24] sm:$0xf]
  %v1409 = vld [vmem:[%s11 + $0x28] sm:$0xf]
  %v1410 = vld [vmem:[%s11 + $0x2c] sm:$0xf]
  %v1411 = vld [vmem:[%s11 + $0x30] sm:$0xf]
  %v1412 = vld [vmem:[%s11 + $0x34] sm:$0xf]
  %v1413 = vld [vmem:[%s11 + $0x38] sm:$0xf]
  %v1414 = vld [vmem:[%s11 + $0x3c] sm:$0xf]
  %v1415 = vld [vmem:[%s12] sm:$0x1]
  %v1417 = vlaneseq
  %v1418 = vshrl.u32 %v1417, 7
  %v1419 = vsub.s32 0, %v1418
  %v1420 = vrot.slane %v1415, %v1419
  %v1438 = vunpack.c.l.b16 %v1399
  %v1439 = vunpack.c.l.b16 %v1400
  %v1440 = vunpack.c.l.b16 %v1401
  %v1441 = vunpack.c.l.b16 %v1402
  %v1442 = vunpack.c.l.b16 %v1403
  %v1443 = vunpack.c.l.b16 %v1404
  %v1444 = vunpack.c.l.b16 %v1405
  %v1445 = vunpack.c.l.b16 %v1406
  %v1446 = vunpack.c.l.b16 %v1407
  %v1447 = vunpack.c.l.b16 %v1408
  %v1448 = vunpack.c.l.b16 %v1409
  %v1449 = vunpack.c.l.b16 %v1410
  %v1450 = vunpack.c.l.b16 %v1411
  %v1451 = vunpack.c.l.b16 %v1412
  %v1452 = vunpack.c.l.b16 %v1413
  %v1453 = vunpack.c.l.b16 %v1414
  %v1454 = vpack.c.b16 %v1439, %v1438
  %v1455 = vpack.c.b16 %v1441, %v1440
  %v1456 = vpack.c.b16 %v1443, %v1442
  %v1457 = vpack.c.b16 %v1445, %v1444
  %v1458 = vpack.c.b16 %v1447, %v1446
  %v1459 = vpack.c.b16 %v1449, %v1448
  %v1460 = vpack.c.b16 %v1451, %v1450
  %v1461 = vpack.c.b16 %v1453, %v1452
  %1470 = vmatprep.subr.bf16.mxu0 0
  %1471 = vmatpush1.bf16.msra.mxu0 %v1461
  %1472 = vmatprep.subr.bf16.mxu0 0
  %1473 = vmatpush1.bf16.msra.mxu0 %v1460
  %1474 = vmatprep.subr.bf16.mxu0 0
  %1475 = vmatpush1.bf16.msra.mxu0 %v1459
  %1476 = vmatprep.subr.bf16.mxu0 0
  %1477 = vmatpush1.bf16.msra.mxu0 %v1458
  %1478 = vmatprep.subr.bf16.mxu0 0
  %1479 = vmatpush1.bf16.msra.mxu0 %v1457
  %1480 = vmatprep.subr.bf16.mxu0 0
  %1481 = vmatpush1.bf16.msra.mxu0 %v1456
  %1482 = vmatprep.subr.bf16.mxu0 0
  %1483 = vmatpush1.bf16.msra.mxu0 %v1455
  %1484 = vmatprep.subr.bf16.mxu0 0
  %1485 = vmatpush1.bf16.msra.mxu0 %v1454
  %1486 = vmatprep.subr.bf16.mxu0 0
  %1487 = vmatpush2.bf16.msra.mxu0 0
  %1488 = vmatprep.subr.bf16.mxu0 0
  %1489 = vmatpush2.bf16.msra.mxu0 0
  %1490 = vmatprep.subr.bf16.mxu0 0
  %1491 = vmatpush2.bf16.msra.mxu0 0
  %1492 = vmatprep.subr.bf16.mxu0 0
  %1493 = vmatpush2.bf16.msra.mxu0 0
  %1494 = vmatprep.subr.bf16.mxu0 0
  %1495 = vmatpush2.bf16.msra.mxu0 0
  %1496 = vmatprep.subr.bf16.mxu0 0
  %1497 = vmatpush2.bf16.msra.mxu0 0
  %1498 = vmatprep.subr.bf16.mxu0 0
  %1499 = vmatpush2.bf16.msra.mxu0 0
  %1500 = vmatprep.subr.bf16.mxu0 0
  %1501 = vmatpush2.bf16.msra.mxu0 0
  %1502 = vmatprep.mubr.bf16.mxu0 0
  %1503 = vmatmul.mubr.bf16.gmra.mxu0 %v1398
  %v1504 = vpop.f32.mrf.mxu0
  %v1505 = vadd.f32 %v1420, %v1504
  %v1506 = vpop.f32.mrf.mxu0
  %v1507 = vpop.f32.mrf.mxu0
  %v1508 = vpop.f32.mrf.mxu0
  %1509 = vdwg.mxu0
  %vm1510 = vcmp.gt.f32.partialorder %v1505, 0.0
  %v1511 = vmul.f32 %v1505, 0.1
  %v1512 = vsel %vm1510, %v1505, %v1511
  %v1513 = vpack.c.bf16 %v1512, %v1512
  %v1514 = vld [vmem:[%s13] sm:$0xf]
  %v1515 = vld [vmem:[%s13 + $0x4] sm:$0xf]
  %v1516 = vld [vmem:[%s13 + $0x8] sm:$0xf]
  %v1517 = vld [vmem:[%s13 + $0xc] sm:$0xf]
  %v1518 = vld [vmem:[%s13 + $0x10] sm:$0xf]
  %v1519 = vld [vmem:[%s13 + $0x14] sm:$0xf]
  %v1520 = vld [vmem:[%s13 + $0x18] sm:$0xf]
  %v1521 = vld [vmem:[%s13 + $0x1c] sm:$0xf]
  %v1522 = vld [vmem:[%s13 + $0x20] sm:$0xf]
  %v1523 = vld [vmem:[%s13 + $0x24] sm:$0xf]
  %v1524 = vld [vmem:[%s13 + $0x28] sm:$0xf]
  %v1525 = vld [vmem:[%s13 + $0x2c] sm:$0xf]
  %v1526 = vld [vmem:[%s13 + $0x30] sm:$0xf]
  %v1527 = vld [vmem:[%s13 + $0x34] sm:$0xf]
  %v1528 = vld [vmem:[%s13 + $0x38] sm:$0xf]
  %v1529 = vld [vmem:[%s13 + $0x3c] sm:$0xf]
  %v1530 = vld [vmem:[%s14] sm:$0x1]
  %v1532 = vlaneseq
  %v1533 = vshrl.u32 %v1532, 7
  %v1534 = vsub.s32 0, %v1533
  %v1535 = vrot.slane %v1530, %v1534
  %v1553 = vunpack.c.l.b16 %v1514
  %v1554 = vunpack.c.l.b16 %v1515
  %v1555 = vunpack.c.l.b16 %v1516
  %v1556 = vunpack.c.l.b16 %v1517
  %v1557 = vunpack.c.l.b16 %v1518
  %v1558 = vunpack.c.l.b16 %v1519
  %v1559 = vunpack.c.l.b16 %v1520
  %v1560 = vunpack.c.l.b16 %v1521
  %v1561 = vunpack.c.l.b16 %v1522
  %v1562 = vunpack.c.l.b16 %v1523
  %v1563 = vunpack.c.l.b16 %v1524
  %v1564 = vunpack.c.l.b16 %v1525
  %v1565 = vunpack.c.l.b16 %v1526
  %v1566 = vunpack.c.l.b16 %v1527
  %v1567 = vunpack.c.l.b16 %v1528
  %v1568 = vunpack.c.l.b16 %v1529
  %v1569 = vpack.c.b16 %v1554, %v1553
  %v1570 = vpack.c.b16 %v1556, %v1555
  %v1571 = vpack.c.b16 %v1558, %v1557
  %v1572 = vpack.c.b16 %v1560, %v1559
  %v1573 = vpack.c.b16 %v1562, %v1561
  %v1574 = vpack.c.b16 %v1564, %v1563
  %v1575 = vpack.c.b16 %v1566, %v1565
  %v1576 = vpack.c.b16 %v1568, %v1567
  %1585 = vmatprep.subr.bf16.mxu0 0
  %1586 = vmatpush1.bf16.msra.mxu0 %v1576
  %1587 = vmatprep.subr.bf16.mxu0 0
  %1588 = vmatpush1.bf16.msra.mxu0 %v1575
  %1589 = vmatprep.subr.bf16.mxu0 0
  %1590 = vmatpush1.bf16.msra.mxu0 %v1574
  %1591 = vmatprep.subr.bf16.mxu0 0
  %1592 = vmatpush1.bf16.msra.mxu0 %v1573
  %1593 = vmatprep.subr.bf16.mxu0 0
  %1594 = vmatpush1.bf16.msra.mxu0 %v1572
  %1595 = vmatprep.subr.bf16.mxu0 0
  %1596 = vmatpush1.bf16.msra.mxu0 %v1571
  %1597 = vmatprep.subr.bf16.mxu0 0
  %1598 = vmatpush1.bf16.msra.mxu0 %v1570
  %1599 = vmatprep.subr.bf16.mxu0 0
  %1600 = vmatpush1.bf16.msra.mxu0 %v1569
  %1601 = vmatprep.subr.bf16.mxu0 0
  %1602 = vmatpush2.bf16.msra.mxu0 0
  %1603 = vmatprep.subr.bf16.mxu0 0
  %1604 = vmatpush2.bf16.msra.mxu0 0
  %1605 = vmatprep.subr.bf16.mxu0 0
  %1606 = vmatpush2.bf16.msra.mxu0 0
  %1607 = vmatprep.subr.bf16.mxu0 0
  %1608 = vmatpush2.bf16.msra.mxu0 0
  %1609 = vmatprep.subr.bf16.mxu0 0
  %1610 = vmatpush2.bf16.msra.mxu0 0
  %1611 = vmatprep.subr.bf16.mxu0 0
  %1612 = vmatpush2.bf16.msra.mxu0 0
  %1613 = vmatprep.subr.bf16.mxu0 0
  %1614 = vmatpush2.bf16.msra.mxu0 0
  %1615 = vmatprep.subr.bf16.mxu0 0
  %1616 = vmatpush2.bf16.msra.mxu0 0
  %1617 = vmatprep.mubr.bf16.mxu0 0
  %1618 = vmatmul.mubr.bf16.gmra.mxu0 %v1513
  %v1619 = vpop.f32.mrf.mxu0
  %v1620 = vadd.f32 %v1535, %v1619
  %v1621 = vpop.f32.mrf.mxu0
  %v1622 = vpop.f32.mrf.mxu0
  %v1623 = vpop.f32.mrf.mxu0
  %1624 = vdwg.mxu0
  %v1625 = vadd.f32 %v1375, %v1620
  %s1626 = scalar_lea.vmem %s3, 4
  %v1627 = vld [vmem:[%s1626] sm:$0xf]
  %s1628 = scalar_lea.vmem %s4, 4
  %v1629 = vld [vmem:[%s1628] sm:$0xf]
  %1630 = vadd.xlane.f32.xlu0 %v1625
  %v1631 = vpop.xlane.xlu0 %1630
  %v1632 = vmul.f32 %v1631, 0.03125
  %v1633 = vsub.f32 %v1625, %v1632
  %v1634 = vmul.f32 %v1633, %v67
  %v1635 = vmul.f32 %v1634, %v1634
  %1636 = vadd.xlane.f32.xlu0 %v1635
  %v1637 = vpop.xlane.xlu0 %1636
  %v1638 = vmul.f32 %v1637, 0.03125
  %v1639 = vadd.f32 %v1638, 1e-05
  %v1640 = vrsqrt.pop %v1639
  %v1641 = vmul.f32 %v1634, %v1640
  %v1642 = vlaneseq
  %v1643 = vshrl.u32 %v1642, 7
  %v1644 = vsub.s32 1, %v1643
  %v1645 = vrot.slane %v1627, %v1644
  %v1646 = vmul.f32 %v1641, %v1645
  %v1647 = vlaneseq
  %v1648 = vshrl.u32 %v1647, 7
  %v1649 = vsub.s32 1, %v1648
  %v1650 = vrot.slane %v1629, %v1649
  %v1651 = vadd.f32 %v1646, %v1650
  %v1652 = vlaneseq
  %v1653 = vshrl.u32 %v1652, 7
  %v1654 = vsub.s32 0, %v1653
  %v1655 = vrot.slane %v1627, %v1654
  %v1656 = vmul.f32 %v196, %v1655
  %v1657 = vmul.f32 %v197, %v1655
  %v1658 = vmul.f32 %v198, %v1655
  %v1659 = vmul.f32 %v199, %v1655
  %v1660 = vmul.f32 %v200, %v1655
  %v1661 = vmul.f32 %v201, %v1655
  %v1662 = vmul.f32 %v202, %v1655
  %v1663 = vmul.f32 %v203, %v1655
  %v1664 = vlaneseq
  %v1665 = vshrl.u32 %v1664, 7
  %v1666 = vsub.s32 0, %v1665
  %v1667 = vrot.slane %v1629, %v1666
  %v1668 = vadd.f32 %v1656, %v1667
  %v1669 = vadd.f32 %v1657, %v1667
  %v1670 = vadd.f32 %v1658, %v1667
  %v1671 = vadd.f32 %v1659, %v1667
  %v1672 = vadd.f32 %v1660, %v1667
  %v1673 = vadd.f32 %v1661, %v1667
  %v1674 = vadd.f32 %v1662, %v1667
  %v1675 = vadd.f32 %v1663, %v1667
  %v1676 = vpack.c.bf16 %v1651, %v1651
  %s1677 = scalar_lea.vmem %s5, 64
  %v1678 = vld [vmem:[%s1677] sm:$0xf]
  %v1679 = vld [vmem:[%s1677 + $0x4] sm:$0xf]
  %v1680 = vld [vmem:[%s1677 + $0x8] sm:$0xf]
  %v1681 = vld [vmem:[%s1677 + $0xc] sm:$0xf]
  %v1682 = vld [vmem:[%s1677 + $0x10] sm:$0xf]
  %v1683 = vld [vmem:[%s1677 + $0x14] sm:$0xf]
  %v1684 = vld [vmem:[%s1677 + $0x18] sm:$0xf]
  %v1685 = vld [vmem:[%s1677 + $0x1c] sm:$0xf]
  %v1686 = vld [vmem:[%s1677 + $0x20] sm:$0xf]
  %v1687 = vld [vmem:[%s1677 + $0x24] sm:$0xf]
  %v1688 = vld [vmem:[%s1677 + $0x28] sm:$0xf]
  %v1689 = vld [vmem:[%s1677 + $0x2c] sm:$0xf]
  %v1690 = vld [vmem:[%s1677 + $0x30] sm:$0xf]
  %v1691 = vld [vmem:[%s1677 + $0x34] sm:$0xf]
  %v1692 = vld [vmem:[%s1677 + $0x38] sm:$0xf]
  %v1693 = vld [vmem:[%s1677 + $0x3c] sm:$0xf]
  %s1694 = scalar_lea.vmem %s6, 1
  %v1695 = vld [vmem:[%s1694] sm:$0x1]
  %v1697 = vlaneseq
  %v1698 = vshrl.u32 %v1697, 7
  %v1699 = vsub.s32 0, %v1698
  %v1700 = vrot.slane %v1695, %v1699
  %v1718 = vunpack.c.l.b16 %v1678
  %v1719 = vunpack.c.l.b16 %v1679
  %v1720 = vunpack.c.l.b16 %v1680
  %v1721 = vunpack.c.l.b16 %v1681
  %v1722 = vunpack.c.l.b16 %v1682
  %v1723 = vunpack.c.l.b16 %v1683
  %v1724 = vunpack.c.l.b16 %v1684
  %v1725 = vunpack.c.l.b16 %v1685
  %v1726 = vunpack.c.l.b16 %v1686
  %v1727 = vunpack.c.l.b16 %v1687
  %v1728 = vunpack.c.l.b16 %v1688
  %v1729 = vunpack.c.l.b16 %v1689
  %v1730 = vunpack.c.l.b16 %v1690
  %v1731 = vunpack.c.l.b16 %v1691
  %v1732 = vunpack.c.l.b16 %v1692
  %v1733 = vunpack.c.l.b16 %v1693
  %v1734 = vpack.c.b16 %v1719, %v1718
  %v1735 = vpack.c.b16 %v1721, %v1720
  %v1736 = vpack.c.b16 %v1723, %v1722
  %v1737 = vpack.c.b16 %v1725, %v1724
  %v1738 = vpack.c.b16 %v1727, %v1726
  %v1739 = vpack.c.b16 %v1729, %v1728
  %v1740 = vpack.c.b16 %v1731, %v1730
  %v1741 = vpack.c.b16 %v1733, %v1732
  %1750 = vmatprep.subr.bf16.mxu0 0
  %1751 = vmatpush1.bf16.msra.mxu0 %v1741
  %1752 = vmatprep.subr.bf16.mxu0 0
  %1753 = vmatpush1.bf16.msra.mxu0 %v1740
  %1754 = vmatprep.subr.bf16.mxu0 0
  %1755 = vmatpush1.bf16.msra.mxu0 %v1739
  %1756 = vmatprep.subr.bf16.mxu0 0
  %1757 = vmatpush1.bf16.msra.mxu0 %v1738
  %1758 = vmatprep.subr.bf16.mxu0 0
  %1759 = vmatpush1.bf16.msra.mxu0 %v1737
  %1760 = vmatprep.subr.bf16.mxu0 0
  %1761 = vmatpush1.bf16.msra.mxu0 %v1736
  %1762 = vmatprep.subr.bf16.mxu0 0
  %1763 = vmatpush1.bf16.msra.mxu0 %v1735
  %1764 = vmatprep.subr.bf16.mxu0 0
  %1765 = vmatpush1.bf16.msra.mxu0 %v1734
  %1766 = vmatprep.subr.bf16.mxu0 0
  %1767 = vmatpush2.bf16.msra.mxu0 0
  %1768 = vmatprep.subr.bf16.mxu0 0
  %1769 = vmatpush2.bf16.msra.mxu0 0
  %1770 = vmatprep.subr.bf16.mxu0 0
  %1771 = vmatpush2.bf16.msra.mxu0 0
  %1772 = vmatprep.subr.bf16.mxu0 0
  %1773 = vmatpush2.bf16.msra.mxu0 0
  %1774 = vmatprep.subr.bf16.mxu0 0
  %1775 = vmatpush2.bf16.msra.mxu0 0
  %1776 = vmatprep.subr.bf16.mxu0 0
  %1777 = vmatpush2.bf16.msra.mxu0 0
  %1778 = vmatprep.subr.bf16.mxu0 0
  %1779 = vmatpush2.bf16.msra.mxu0 0
  %1780 = vmatprep.subr.bf16.mxu0 0
  %1781 = vmatpush2.bf16.msra.mxu0 0
  %1782 = vmatprep.mubr.bf16.mxu0 0
  %1783 = vmatmul.mubr.bf16.gmra.mxu0 %v1676
  %v1784 = vpop.f32.mrf.mxu0
  %v1785 = vadd.f32 %v1700, %v1784
  %v1786 = vpop.f32.mrf.mxu0
  %v1787 = vpop.f32.mrf.mxu0
  %v1788 = vpop.f32.mrf.mxu0
  %1789 = vdwg.mxu0
  %v1790 = vpack.c.bf16 %v1669, %v1668
  %v1791 = vpack.c.bf16 %v1671, %v1670
  %v1792 = vpack.c.bf16 %v1673, %v1672
  %v1793 = vpack.c.bf16 %v1675, %v1674
  %s1794 = scalar_lea.vmem %s7, 128
  %v1795 = vld [vmem:[%s1794] sm:$0xff]
  %v1796 = vld [vmem:[%s1794 + $0x8] sm:$0xff]
  %v1797 = vld [vmem:[%s1794 + $0x10] sm:$0xff]
  %v1798 = vld [vmem:[%s1794 + $0x18] sm:$0xff]
  %v1799 = vld [vmem:[%s1794 + $0x20] sm:$0xff]
  %v1800 = vld [vmem:[%s1794 + $0x28] sm:$0xff]
  %v1801 = vld [vmem:[%s1794 + $0x30] sm:$0xff]
  %v1802 = vld [vmem:[%s1794 + $0x38] sm:$0xff]
  %v1803 = vld [vmem:[%s1794 + $0x40] sm:$0xff]
  %v1804 = vld [vmem:[%s1794 + $0x48] sm:$0xff]
  %v1805 = vld [vmem:[%s1794 + $0x50] sm:$0xff]
  %v1806 = vld [vmem:[%s1794 + $0x58] sm:$0xff]
  %v1807 = vld [vmem:[%s1794 + $0x60] sm:$0xff]
  %v1808 = vld [vmem:[%s1794 + $0x68] sm:$0xff]
  %v1809 = vld [vmem:[%s1794 + $0x70] sm:$0xff]
  %v1810 = vld [vmem:[%s1794 + $0x78] sm:$0xff]
  %s1811 = scalar_lea.vmem %s8, 2
  %v1812 = vld [vmem:[%s1811] sm:$0x3]
  %v1814 = vlaneseq
  %v1815 = vshrl.u32 %v1814, 7
  %v1816 = vsub.s32 0, %v1815
  %v1817 = vrot.slane %v1812, %v1816
  %v1818 = vlaneseq
  %v1819 = vshrl.u32 %v1818, 7
  %v1820 = vsub.s32 1, %v1819
  %v1821 = vrot.slane %v1812, %v1820
  %v1840 = vunpack.c.l.b16 %v1795
  %v1841 = vunpack.c.h.b16 %v1795
  %v1842 = vunpack.c.l.b16 %v1796
  %v1843 = vunpack.c.h.b16 %v1796
  %v1844 = vunpack.c.l.b16 %v1797
  %v1845 = vunpack.c.h.b16 %v1797
  %v1846 = vunpack.c.l.b16 %v1798
  %v1847 = vunpack.c.h.b16 %v1798
  %v1848 = vunpack.c.l.b16 %v1799
  %v1849 = vunpack.c.h.b16 %v1799
  %v1850 = vunpack.c.l.b16 %v1800
  %v1851 = vunpack.c.h.b16 %v1800
  %v1852 = vunpack.c.l.b16 %v1801
  %v1853 = vunpack.c.h.b16 %v1801
  %v1854 = vunpack.c.l.b16 %v1802
  %v1855 = vunpack.c.h.b16 %v1802
  %v1856 = vunpack.c.l.b16 %v1803
  %v1857 = vunpack.c.h.b16 %v1803
  %v1858 = vunpack.c.l.b16 %v1804
  %v1859 = vunpack.c.h.b16 %v1804
  %v1860 = vunpack.c.l.b16 %v1805
  %v1861 = vunpack.c.h.b16 %v1805
  %v1862 = vunpack.c.l.b16 %v1806
  %v1863 = vunpack.c.h.b16 %v1806
  %v1864 = vunpack.c.l.b16 %v1807
  %v1865 = vunpack.c.h.b16 %v1807
  %v1866 = vunpack.c.l.b16 %v1808
  %v1867 = vunpack.c.h.b16 %v1808
  %v1868 = vunpack.c.l.b16 %v1809
  %v1869 = vunpack.c.h.b16 %v1809
  %v1870 = vunpack.c.l.b16 %v1810
  %v1871 = vunpack.c.h.b16 %v1810
  %v1872 = vpack.c.b16 %v1842, %v1840
  %v1873 = vpack.c.b16 %v1843, %v1841
  %v1874 = vpack.c.b16 %v1846, %v1844
  %v1875 = vpack.c.b16 %v1847, %v1845
  %v1876 = vpack.c.b16 %v1850, %v1848
  %v1877 = vpack.c.b16 %v1851, %v1849
  %v1878 = vpack.c.b16 %v1854, %v1852
  %v1879 = vpack.c.b16 %v1855, %v1853
  %v1880 = vpack.c.b16 %v1858, %v1856
  %v1881 = vpack.c.b16 %v1859, %v1857
  %v1882 = vpack.c.b16 %v1862, %v1860
  %v1883 = vpack.c.b16 %v1863, %v1861
  %v1884 = vpack.c.b16 %v1866, %v1864
  %v1885 = vpack.c.b16 %v1867, %v1865
  %v1886 = vpack.c.b16 %v1870, %v1868
  %v1887 = vpack.c.b16 %v1871, %v1869
  %1904 = vmatprep.subr.bf16.mxu0 %v1887
  %1905 = vmatpush1.bf16.msra.mxu0 %v1886
  %1906 = vmatprep.subr.bf16.mxu0 %v1885
  %1907 = vmatpush1.bf16.msra.mxu0 %v1884
  %1908 = vmatprep.subr.bf16.mxu0 %v1883
  %1909 = vmatpush1.bf16.msra.mxu0 %v1882
  %1910 = vmatprep.subr.bf16.mxu0 %v1881
  %1911 = vmatpush1.bf16.msra.mxu0 %v1880
  %1912 = vmatprep.subr.bf16.mxu0 %v1879
  %1913 = vmatpush1.bf16.msra.mxu0 %v1878
  %1914 = vmatprep.subr.bf16.mxu0 %v1877
  %1915 = vmatpush1.bf16.msra.mxu0 %v1876
  %1916 = vmatprep.subr.bf16.mxu0 %v1875
  %1917 = vmatpush1.bf16.msra.mxu0 %v1874
  %1918 = vmatprep.subr.bf16.mxu0 %v1873
  %1919 = vmatpush1.bf16.msra.mxu0 %v1872
  %1920 = vmatprep.subr.bf16.mxu0 0
  %1921 = vmatpush2.bf16.msra.mxu0 0
  %1922 = vmatprep.subr.bf16.mxu0 0
  %1923 = vmatpush2.bf16.msra.mxu0 0
  %1924 = vmatprep.subr.bf16.mxu0 0
  %1925 = vmatpush2.bf16.msra.mxu0 0
  %1926 = vmatprep.subr.bf16.mxu0 0
  %1927 = vmatpush2.bf16.msra.mxu0 0
  %1928 = vmatprep.subr.bf16.mxu0 0
  %1929 = vmatpush2.bf16.msra.mxu0 0
  %1930 = vmatprep.subr.bf16.mxu0 0
  %1931 = vmatpush2.bf16.msra.mxu0 0
  %1932 = vmatprep.subr.bf16.mxu0 0
  %1933 = vmatpush2.bf16.msra.mxu0 0
  %1934 = vmatprep.subr.bf16.mxu0 0
  %1935 = vmatpush2.bf16.msra.mxu0 0
  %1936 = vmatprep.mubr.bf16.mxu0 0
  %1937 = vmatmul.mubr.bf16.gmra.mxu0 %v1790
  %v1938 = vpop.f32.mrf.mxu0
  %v1939 = vadd.f32 %v1817, %v1938
  %v1940 = vpop.f32.mrf.mxu0
  %v1941 = vadd.f32 %v1821, %v1940
  %v1942 = vpop.f32.mrf.mxu0
  %v1943 = vadd.f32 %v1817, %v1942
  %v1944 = vpop.f32.mrf.mxu0
  %v1945 = vadd.f32 %v1821, %v1944
  %1946 = vmatprep.mubr.bf16.mxu0 0
  %1947 = vmatmul.mubr.bf16.gmra.mxu0 %v1791
  %v1948 = vpop.f32.mrf.mxu0
  %v1949 = vadd.f32 %v1817, %v1948
  %v1950 = vpop.f32.mrf.mxu0
  %v1951 = vadd.f32 %v1821, %v1950
  %v1952 = vpop.f32.mrf.mxu0
  %v1953 = vadd.f32 %v1817, %v1952
  %v1954 = vpop.f32.mrf.mxu0
  %v1955 = vadd.f32 %v1821, %v1954
  %1956 = vmatprep.mubr.bf16.mxu0 0
  %1957 = vmatmul.mubr.bf16.gmra.mxu0 %v1792
  %v1958 = vpop.f32.mrf.mxu0
  %v1959 = vadd.f32 %v1817, %v1958
  %v1960 = vpop.f32.mrf.mxu0
  %v1961 = vadd.f32 %v1821, %v1960
  %v1962 = vpop.f32.mrf.mxu0
  %v1963 = vadd.f32 %v1817, %v1962
  %v1964 = vpop.f32.mrf.mxu0
  %v1965 = vadd.f32 %v1821, %v1964
  %1966 = vmatprep.mubr.bf16.mxu0 0
  %1967 = vmatmul.mubr.bf16.gmra.mxu0 %v1793
  %v1968 = vpop.f32.mrf.mxu0
  %v1969 = vadd.f32 %v1817, %v1968
  %v1970 = vpop.f32.mrf.mxu0
  %v1971 = vadd.f32 %v1821, %v1970
  %v1972 = vpop.f32.mrf.mxu0
  %v1973 = vadd.f32 %v1817, %v1972
  %v1974 = vpop.f32.mrf.mxu0
  %v1975 = vadd.f32 %v1821, %v1974
  %1976 = vdwg.mxu0
  %v1978 = vcombine.high %v1785, %v1785
  %v1980 = vunpack.c.l.s4 1966171168
  %v1981 = vunpack.c.0.s8 %v1980
  %v1982 = vlaneseq
  %v1983 = vshrl.u32 %v1982, 7
  %v1984 = vsub.s32 %v1981, %v1983
  %v1985 = vrot.slane %v1785, %v1984
  %v1987 = vunpack.c.l.s4 1966171168
  %v1988 = vunpack.c.0.s8 %v1987
  %v1989 = vlaneseq
  %v1990 = vshrl.u32 %v1989, 7
  %v1991 = vsub.s32 %v1988, %v1990
  %v1992 = vrot.slane %v1978, %v1991
  %v1993 = vcombine.high %v1985, %v1985
  %v1994 = vcombine.high %v1992, %v1992
  %v1996 = vunpack.c.l.s4 1966171168
  %v1997 = vunpack.c.0.s8 %v1996
  %v1998 = vlaneseq
  %v1999 = vshrl.u32 %v1998, 7
  %v2000 = vsub.s32 %v1997, %v1999
  %v2001 = vrot.slane %v1985, %v2000
  %v2003 = vunpack.c.l.s4 1966171168
  %v2004 = vunpack.c.0.s8 %v2003
  %v2005 = vlaneseq
  %v2006 = vshrl.u32 %v2005, 7
  %v2007 = vsub.s32 %v2004, %v2006
  %v2008 = vrot.slane %v1992, %v2007
  %v2010 = vunpack.c.l.s4 1966171168
  %v2011 = vunpack.c.0.s8 %v2010
  %v2012 = vlaneseq
  %v2013 = vshrl.u32 %v2012, 7
  %v2014 = vsub.s32 %v2011, %v2013
  %v2015 = vrot.slane %v1993, %v2014
  %v2017 = vunpack.c.l.s4 1966171168
  %v2018 = vunpack.c.0.s8 %v2017
  %v2019 = vlaneseq
  %v2020 = vshrl.u32 %v2019, 7
  %v2021 = vsub.s32 %v2018, %v2020
  %v2022 = vrot.slane %v1994, %v2021
  %v2023 = vcombine.high %v2001, %v2001
  %v2024 = vcombine.high %v2008, %v2008
  %v2025 = vcombine.high %v2015, %v2015
  %v2026 = vcombine.high %v2022, %v2022
  %v2027 = vlaneseq
  %v2028 = vshrl.u32 %v2027, 7
  %v2029 = vsub.s32 0, %v2028
  %v2030 = vrot.slane %v2001, %v2029
  %v2031 = vlaneseq
  %v2032 = vshrl.u32 %v2031, 7
  %v2033 = vsub.s32 0, %v2032
  %v2034 = vrot.slane %v2015, %v2033
  %v2035 = vlaneseq
  %v2036 = vshrl.u32 %v2035, 7
  %v2037 = vsub.s32 0, %v2036
  %v2038 = vrot.slane %v2023, %v2037
  %v2039 = vlaneseq
  %v2040 = vshrl.u32 %v2039, 7
  %v2041 = vsub.s32 0, %v2040
  %v2042 = vrot.slane %v2025, %v2041
  %v2043 = vlaneseq
  %v2044 = vshrl.u32 %v2043, 7
  %v2045 = vsub.s32 0, %v2044
  %v2046 = vrot.slane %v2008, %v2045
  %v2047 = vlaneseq
  %v2048 = vshrl.u32 %v2047, 7
  %v2049 = vsub.s32 0, %v2048
  %v2050 = vrot.slane %v2022, %v2049
  %v2051 = vlaneseq
  %v2052 = vshrl.u32 %v2051, 7
  %v2053 = vsub.s32 0, %v2052
  %v2054 = vrot.slane %v2024, %v2053
  %v2055 = vlaneseq
  %v2056 = vshrl.u32 %v2055, 7
  %v2057 = vsub.s32 0, %v2056
  %v2058 = vrot.slane %v2026, %v2057
  %v2067 = vmul.f32 %v2030, %v1939
  %v2068 = vmul.f32 %v2034, %v1943
  %v2069 = vmul.f32 %v2038, %v1949
  %v2070 = vmul.f32 %v2042, %v1953
  %v2071 = vmul.f32 %v2046, %v1959
  %v2072 = vmul.f32 %v2050, %v1963
  %v2073 = vmul.f32 %v2054, %v1969
  %v2074 = vmul.f32 %v2058, %v1973
  %2075 = vadd.xlane.f32.xlu0 %v2067
  %v2076 = vpop.xlane.xlu0 %2075
  %2077 = vadd.xlane.f32.xlu0 %v2068
  %v2078 = vpop.xlane.xlu0 %2077
  %2079 = vadd.xlane.f32.xlu0 %v2069
  %v2080 = vpop.xlane.xlu0 %2079
  %2081 = vadd.xlane.f32.xlu0 %v2070
  %v2082 = vpop.xlane.xlu0 %2081
  %2083 = vadd.xlane.f32.xlu0 %v2071
  %v2084 = vpop.xlane.xlu0 %2083
  %2085 = vadd.xlane.f32.xlu0 %v2072
  %v2086 = vpop.xlane.xlu0 %2085
  %2087 = vadd.xlane.f32.xlu0 %v2073
  %v2088 = vpop.xlane.xlu0 %2087
  %2089 = vadd.xlane.f32.xlu0 %v2074
  %v2090 = vpop.xlane.xlu0 %2089
  %v2091 = vmul.f32 %v2076, 0.17677669
  %v2092 = vmul.f32 %v2078, 0.17677669
  %v2093 = vmul.f32 %v2080, 0.17677669
  %v2094 = vmul.f32 %v2082, 0.17677669
  %v2095 = vmul.f32 %v2084, 0.17677669
  %v2096 = vmul.f32 %v2086, 0.17677669
  %v2097 = vmul.f32 %v2088, 0.17677669
  %v2098 = vmul.f32 %v2090, 0.17677669
  %v2099 = vadd.f32 %v2091, %v654
  %v2100 = vadd.f32 %v2092, %v661
  %v2101 = vadd.f32 %v2093, %v668
  %v2102 = vadd.f32 %v2094, %v675
  %v2103 = vadd.f32 %v2095, %v682
  %v2104 = vadd.f32 %v2096, %v689
  %v2105 = vadd.f32 %v2097, %v696
  %v2106 = vadd.f32 %v2098, %v703
  %2115 = vset.pattern.permute.xlu0 0
  %2116 = vperm.xlu0 %2115, %v2099
  %v2117 = vpop.permute.xlu0 %2116
  %2118 = vset.pattern.permute.xlu0 0
  %2119 = vperm.xlu0 %2118, %v2100
  %v2120 = vpop.permute.xlu0 %2119
  %2121 = vset.pattern.permute.xlu0 0
  %2122 = vperm.xlu0 %2121, %v2101
  %v2123 = vpop.permute.xlu0 %2122
  %2124 = vset.pattern.permute.xlu0 0
  %2125 = vperm.xlu0 %2124, %v2102
  %v2126 = vpop.permute.xlu0 %2125
  %2127 = vset.pattern.permute.xlu0 0
  %2128 = vperm.xlu0 %2127, %v2103
  %v2129 = vpop.permute.xlu0 %2128
  %2130 = vset.pattern.permute.xlu0 0
  %2131 = vperm.xlu0 %2130, %v2104
  %v2132 = vpop.permute.xlu0 %2131
  %2133 = vset.pattern.permute.xlu0 0
  %2134 = vperm.xlu0 %2133, %v2105
  %v2135 = vpop.permute.xlu0 %2134
  %2136 = vset.pattern.permute.xlu0 0
  %2137 = vperm.xlu0 %2136, %v2106
  %v2138 = vpop.permute.xlu0 %2137
  %v2139 = vlaneseq
  %v2140 = vshrl.u32 %v2139, 7
  %v2141 = vsub.s32 %v64, %v2140
  %v2142 = vrot.slane %v2117, %v2141
  %v2143 = vlaneseq
  %v2144 = vshrl.u32 %v2143, 7
  %v2145 = vsub.s32 %v64, %v2144
  %v2146 = vrot.slane %v2120, %v2145
  %v2147 = vlaneseq
  %v2148 = vshrl.u32 %v2147, 7
  %v2149 = vsub.s32 %v64, %v2148
  %v2150 = vrot.slane %v2123, %v2149
  %v2151 = vlaneseq
  %v2152 = vshrl.u32 %v2151, 7
  %v2153 = vsub.s32 %v64, %v2152
  %v2154 = vrot.slane %v2126, %v2153
  %v2155 = vlaneseq
  %v2156 = vshrl.u32 %v2155, 7
  %v2157 = vsub.s32 %v64, %v2156
  %v2158 = vrot.slane %v2129, %v2157
  %v2159 = vlaneseq
  %v2160 = vshrl.u32 %v2159, 7
  %v2161 = vsub.s32 %v64, %v2160
  %v2162 = vrot.slane %v2132, %v2161
  %v2163 = vlaneseq
  %v2164 = vshrl.u32 %v2163, 7
  %v2165 = vsub.s32 %v64, %v2164
  %v2166 = vrot.slane %v2135, %v2165
  %v2167 = vlaneseq
  %v2168 = vshrl.u32 %v2167, 7
  %v2169 = vsub.s32 %v64, %v2168
  %v2170 = vrot.slane %v2138, %v2169
  %v2171 = vsel %vm784, %v2146, %v2142
  %v2172 = vsel %vm786, %v2150, %v2171
  %v2173 = vsel %vm788, %v2154, %v2172
  %v2174 = vsel %vm790, %v2158, %v2173
  %v2175 = vsel %vm792, %v2162, %v2174
  %v2176 = vsel %vm794, %v2166, %v2175
  %v2177 = vsel %vm796, %v2170, %v2176
  %v2179 = vsel %vm799, %v2177, -inf
  %2180 = vmax.xlane.f32.xlu0 %v2179
  %v2181 = vpop.xlane.xlu0 %2180
  %v2183 = vlaneseq
  %v2184 = vshrl.u32 %v2183, 7
  %v2185 = vsub.s32 0, %v2184
  %v2186 = vrot.slane %v2181, %v2185
  %v2187 = vlaneseq
  %v2188 = vshrl.u32 %v2187, 7
  %v2189 = vsub.s32 1, %v2188
  %v2190 = vrot.slane %v2181, %v2189
  %v2191 = vlaneseq
  %v2192 = vshrl.u32 %v2191, 7
  %v2193 = vsub.s32 2, %v2192
  %v2194 = vrot.slane %v2181, %v2193
  %v2195 = vlaneseq
  %v2196 = vshrl.u32 %v2195, 7
  %v2197 = vsub.s32 3, %v2196
  %v2198 = vrot.slane %v2181, %v2197
  %v2199 = vlaneseq
  %v2200 = vshrl.u32 %v2199, 7
  %v2201 = vsub.s32 4, %v2200
  %v2202 = vrot.slane %v2181, %v2201
  %v2203 = vlaneseq
  %v2204 = vshrl.u32 %v2203, 7
  %v2205 = vsub.s32 5, %v2204
  %v2206 = vrot.slane %v2181, %v2205
  %v2207 = vlaneseq
  %v2208 = vshrl.u32 %v2207, 7
  %v2209 = vsub.s32 6, %v2208
  %v2210 = vrot.slane %v2181, %v2209
  %v2211 = vlaneseq
  %v2212 = vshrl.u32 %v2211, 7
  %v2213 = vsub.s32 7, %v2212
  %v2214 = vrot.slane %v2181, %v2213
  %v2223 = vsub.f32 %v2099, %v2186
  %v2224 = vsub.f32 %v2100, %v2190
  %v2225 = vsub.f32 %v2101, %v2194
  %v2226 = vsub.f32 %v2102, %v2198
  %v2227 = vsub.f32 %v2103, %v2202
  %v2228 = vsub.f32 %v2104, %v2206
  %v2229 = vsub.f32 %v2105, %v2210
  %v2230 = vsub.f32 %v2106, %v2214
  %v2231 = vmul.f32 %v2223, 1.442695
  %v2232 = vpow.pop %v2231
  %v2233 = vmul.f32 %v2224, 1.442695
  %v2234 = vpow.pop %v2233
  %v2235 = vmul.f32 %v2225, 1.442695
  %v2236 = vpow.pop %v2235
  %v2237 = vmul.f32 %v2226, 1.442695
  %v2238 = vpow.pop %v2237
  %v2239 = vmul.f32 %v2227, 1.442695
  %v2240 = vpow.pop %v2239
  %v2241 = vmul.f32 %v2228, 1.442695
  %v2242 = vpow.pop %v2241
  %v2243 = vmul.f32 %v2229, 1.442695
  %v2244 = vpow.pop %v2243
  %v2245 = vmul.f32 %v2230, 1.442695
  %v2246 = vpow.pop %v2245
  %2255 = vset.pattern.permute.xlu0 0
  %2256 = vperm.xlu0 %2255, %v2232
  %v2257 = vpop.permute.xlu0 %2256
  %2258 = vset.pattern.permute.xlu0 0
  %2259 = vperm.xlu0 %2258, %v2234
  %v2260 = vpop.permute.xlu0 %2259
  %2261 = vset.pattern.permute.xlu0 0
  %2262 = vperm.xlu0 %2261, %v2236
  %v2263 = vpop.permute.xlu0 %2262
  %2264 = vset.pattern.permute.xlu0 0
  %2265 = vperm.xlu0 %2264, %v2238
  %v2266 = vpop.permute.xlu0 %2265
  %2267 = vset.pattern.permute.xlu0 0
  %2268 = vperm.xlu0 %2267, %v2240
  %v2269 = vpop.permute.xlu0 %2268
  %2270 = vset.pattern.permute.xlu0 0
  %2271 = vperm.xlu0 %2270, %v2242
  %v2272 = vpop.permute.xlu0 %2271
  %2273 = vset.pattern.permute.xlu0 0
  %2274 = vperm.xlu0 %2273, %v2244
  %v2275 = vpop.permute.xlu0 %2274
  %2276 = vset.pattern.permute.xlu0 0
  %2277 = vperm.xlu0 %2276, %v2246
  %v2278 = vpop.permute.xlu0 %2277
  %v2279 = vlaneseq
  %v2280 = vshrl.u32 %v2279, 7
  %v2281 = vsub.s32 %v64, %v2280
  %v2282 = vrot.slane %v2257, %v2281
  %v2283 = vlaneseq
  %v2284 = vshrl.u32 %v2283, 7
  %v2285 = vsub.s32 %v64, %v2284
  %v2286 = vrot.slane %v2260, %v2285
  %v2287 = vlaneseq
  %v2288 = vshrl.u32 %v2287, 7
  %v2289 = vsub.s32 %v64, %v2288
  %v2290 = vrot.slane %v2263, %v2289
  %v2291 = vlaneseq
  %v2292 = vshrl.u32 %v2291, 7
  %v2293 = vsub.s32 %v64, %v2292
  %v2294 = vrot.slane %v2266, %v2293
  %v2295 = vlaneseq
  %v2296 = vshrl.u32 %v2295, 7
  %v2297 = vsub.s32 %v64, %v2296
  %v2298 = vrot.slane %v2269, %v2297
  %v2299 = vlaneseq
  %v2300 = vshrl.u32 %v2299, 7
  %v2301 = vsub.s32 %v64, %v2300
  %v2302 = vrot.slane %v2272, %v2301
  %v2303 = vlaneseq
  %v2304 = vshrl.u32 %v2303, 7
  %v2305 = vsub.s32 %v64, %v2304
  %v2306 = vrot.slane %v2275, %v2305
  %v2307 = vlaneseq
  %v2308 = vshrl.u32 %v2307, 7
  %v2309 = vsub.s32 %v64, %v2308
  %v2310 = vrot.slane %v2278, %v2309
  %v2311 = vsel %vm784, %v2286, %v2282
  %v2312 = vsel %vm786, %v2290, %v2311
  %v2313 = vsel %vm788, %v2294, %v2312
  %v2314 = vsel %vm790, %v2298, %v2313
  %v2315 = vsel %vm792, %v2302, %v2314
  %v2316 = vsel %vm794, %v2306, %v2315
  %v2317 = vsel %vm796, %v2310, %v2316
  %v2319 = vsel %vm799, %v2317, 0.0
  %2320 = vadd.xlane.f32.xlu0 %v2319
  %v2321 = vpop.xlane.xlu0 %2320
  %v2322 = vrcp.pop %v2321
  %v2324 = vlaneseq
  %v2325 = vshrl.u32 %v2324, 7
  %v2326 = vsub.s32 0, %v2325
  %v2327 = vrot.slane %v2322, %v2326
  %v2328 = vlaneseq
  %v2329 = vshrl.u32 %v2328, 7
  %v2330 = vsub.s32 1, %v2329
  %v2331 = vrot.slane %v2322, %v2330
  %v2332 = vlaneseq
  %v2333 = vshrl.u32 %v2332, 7
  %v2334 = vsub.s32 2, %v2333
  %v2335 = vrot.slane %v2322, %v2334
  %v2336 = vlaneseq
  %v2337 = vshrl.u32 %v2336, 7
  %v2338 = vsub.s32 3, %v2337
  %v2339 = vrot.slane %v2322, %v2338
  %v2340 = vlaneseq
  %v2341 = vshrl.u32 %v2340, 7
  %v2342 = vsub.s32 4, %v2341
  %v2343 = vrot.slane %v2322, %v2342
  %v2344 = vlaneseq
  %v2345 = vshrl.u32 %v2344, 7
  %v2346 = vsub.s32 5, %v2345
  %v2347 = vrot.slane %v2322, %v2346
  %v2348 = vlaneseq
  %v2349 = vshrl.u32 %v2348, 7
  %v2350 = vsub.s32 6, %v2349
  %v2351 = vrot.slane %v2322, %v2350
  %v2352 = vlaneseq
  %v2353 = vshrl.u32 %v2352, 7
  %v2354 = vsub.s32 7, %v2353
  %v2355 = vrot.slane %v2322, %v2354
  %v2364 = vmul.f32 %v2232, %v2327
  %v2365 = vmul.f32 %v2234, %v2331
  %v2366 = vmul.f32 %v2236, %v2335
  %v2367 = vmul.f32 %v2238, %v2339
  %v2368 = vmul.f32 %v2240, %v2343
  %v2369 = vmul.f32 %v2242, %v2347
  %v2370 = vmul.f32 %v2244, %v2351
  %v2371 = vmul.f32 %v2246, %v2355
  %2373 = vset.pattern.permute.xlu0 0
  %2374 = vperm.xlu0 %2373, %v2364
  %v2375 = vpop.permute.xlu0 %2374
  %2378 = vset.pattern.permute.xlu0 0
  %2379 = vperm.xlu0 %2378, %v2365
  %v2380 = vpop.permute.xlu0 %2379
  %2383 = vset.pattern.permute.xlu0 0
  %2384 = vperm.xlu0 %2383, %v2366
  %v2385 = vpop.permute.xlu0 %2384
  %2388 = vset.pattern.permute.xlu0 0
  %2389 = vperm.xlu0 %2388, %v2367
  %v2390 = vpop.permute.xlu0 %2389
  %2393 = vset.pattern.permute.xlu0 0
  %2394 = vperm.xlu0 %2393, %v2368
  %v2395 = vpop.permute.xlu0 %2394
  %2398 = vset.pattern.permute.xlu0 0
  %2399 = vperm.xlu0 %2398, %v2369
  %v2400 = vpop.permute.xlu0 %2399
  %2403 = vset.pattern.permute.xlu0 0
  %2404 = vperm.xlu0 %2403, %v2370
  %v2405 = vpop.permute.xlu0 %2404
  %2408 = vset.pattern.permute.xlu0 0
  %2409 = vperm.xlu0 %2408, %v2371
  %v2410 = vpop.permute.xlu0 %2409
  %v2412 = vmul.f32 %v2375, %v1941
  %v2413 = vmul.f32 %v2380, %v1945
  %v2414 = vmul.f32 %v2385, %v1951
  %v2415 = vmul.f32 %v2390, %v1955
  %v2416 = vmul.f32 %v2395, %v1961
  %v2417 = vmul.f32 %v2400, %v1965
  %v2418 = vmul.f32 %v2405, %v1971
  %v2419 = vmul.f32 %v2410, %v1975
  %v2420 = vrot.slane %v2412, 4
  %v2421 = vadd.f32 %v2412, %v2420
  %v2422 = vrot.slane %v2421, 2
  %v2423 = vadd.f32 %v2421, %v2422
  %v2424 = vrot.slane %v2423, 1
  %v2425 = vadd.f32 %v2423, %v2424
  %v2426 = vrot.slane %v2413, 4
  %v2427 = vadd.f32 %v2413, %v2426
  %v2428 = vrot.slane %v2427, 2
  %v2429 = vadd.f32 %v2427, %v2428
  %v2430 = vrot.slane %v2429, 1
  %v2431 = vadd.f32 %v2429, %v2430
  %v2432 = vrot.slane %v2414, 4
  %v2433 = vadd.f32 %v2414, %v2432
  %v2434 = vrot.slane %v2433, 2
  %v2435 = vadd.f32 %v2433, %v2434
  %v2436 = vrot.slane %v2435, 1
  %v2437 = vadd.f32 %v2435, %v2436
  %v2438 = vrot.slane %v2415, 4
  %v2439 = vadd.f32 %v2415, %v2438
  %v2440 = vrot.slane %v2439, 2
  %v2441 = vadd.f32 %v2439, %v2440
  %v2442 = vrot.slane %v2441, 1
  %v2443 = vadd.f32 %v2441, %v2442
  %v2444 = vrot.slane %v2416, 4
  %v2445 = vadd.f32 %v2416, %v2444
  %v2446 = vrot.slane %v2445, 2
  %v2447 = vadd.f32 %v2445, %v2446
  %v2448 = vrot.slane %v2447, 1
  %v2449 = vadd.f32 %v2447, %v2448
  %v2450 = vrot.slane %v2417, 4
  %v2451 = vadd.f32 %v2417, %v2450
  %v2452 = vrot.slane %v2451, 2
  %v2453 = vadd.f32 %v2451, %v2452
  %v2454 = vrot.slane %v2453, 1
  %v2455 = vadd.f32 %v2453, %v2454
  %v2456 = vrot.slane %v2418, 4
  %v2457 = vadd.f32 %v2418, %v2456
  %v2458 = vrot.slane %v2457, 2
  %v2459 = vadd.f32 %v2457, %v2458
  %v2460 = vrot.slane %v2459, 1
  %v2461 = vadd.f32 %v2459, %v2460
  %v2462 = vrot.slane %v2419, 4
  %v2463 = vadd.f32 %v2419, %v2462
  %v2464 = vrot.slane %v2463, 2
  %v2465 = vadd.f32 %v2463, %v2464
  %v2466 = vrot.slane %v2465, 1
  %v2467 = vadd.f32 %v2465, %v2466
  %v2476 = vsel %vm784, %v2431, %v2425
  %v2477 = vsel %vm786, %v2437, %v2476
  %v2478 = vsel %vm788, %v2443, %v2477
  %v2479 = vsel %vm790, %v2449, %v2478
  %v2480 = vsel %vm792, %v2455, %v2479
  %v2481 = vsel %vm794, %v2461, %v2480
  %v2482 = vsel %vm796, %v2467, %v2481
  %2484 = vadd.xlane.f32.xlu0 %v2482
  %v2485 = vpop.xlane.xlu0 %2484
  %v2486 = vmul.f32 %v2485, 0.03125
  %v2488 = vrot.slane %v2486, 1
  %v2489 = vrot.slane %v2486, 2
  %v2490 = vrot.slane %v2486, 3
  %v2491 = vrot.slane %v2486, 4
  %v2492 = vrot.slane %v2486, 5
  %v2493 = vrot.slane %v2486, 6
  %v2494 = vrot.slane %v2486, 7
  %v2503 = vsub.f32 %v2425, %v2486
  %v2504 = vsub.f32 %v2431, %v2488
  %v2505 = vsub.f32 %v2437, %v2489
  %v2506 = vsub.f32 %v2443, %v2490
  %v2507 = vsub.f32 %v2449, %v2491
  %v2508 = vsub.f32 %v2455, %v2492
  %v2509 = vsub.f32 %v2461, %v2493
  %v2510 = vsub.f32 %v2467, %v2494
  %v2511 = vmul.f32 %v2503, %v67
  %v2512 = vmul.f32 %v2504, %v67
  %v2513 = vmul.f32 %v2505, %v67
  %v2514 = vmul.f32 %v2506, %v67
  %v2515 = vmul.f32 %v2507, %v67
  %v2516 = vmul.f32 %v2508, %v67
  %v2517 = vmul.f32 %v2509, %v67
  %v2518 = vmul.f32 %v2510, %v67
  %v2519 = vmul.f32 %v2511, %v2511
  %v2520 = vmul.f32 %v2512, %v2512
  %v2521 = vmul.f32 %v2513, %v2513
  %v2522 = vmul.f32 %v2514, %v2514
  %v2523 = vmul.f32 %v2515, %v2515
  %v2524 = vmul.f32 %v2516, %v2516
  %v2525 = vmul.f32 %v2517, %v2517
  %v2526 = vmul.f32 %v2518, %v2518
  %v2535 = vrot.slane %v2520, 7
  %v2536 = vsel %vm784, %v2535, %v2519
  %v2537 = vrot.slane %v2521, 6
  %v2538 = vsel %vm786, %v2537, %v2536
  %v2539 = vrot.slane %v2522, 5
  %v2540 = vsel %vm788, %v2539, %v2538
  %v2541 = vrot.slane %v2523, 4
  %v2542 = vsel %vm790, %v2541, %v2540
  %v2543 = vrot.slane %v2524, 3
  %v2544 = vsel %vm792, %v2543, %v2542
  %v2545 = vrot.slane %v2525, 2
  %v2546 = vsel %vm794, %v2545, %v2544
  %v2547 = vrot.slane %v2526, 1
  %v2548 = vsel %vm796, %v2547, %v2546
  %2550 = vadd.xlane.f32.xlu0 %v2548
  %v2551 = vpop.xlane.xlu0 %2550
  %v2552 = vmul.f32 %v2551, 0.03125
  %v2553 = vadd.f32 %v2552, 1e-05
  %v2554 = vrsqrt.pop %v2553
  %v2556 = vrot.slane %v2554, 1
  %v2557 = vrot.slane %v2554, 2
  %v2558 = vrot.slane %v2554, 3
  %v2559 = vrot.slane %v2554, 4
  %v2560 = vrot.slane %v2554, 5
  %v2561 = vrot.slane %v2554, 6
  %v2562 = vrot.slane %v2554, 7
  %v2571 = vmul.f32 %v2511, %v2554
  %v2572 = vmul.f32 %v2512, %v2556
  %v2573 = vmul.f32 %v2513, %v2557
  %v2574 = vmul.f32 %v2514, %v2558
  %v2575 = vmul.f32 %v2515, %v2559
  %v2576 = vmul.f32 %v2516, %v2560
  %v2577 = vmul.f32 %v2517, %v2561
  %v2578 = vmul.f32 %v2518, %v2562
  %v2579 = vlaneseq
  %v2580 = vshrl.u32 %v2579, 7
  %v2581 = vsub.s32 3, %v2580
  %v2582 = vrot.slane %v1627, %v2581
  %v2583 = vmul.f32 %v2571, %v2582
  %v2584 = vmul.f32 %v2572, %v2582
  %v2585 = vmul.f32 %v2573, %v2582
  %v2586 = vmul.f32 %v2574, %v2582
  %v2587 = vmul.f32 %v2575, %v2582
  %v2588 = vmul.f32 %v2576, %v2582
  %v2589 = vmul.f32 %v2577, %v2582
  %v2590 = vmul.f32 %v2578, %v2582
  %v2591 = vlaneseq
  %v2592 = vshrl.u32 %v2591, 7
  %v2593 = vsub.s32 3, %v2592
  %v2594 = vrot.slane %v1629, %v2593
  %v2595 = vadd.f32 %v2583, %v2594
  %v2596 = vadd.f32 %v2584, %v2594
  %v2597 = vadd.f32 %v2585, %v2594
  %v2598 = vadd.f32 %v2586, %v2594
  %v2599 = vadd.f32 %v2587, %v2594
  %v2600 = vadd.f32 %v2588, %v2594
  %v2601 = vadd.f32 %v2589, %v2594
  %v2602 = vadd.f32 %v2590, %v2594
  %v2603 = vpack.c.bf16 %v2595, %v2595
  %v2604 = vpack.c.bf16 %v2596, %v2596
  %v2605 = vpack.c.bf16 %v2597, %v2597
  %v2606 = vpack.c.bf16 %v2598, %v2598
  %v2607 = vpack.c.bf16 %v2599, %v2599
  %v2608 = vpack.c.bf16 %v2600, %v2600
  %v2609 = vpack.c.bf16 %v2601, %v2601
  %v2610 = vpack.c.bf16 %v2602, %v2602
  %s2611 = scalar_lea.vmem %s9, 64
  %v2612 = vld [vmem:[%s2611] sm:$0xf]
  %v2613 = vld [vmem:[%s2611 + $0x4] sm:$0xf]
  %v2614 = vld [vmem:[%s2611 + $0x8] sm:$0xf]
  %v2615 = vld [vmem:[%s2611 + $0xc] sm:$0xf]
  %v2616 = vld [vmem:[%s2611 + $0x10] sm:$0xf]
  %v2617 = vld [vmem:[%s2611 + $0x14] sm:$0xf]
  %v2618 = vld [vmem:[%s2611 + $0x18] sm:$0xf]
  %v2619 = vld [vmem:[%s2611 + $0x1c] sm:$0xf]
  %v2620 = vld [vmem:[%s2611 + $0x20] sm:$0xf]
  %v2621 = vld [vmem:[%s2611 + $0x24] sm:$0xf]
  %v2622 = vld [vmem:[%s2611 + $0x28] sm:$0xf]
  %v2623 = vld [vmem:[%s2611 + $0x2c] sm:$0xf]
  %v2624 = vld [vmem:[%s2611 + $0x30] sm:$0xf]
  %v2625 = vld [vmem:[%s2611 + $0x34] sm:$0xf]
  %v2626 = vld [vmem:[%s2611 + $0x38] sm:$0xf]
  %v2627 = vld [vmem:[%s2611 + $0x3c] sm:$0xf]
  %s2628 = scalar_lea.vmem %s10, 1
  %v2629 = vld [vmem:[%s2628] sm:$0x1]
  %v2631 = vlaneseq
  %v2632 = vshrl.u32 %v2631, 7
  %v2633 = vsub.s32 0, %v2632
  %v2634 = vrot.slane %v2629, %v2633
  %v2644 = vunpack.c.l.b16 %v2603
  %v2645 = vunpack.c.l.b16 %v2604
  %v2646 = vunpack.c.l.b16 %v2605
  %v2647 = vunpack.c.l.b16 %v2606
  %v2648 = vunpack.c.l.b16 %v2607
  %v2649 = vunpack.c.l.b16 %v2608
  %v2650 = vunpack.c.l.b16 %v2609
  %v2651 = vunpack.c.l.b16 %v2610
  %v2652 = vrot.slane %v2645, 7
  %v2653 = vsel %vm784, %v2652, %v2644
  %v2654 = vrot.slane %v2646, 6
  %v2655 = vsel %vm786, %v2654, %v2653
  %v2656 = vrot.slane %v2647, 5
  %v2657 = vsel %vm788, %v2656, %v2655
  %v2658 = vrot.slane %v2648, 4
  %v2659 = vsel %vm790, %v2658, %v2657
  %v2660 = vrot.slane %v2649, 3
  %v2661 = vsel %vm792, %v2660, %v2659
  %v2662 = vrot.slane %v2650, 2
  %v2663 = vsel %vm794, %v2662, %v2661
  %v2664 = vrot.slane %v2651, 1
  %v2665 = vsel %vm796, %v2664, %v2663
  %v2666 = vpack.c.b16 %v2665, %v2665
  %v2684 = vunpack.c.l.b16 %v2612
  %v2685 = vunpack.c.l.b16 %v2613
  %v2686 = vunpack.c.l.b16 %v2614
  %v2687 = vunpack.c.l.b16 %v2615
  %v2688 = vunpack.c.l.b16 %v2616
  %v2689 = vunpack.c.l.b16 %v2617
  %v2690 = vunpack.c.l.b16 %v2618
  %v2691 = vunpack.c.l.b16 %v2619
  %v2692 = vunpack.c.l.b16 %v2620
  %v2693 = vunpack.c.l.b16 %v2621
  %v2694 = vunpack.c.l.b16 %v2622
  %v2695 = vunpack.c.l.b16 %v2623
  %v2696 = vunpack.c.l.b16 %v2624
  %v2697 = vunpack.c.l.b16 %v2625
  %v2698 = vunpack.c.l.b16 %v2626
  %v2699 = vunpack.c.l.b16 %v2627
  %v2700 = vpack.c.b16 %v2685, %v2684
  %v2701 = vpack.c.b16 %v2687, %v2686
  %v2702 = vpack.c.b16 %v2689, %v2688
  %v2703 = vpack.c.b16 %v2691, %v2690
  %v2704 = vpack.c.b16 %v2693, %v2692
  %v2705 = vpack.c.b16 %v2695, %v2694
  %v2706 = vpack.c.b16 %v2697, %v2696
  %v2707 = vpack.c.b16 %v2699, %v2698
  %2716 = vmatprep.subr.bf16.mxu0 0
  %2717 = vmatpush1.bf16.msra.mxu0 %v2707
  %2718 = vmatprep.subr.bf16.mxu0 0
  %2719 = vmatpush1.bf16.msra.mxu0 %v2706
  %2720 = vmatprep.subr.bf16.mxu0 0
  %2721 = vmatpush1.bf16.msra.mxu0 %v2705
  %2722 = vmatprep.subr.bf16.mxu0 0
  %2723 = vmatpush1.bf16.msra.mxu0 %v2704
  %2724 = vmatprep.subr.bf16.mxu0 0
  %2725 = vmatpush1.bf16.msra.mxu0 %v2703
  %2726 = vmatprep.subr.bf16.mxu0 0
  %2727 = vmatpush1.bf16.msra.mxu0 %v2702
  %2728 = vmatprep.subr.bf16.mxu0 0
  %2729 = vmatpush1.bf16.msra.mxu0 %v2701
  %2730 = vmatprep.subr.bf16.mxu0 0
  %2731 = vmatpush1.bf16.msra.mxu0 %v2700
  %2732 = vmatprep.subr.bf16.mxu0 0
  %2733 = vmatpush2.bf16.msra.mxu0 0
  %2734 = vmatprep.subr.bf16.mxu0 0
  %2735 = vmatpush2.bf16.msra.mxu0 0
  %2736 = vmatprep.subr.bf16.mxu0 0
  %2737 = vmatpush2.bf16.msra.mxu0 0
  %2738 = vmatprep.subr.bf16.mxu0 0
  %2739 = vmatpush2.bf16.msra.mxu0 0
  %2740 = vmatprep.subr.bf16.mxu0 0
  %2741 = vmatpush2.bf16.msra.mxu0 0
  %2742 = vmatprep.subr.bf16.mxu0 0
  %2743 = vmatpush2.bf16.msra.mxu0 0
  %2744 = vmatprep.subr.bf16.mxu0 0
  %2745 = vmatpush2.bf16.msra.mxu0 0
  %2746 = vmatprep.subr.bf16.mxu0 0
  %2747 = vmatpush2.bf16.msra.mxu0 0
  %2748 = vmatprep.mubr.bf16.mxu0 0
  %2749 = vmatmul.mubr.bf16.gmra.mxu0 %v2666
  %v2750 = vpop.f32.mrf.mxu0
  %v2751 = vadd.f32 %v2634, %v2750
  %v2752 = vpop.f32.mrf.mxu0
  %v2753 = vpop.f32.mrf.mxu0
  %v2754 = vpop.f32.mrf.mxu0
  %2755 = vdwg.mxu0
  %v2756 = vadd.f32 %v1625, %v2751
  %2757 = vadd.xlane.f32.xlu0 %v2756
  %v2758 = vpop.xlane.xlu0 %2757
  %v2759 = vmul.f32 %v2758, 0.03125
  %v2760 = vsub.f32 %v2756, %v2759
  %v2761 = vmul.f32 %v2760, %v67
  %v2762 = vmul.f32 %v2761, %v2761
  %2763 = vadd.xlane.f32.xlu0 %v2762
  %v2764 = vpop.xlane.xlu0 %2763
  %v2765 = vmul.f32 %v2764, 0.03125
  %v2766 = vadd.f32 %v2765, 1e-05
  %v2767 = vrsqrt.pop %v2766
  %v2768 = vmul.f32 %v2761, %v2767
  %v2769 = vlaneseq
  %v2770 = vshrl.u32 %v2769, 7
  %v2771 = vsub.s32 2, %v2770
  %v2772 = vrot.slane %v1627, %v2771
  %v2773 = vmul.f32 %v2768, %v2772
  %v2774 = vlaneseq
  %v2775 = vshrl.u32 %v2774, 7
  %v2776 = vsub.s32 2, %v2775
  %v2777 = vrot.slane %v1629, %v2776
  %v2778 = vadd.f32 %v2773, %v2777
  %v2779 = vpack.c.bf16 %v2778, %v2778
  %s2780 = scalar_lea.vmem %s11, 64
  %v2781 = vld [vmem:[%s2780] sm:$0xf]
  %v2782 = vld [vmem:[%s2780 + $0x4] sm:$0xf]
  %v2783 = vld [vmem:[%s2780 + $0x8] sm:$0xf]
  %v2784 = vld [vmem:[%s2780 + $0xc] sm:$0xf]
  %v2785 = vld [vmem:[%s2780 + $0x10] sm:$0xf]
  %v2786 = vld [vmem:[%s2780 + $0x14] sm:$0xf]
  %v2787 = vld [vmem:[%s2780 + $0x18] sm:$0xf]
  %v2788 = vld [vmem:[%s2780 + $0x1c] sm:$0xf]
  %v2789 = vld [vmem:[%s2780 + $0x20] sm:$0xf]
  %v2790 = vld [vmem:[%s2780 + $0x24] sm:$0xf]
  %v2791 = vld [vmem:[%s2780 + $0x28] sm:$0xf]
  %v2792 = vld [vmem:[%s2780 + $0x2c] sm:$0xf]
  %v2793 = vld [vmem:[%s2780 + $0x30] sm:$0xf]
  %v2794 = vld [vmem:[%s2780 + $0x34] sm:$0xf]
  %v2795 = vld [vmem:[%s2780 + $0x38] sm:$0xf]
  %v2796 = vld [vmem:[%s2780 + $0x3c] sm:$0xf]
  %s2797 = scalar_lea.vmem %s12, 1
  %v2798 = vld [vmem:[%s2797] sm:$0x1]
  %v2800 = vlaneseq
  %v2801 = vshrl.u32 %v2800, 7
  %v2802 = vsub.s32 0, %v2801
  %v2803 = vrot.slane %v2798, %v2802
  %v2821 = vunpack.c.l.b16 %v2781
  %v2822 = vunpack.c.l.b16 %v2782
  %v2823 = vunpack.c.l.b16 %v2783
  %v2824 = vunpack.c.l.b16 %v2784
  %v2825 = vunpack.c.l.b16 %v2785
  %v2826 = vunpack.c.l.b16 %v2786
  %v2827 = vunpack.c.l.b16 %v2787
  %v2828 = vunpack.c.l.b16 %v2788
  %v2829 = vunpack.c.l.b16 %v2789
  %v2830 = vunpack.c.l.b16 %v2790
  %v2831 = vunpack.c.l.b16 %v2791
  %v2832 = vunpack.c.l.b16 %v2792
  %v2833 = vunpack.c.l.b16 %v2793
  %v2834 = vunpack.c.l.b16 %v2794
  %v2835 = vunpack.c.l.b16 %v2795
  %v2836 = vunpack.c.l.b16 %v2796
  %v2837 = vpack.c.b16 %v2822, %v2821
  %v2838 = vpack.c.b16 %v2824, %v2823
  %v2839 = vpack.c.b16 %v2826, %v2825
  %v2840 = vpack.c.b16 %v2828, %v2827
  %v2841 = vpack.c.b16 %v2830, %v2829
  %v2842 = vpack.c.b16 %v2832, %v2831
  %v2843 = vpack.c.b16 %v2834, %v2833
  %v2844 = vpack.c.b16 %v2836, %v2835
  %2853 = vmatprep.subr.bf16.mxu0 0
  %2854 = vmatpush1.bf16.msra.mxu0 %v2844
  %2855 = vmatprep.subr.bf16.mxu0 0
  %2856 = vmatpush1.bf16.msra.mxu0 %v2843
  %2857 = vmatprep.subr.bf16.mxu0 0
  %2858 = vmatpush1.bf16.msra.mxu0 %v2842
  %2859 = vmatprep.subr.bf16.mxu0 0
  %2860 = vmatpush1.bf16.msra.mxu0 %v2841
  %2861 = vmatprep.subr.bf16.mxu0 0
  %2862 = vmatpush1.bf16.msra.mxu0 %v2840
  %2863 = vmatprep.subr.bf16.mxu0 0
  %2864 = vmatpush1.bf16.msra.mxu0 %v2839
  %2865 = vmatprep.subr.bf16.mxu0 0
  %2866 = vmatpush1.bf16.msra.mxu0 %v2838
  %2867 = vmatprep.subr.bf16.mxu0 0
  %2868 = vmatpush1.bf16.msra.mxu0 %v2837
  %2869 = vmatprep.subr.bf16.mxu0 0
  %2870 = vmatpush2.bf16.msra.mxu0 0
  %2871 = vmatprep.subr.bf16.mxu0 0
  %2872 = vmatpush2.bf16.msra.mxu0 0
  %2873 = vmatprep.subr.bf16.mxu0 0
  %2874 = vmatpush2.bf16.msra.mxu0 0
  %2875 = vmatprep.subr.bf16.mxu0 0
  %2876 = vmatpush2.bf16.msra.mxu0 0
  %2877 = vmatprep.subr.bf16.mxu0 0
  %2878 = vmatpush2.bf16.msra.mxu0 0
  %2879 = vmatprep.subr.bf16.mxu0 0
  %2880 = vmatpush2.bf16.msra.mxu0 0
  %2881 = vmatprep.subr.bf16.mxu0 0
  %2882 = vmatpush2.bf16.msra.mxu0 0
  %2883 = vmatprep.subr.bf16.mxu0 0
  %2884 = vmatpush2.bf16.msra.mxu0 0
  %2885 = vmatprep.mubr.bf16.mxu0 0
  %2886 = vmatmul.mubr.bf16.gmra.mxu0 %v2779
  %v2887 = vpop.f32.mrf.mxu0
  %v2888 = vadd.f32 %v2803, %v2887
  %v2889 = vpop.f32.mrf.mxu0
  %v2890 = vpop.f32.mrf.mxu0
  %v2891 = vpop.f32.mrf.mxu0
  %2892 = vdwg.mxu0
  %vm2893 = vcmp.gt.f32.partialorder %v2888, 0.0
  %v2894 = vmul.f32 %v2888, 0.1
  %v2895 = vsel %vm2893, %v2888, %v2894
  %v2896 = vpack.c.bf16 %v2895, %v2895
  %s2897 = scalar_lea.vmem %s13, 64
  %v2898 = vld [vmem:[%s2897] sm:$0xf]
  %v2899 = vld [vmem:[%s2897 + $0x4] sm:$0xf]
  %v2900 = vld [vmem:[%s2897 + $0x8] sm:$0xf]
  %v2901 = vld [vmem:[%s2897 + $0xc] sm:$0xf]
  %v2902 = vld [vmem:[%s2897 + $0x10] sm:$0xf]
  %v2903 = vld [vmem:[%s2897 + $0x14] sm:$0xf]
  %v2904 = vld [vmem:[%s2897 + $0x18] sm:$0xf]
  %v2905 = vld [vmem:[%s2897 + $0x1c] sm:$0xf]
  %v2906 = vld [vmem:[%s2897 + $0x20] sm:$0xf]
  %v2907 = vld [vmem:[%s2897 + $0x24] sm:$0xf]
  %v2908 = vld [vmem:[%s2897 + $0x28] sm:$0xf]
  %v2909 = vld [vmem:[%s2897 + $0x2c] sm:$0xf]
  %v2910 = vld [vmem:[%s2897 + $0x30] sm:$0xf]
  %v2911 = vld [vmem:[%s2897 + $0x34] sm:$0xf]
  %v2912 = vld [vmem:[%s2897 + $0x38] sm:$0xf]
  %v2913 = vld [vmem:[%s2897 + $0x3c] sm:$0xf]
  %s2914 = scalar_lea.vmem %s14, 1
  %v2915 = vld [vmem:[%s2914] sm:$0x1]
  %v2917 = vlaneseq
  %v2918 = vshrl.u32 %v2917, 7
  %v2919 = vsub.s32 0, %v2918
  %v2920 = vrot.slane %v2915, %v2919
  %v2938 = vunpack.c.l.b16 %v2898
  %v2939 = vunpack.c.l.b16 %v2899
  %v2940 = vunpack.c.l.b16 %v2900
  %v2941 = vunpack.c.l.b16 %v2901
  %v2942 = vunpack.c.l.b16 %v2902
  %v2943 = vunpack.c.l.b16 %v2903
  %v2944 = vunpack.c.l.b16 %v2904
  %v2945 = vunpack.c.l.b16 %v2905
  %v2946 = vunpack.c.l.b16 %v2906
  %v2947 = vunpack.c.l.b16 %v2907
  %v2948 = vunpack.c.l.b16 %v2908
  %v2949 = vunpack.c.l.b16 %v2909
  %v2950 = vunpack.c.l.b16 %v2910
  %v2951 = vunpack.c.l.b16 %v2911
  %v2952 = vunpack.c.l.b16 %v2912
  %v2953 = vunpack.c.l.b16 %v2913
  %v2954 = vpack.c.b16 %v2939, %v2938
  %v2955 = vpack.c.b16 %v2941, %v2940
  %v2956 = vpack.c.b16 %v2943, %v2942
  %v2957 = vpack.c.b16 %v2945, %v2944
  %v2958 = vpack.c.b16 %v2947, %v2946
  %v2959 = vpack.c.b16 %v2949, %v2948
  %v2960 = vpack.c.b16 %v2951, %v2950
  %v2961 = vpack.c.b16 %v2953, %v2952
  %2970 = vmatprep.subr.bf16.mxu0 0
  %2971 = vmatpush1.bf16.msra.mxu0 %v2961
  %2972 = vmatprep.subr.bf16.mxu0 0
  %2973 = vmatpush1.bf16.msra.mxu0 %v2960
  %2974 = vmatprep.subr.bf16.mxu0 0
  %2975 = vmatpush1.bf16.msra.mxu0 %v2959
  %2976 = vmatprep.subr.bf16.mxu0 0
  %2977 = vmatpush1.bf16.msra.mxu0 %v2958
  %2978 = vmatprep.subr.bf16.mxu0 0
  %2979 = vmatpush1.bf16.msra.mxu0 %v2957
  %2980 = vmatprep.subr.bf16.mxu0 0
  %2981 = vmatpush1.bf16.msra.mxu0 %v2956
  %2982 = vmatprep.subr.bf16.mxu0 0
  %2983 = vmatpush1.bf16.msra.mxu0 %v2955
  %2984 = vmatprep.subr.bf16.mxu0 0
  %2985 = vmatpush1.bf16.msra.mxu0 %v2954
  %2986 = vmatprep.subr.bf16.mxu0 0
  %2987 = vmatpush2.bf16.msra.mxu0 0
  %2988 = vmatprep.subr.bf16.mxu0 0
  %2989 = vmatpush2.bf16.msra.mxu0 0
  %2990 = vmatprep.subr.bf16.mxu0 0
  %2991 = vmatpush2.bf16.msra.mxu0 0
  %2992 = vmatprep.subr.bf16.mxu0 0
  %2993 = vmatpush2.bf16.msra.mxu0 0
  %2994 = vmatprep.subr.bf16.mxu0 0
  %2995 = vmatpush2.bf16.msra.mxu0 0
  %2996 = vmatprep.subr.bf16.mxu0 0
  %2997 = vmatpush2.bf16.msra.mxu0 0
  %2998 = vmatprep.subr.bf16.mxu0 0
  %2999 = vmatpush2.bf16.msra.mxu0 0
  %3000 = vmatprep.subr.bf16.mxu0 0
  %3001 = vmatpush2.bf16.msra.mxu0 0
  %3002 = vmatprep.mubr.bf16.mxu0 0
  %3003 = vmatmul.mubr.bf16.gmra.mxu0 %v2896
  %v3004 = vpop.f32.mrf.mxu0
  %v3005 = vadd.f32 %v2920, %v3004
  %v3006 = vpop.f32.mrf.mxu0
  %v3007 = vpop.f32.mrf.mxu0
  %v3008 = vpop.f32.mrf.mxu0
  %3009 = vdwg.mxu0
  %v3010 = vadd.f32 %v2756, %v3005
  %v3011 = vld [vmem:[%s15] sm:$0x1]
  %v3012 = vld [vmem:[%s16] sm:$0x1]
  %3013 = vadd.xlane.f32.xlu0 %v3010
  %v3014 = vpop.xlane.xlu0 %3013
  %v3015 = vmul.f32 %v3014, 0.03125
  %v3016 = vsub.f32 %v3010, %v3015
  %v3017 = vmul.f32 %v3016, %v67
  %v3018 = vmul.f32 %v3017, %v3017
  %3019 = vadd.xlane.f32.xlu0 %v3018
  %v3020 = vpop.xlane.xlu0 %3019
  %v3021 = vmul.f32 %v3020, 0.03125
  %v3022 = vadd.f32 %v3021, 1e-05
  %v3023 = vrsqrt.pop %v3022
  %v3024 = vmul.f32 %v3017, %v3023
  %v3026 = vlaneseq
  %v3027 = vshrl.u32 %v3026, 7
  %v3028 = vsub.s32 0, %v3027
  %v3029 = vrot.slane %v3011, %v3028
  %v3031 = vmul.f32 %v3024, %v3029
  %v3033 = vlaneseq
  %v3034 = vshrl.u32 %v3033, 7
  %v3035 = vsub.s32 0, %v3034
  %v3036 = vrot.slane %v3012, %v3035
  %v3038 = vadd.f32 %v3031, %v3036
  %v3039 = vpack.c.bf16 %v3038, %v3038
  %v3040 = vld [vmem:[%s17] sm:$0xf]
  %v3041 = vld [vmem:[%s17 + $0x4] sm:$0xf]
  %v3042 = vld [vmem:[%s17 + $0x8] sm:$0xf]
  %v3043 = vld [vmem:[%s17 + $0xc] sm:$0xf]
  %v3044 = vld [vmem:[%s17 + $0x10] sm:$0xf]
  %v3045 = vld [vmem:[%s17 + $0x14] sm:$0xf]
  %v3046 = vld [vmem:[%s17 + $0x18] sm:$0xf]
  %v3047 = vld [vmem:[%s17 + $0x1c] sm:$0xf]
  %v3048 = vld [vmem:[%s17 + $0x20] sm:$0xf]
  %v3049 = vld [vmem:[%s17 + $0x24] sm:$0xf]
  %v3050 = vld [vmem:[%s17 + $0x28] sm:$0xf]
  %v3051 = vld [vmem:[%s17 + $0x2c] sm:$0xf]
  %v3052 = vld [vmem:[%s17 + $0x30] sm:$0xf]
  %v3053 = vld [vmem:[%s17 + $0x34] sm:$0xf]
  %v3054 = vld [vmem:[%s17 + $0x38] sm:$0xf]
  %v3055 = vld [vmem:[%s17 + $0x3c] sm:$0xf]
  %v3056 = vld [vmem:[%s18] sm:$0x1]
  %v3058 = vlaneseq
  %v3059 = vshrl.u32 %v3058, 7
  %v3060 = vsub.s32 0, %v3059
  %v3061 = vrot.slane %v3056, %v3060
  %v3079 = vunpack.c.l.b16 %v3040
  %v3080 = vunpack.c.l.b16 %v3041
  %v3081 = vunpack.c.l.b16 %v3042
  %v3082 = vunpack.c.l.b16 %v3043
  %v3083 = vunpack.c.l.b16 %v3044
  %v3084 = vunpack.c.l.b16 %v3045
  %v3085 = vunpack.c.l.b16 %v3046
  %v3086 = vunpack.c.l.b16 %v3047
  %v3087 = vunpack.c.l.b16 %v3048
  %v3088 = vunpack.c.l.b16 %v3049
  %v3089 = vunpack.c.l.b16 %v3050
  %v3090 = vunpack.c.l.b16 %v3051
  %v3091 = vunpack.c.l.b16 %v3052
  %v3092 = vunpack.c.l.b16 %v3053
  %v3093 = vunpack.c.l.b16 %v3054
  %v3094 = vunpack.c.l.b16 %v3055
  %v3095 = vpack.c.b16 %v3080, %v3079
  %v3096 = vpack.c.b16 %v3082, %v3081
  %v3097 = vpack.c.b16 %v3084, %v3083
  %v3098 = vpack.c.b16 %v3086, %v3085
  %v3099 = vpack.c.b16 %v3088, %v3087
  %v3100 = vpack.c.b16 %v3090, %v3089
  %v3101 = vpack.c.b16 %v3092, %v3091
  %v3102 = vpack.c.b16 %v3094, %v3093
  %3111 = vmatprep.subr.bf16.mxu0 0
  %3112 = vmatpush1.bf16.msra.mxu0 %v3102
  %3113 = vmatprep.subr.bf16.mxu0 0
  %3114 = vmatpush1.bf16.msra.mxu0 %v3101
  %3115 = vmatprep.subr.bf16.mxu0 0
  %3116 = vmatpush1.bf16.msra.mxu0 %v3100
  %3117 = vmatprep.subr.bf16.mxu0 0
  %3118 = vmatpush1.bf16.msra.mxu0 %v3099
  %3119 = vmatprep.subr.bf16.mxu0 0
  %3120 = vmatpush1.bf16.msra.mxu0 %v3098
  %3121 = vmatprep.subr.bf16.mxu0 0
  %3122 = vmatpush1.bf16.msra.mxu0 %v3097
  %3123 = vmatprep.subr.bf16.mxu0 0
  %3124 = vmatpush1.bf16.msra.mxu0 %v3096
  %3125 = vmatprep.subr.bf16.mxu0 0
  %3126 = vmatpush1.bf16.msra.mxu0 %v3095
  %3127 = vmatprep.subr.bf16.mxu0 0
  %3128 = vmatpush2.bf16.msra.mxu0 0
  %3129 = vmatprep.subr.bf16.mxu0 0
  %3130 = vmatpush2.bf16.msra.mxu0 0
  %3131 = vmatprep.subr.bf16.mxu0 0
  %3132 = vmatpush2.bf16.msra.mxu0 0
  %3133 = vmatprep.subr.bf16.mxu0 0
  %3134 = vmatpush2.bf16.msra.mxu0 0
  %3135 = vmatprep.subr.bf16.mxu0 0
  %3136 = vmatpush2.bf16.msra.mxu0 0
  %3137 = vmatprep.subr.bf16.mxu0 0
  %3138 = vmatpush2.bf16.msra.mxu0 0
  %3139 = vmatprep.subr.bf16.mxu0 0
  %3140 = vmatpush2.bf16.msra.mxu0 0
  %3141 = vmatprep.subr.bf16.mxu0 0
  %3142 = vmatpush2.bf16.msra.mxu0 0
  %3143 = vmatprep.mubr.bf16.mxu0 0
  %3144 = vmatmul.mubr.bf16.gmra.mxu0 %v3039
  %v3145 = vpop.f32.mrf.mxu0
  %v3146 = vadd.f32 %v3061, %v3145
  %v3147 = vpop.f32.mrf.mxu0
  %v3148 = vpop.f32.mrf.mxu0
  %v3149 = vpop.f32.mrf.mxu0
  %3150 = vdwg.mxu0
  %3151 = vst [vmem:[%s19] sm:$0xff] %v3146
  // Predicated region
  $region78: #{class_attention_forward.1} parent=0 // pred_check
    _
  $region79: #{class_attention_forward.1} parent=0 // pred_check_branch
    %3153 = sbr.rel (0) target = $region81
  $region80: #{class_attention_forward.1} parent=0 // pred_region
    _
  $region81: #{class_attention_forward.1} parent=0 // pred_fallthru
    _
  // Predicated region
  $region82: #{class_attention_forward.1} parent=0 // pred_check
    _
  $region83: #{class_attention_forward.1} parent=0 // pred_check_branch
    %3155 = sbr.rel (0) target = $region85
  $region84: #{class_attention_forward.1} parent=0 // pred_region
    _
  $region85: #{class_attention_forward.1} parent=0 // pred_fallthru
    _

</llo_original>
